<compile_context>
chip_gen: v6e
topology: v6e:2x2x1
jax: 0.10.0
libtpu: 0.0.40
codegen_flags: <defaults>
</compile_context>

<pallas_src>
import functools

import numpy as np

import jax
import jax.numpy as jnp
from jax import lax
from jax.experimental import pallas as pl
from jax.experimental.pallas import tpu as pltpu


# ---------------------------------------------------------------------------
# Kernel 1: fused conv stack (conv1+ReLU -> conv2+ReLU -> conv3+ReLU).
# Grid = (batch,), one image per grid step, batch axis marked "parallel".
# ---------------------------------------------------------------------------
def _conv_stack_kernel(x_ref, m1_ref, b1_ref, m2_ref, b2_ref, m3_ref, b3_ref,
                       o_ref, padx_ref, pada_ref, padb_ref, *, H):
    # Stage this image into the y-zero-padded scratch (rows 0 and H+1 stay 0).
    padx_ref[...] = jnp.zeros_like(padx_ref)
    padx_ref[1:H + 1, :] = x_ref[0]

    def conv_relu(pad_ref, m_ref, b_ref):
        # 3x3 "same" conv == sum over the 3 vertical taps of a dense matmul
        # against a band matrix (horizontal taps + x padding folded into it).
        acc = jnp.dot(pad_ref[0:H, :], m_ref[0],
                      preferred_element_type=jnp.float32)
        acc = acc + jnp.dot(pad_ref[1:H + 1, :], m_ref[1],
                            preferred_element_type=jnp.float32)
        acc = acc + jnp.dot(pad_ref[2:H + 2, :], m_ref[2],
                            preferred_element_type=jnp.float32)
        return jnp.maximum(acc + b_ref[...], 0.0)

    a1 = conv_relu(padx_ref, m1_ref, b1_ref)          # (H, W*32)
    pada_ref[...] = jnp.zeros_like(pada_ref)
    pada_ref[1:H + 1, :] = a1

    a2 = conv_relu(pada_ref, m2_ref, b2_ref)          # (H, W*16)
    padb_ref[...] = jnp.zeros_like(padb_ref)
    padb_ref[1:H + 1, :] = a2

    a3 = conv_relu(padb_ref, m3_ref, b3_ref)          # (H, W*8)  (W*8 lane-dense)
    o_ref[0] = a3.astype(o_ref.dtype)


def conv_stack(x_rows, m1, b1, m2, b2, m3, b3, *, H, W, cin):
    """x_rows: (N, H, W*cin) row-major image rows -> (N, H, W*8) features."""
    N = x_rows.shape[0]
    Hp = H + 2
    kernel = functools.partial(_conv_stack_kernel, H=H)
    return pl.pallas_call(
        kernel,
        out_shape=jax.ShapeDtypeStruct((N, H, W * 8), jnp.float32),
        grid_spec=pltpu.PrefetchScalarGridSpec(
            num_scalar_prefetch=0,
            grid=(N,),
            in_specs=[
                pl.BlockSpec((1, H, W * cin), lambda n: (n, 0, 0)),
                pl.BlockSpec((3, W * cin, W * 32), lambda n: (0, 0, 0)),
                pl.BlockSpec((1, W * 32), lambda n: (0, 0)),
                pl.BlockSpec((3, W * 32, W * 16), lambda n: (0, 0, 0)),
                pl.BlockSpec((1, W * 16), lambda n: (0, 0)),
                pl.BlockSpec((3, W * 16, W * 8), lambda n: (0, 0, 0)),
                pl.BlockSpec((1, W * 8), lambda n: (0, 0)),
            ],
            out_specs=pl.BlockSpec((1, H, W * 8), lambda n: (n, 0, 0)),
            scratch_shapes=[
                pltpu.VMEM((Hp, W * cin), jnp.float32),   # padded input
                pltpu.VMEM((Hp, W * 32), jnp.float32),    # padded conv1 out
                pltpu.VMEM((Hp, W * 16), jnp.float32),    # padded conv2 out
            ],
        ),
        compiler_params=pltpu.CompilerParams(
            dimension_semantics=("parallel",),
            vmem_limit_bytes=32 * 1024 * 1024,
        ),
    )(x_rows, m1, b1, m2, b2, m3, b3)


# ---------------------------------------------------------------------------
# Kernel 2: tiled FC matmul with K-axis accumulation (flatten -> Linear).
# ---------------------------------------------------------------------------
def _fc_kernel(a_ref, w_ref, b_ref, o_ref, acc_ref):
    k = pl.program_id(1)

    @pl.when(k == 0)
    def _():
        acc_ref[...] = jnp.zeros_like(acc_ref)

    acc_ref[...] += jnp.dot(a_ref[...], w_ref[...],
                            preferred_element_type=jnp.float32)

    @pl.when(k == pl.num_programs(1) - 1)
    def _():
        o_ref[...] = (acc_ref[...] + b_ref[...]).astype(o_ref.dtype)


def fc_matmul(a, w, bias2d):
    """out = a @ w + bias; a: (M, K), w: (K, Nout), bias2d: (1, Nout)."""
    M, K = a.shape
    K2, Nout = w.shape
    assert K == K2
    tm = M if M <= 256 else 256
    assert M % tm == 0
    tk = K
    for cand in (512, 256, 128):
        if K % cand == 0:
            tk = cand
            break
    return pl.pallas_call(
        _fc_kernel,
        out_shape=jax.ShapeDtypeStruct((M, Nout), jnp.float32),
        grid_spec=pltpu.PrefetchScalarGridSpec(
            num_scalar_prefetch=0,
            grid=(M // tm, K // tk),
            in_specs=[
                pl.BlockSpec((tm, tk), lambda i, k: (i, k)),
                pl.BlockSpec((tk, Nout), lambda i, k: (k, 0)),
                pl.BlockSpec((1, Nout), lambda i, k: (0, 0)),
            ],
            out_specs=pl.BlockSpec((tm, Nout), lambda i, k: (i, 0)),
            scratch_shapes=[pltpu.VMEM((tm, Nout), jnp.float32)],
        ),
        compiler_params=pltpu.CompilerParams(
            dimension_semantics=("parallel", "arbitrary"),
            vmem_limit_bytes=32 * 1024 * 1024,
        ),
    )(a, w, bias2d)


# ---------------------------------------------------------------------------
# One-time parameter packing (done at init, NOT per forward).
# ---------------------------------------------------------------------------
def _build_band_matrices(w_oihw, W):
    """w: (Cout, Cin, 3, 3) -> (3, W*Cin, W*Cout) band matrices M_dy with
    M_dy[(x+dx-1)*Cin + ci, x*Cout + co] = w[co, ci, dy, dx] (x padding folded)."""
    w = np.asarray(jax.device_get(w_oihw), np.float32)
    cout, cin = w.shape[0], w.shape[1]
    mats = np.zeros((3, W * cin, W * cout), np.float32)
    for dy in range(3):
        for dx in range(3):
            blk = w[:, :, dy, dx].T                       # (Cin, Cout)
            for x in range(W):
                xin = x + dx - 1
                if 0 <= xin < W:
                    mats[dy, xin * cin:(xin + 1) * cin,
                         x * cout:(x + 1) * cout] = blk
    return jnp.asarray(mats)


def pack_params(params, H, W, cin):
    # FC weight permuted once so rows match the conv kernel's (h, x, c)
    # flattening while keeping PyTorch's (c, h, w) semantics.
    wfc = params["wfc"]                                   # (128, 8*H*W)
    wfc_arr = (wfc.reshape(128, 8, H, W)
               .transpose(2, 3, 1, 0)
               .reshape(H * W * 8, 128))
    return {
        "m1": _build_band_matrices(params["w1"], W),
        "b1": jnp.tile(params["b1"], W).reshape(1, W * 32),
        "m2": _build_band_matrices(params["w2"], W),
        "b2": jnp.tile(params["b2"], W).reshape(1, W * 16),
        "m3": _build_band_matrices(params["w3"], W),
        "b3": jnp.tile(params["b3"], W).reshape(1, W * 8),
        "wfc": wfc_arr,
        "bfc": params["bfc"].reshape(1, 128),
    }


# ---------------------------------------------------------------------------
# Full encoder forward (2 pallas_calls total; only trivial layout glue in XLA).
# ---------------------------------------------------------------------------
def conv_encoder_forward(x_nchw, packed):
    N, cin, H, W = x_nchw.shape
    # (N, Cin, H, W) -> (N, H, W*Cin): one cheap transform of the raw input.
    x_rows = jnp.transpose(x_nchw, (0, 2, 3, 1)).reshape(N, H, W * cin)
    feats = conv_stack(x_rows, packed["m1"], packed["b1"],
                       packed["m2"], packed["b2"],
                       packed["m3"], packed["b3"], H=H, W=W, cin=cin)
    flat = feats.reshape(N, H * W * 8)        # row-major, no data movement
    return fc_matmul(flat, packed["wfc"], packed["bfc"])


# ---------------------------------------------------------------------------
# Deterministic parameter init (PyTorch-style uniform(+-1/sqrt(fan_in))).
# ---------------------------------------------------------------------------
def init_params(key, input_image_size, in_channels):
    def uinit(k, shape, fan_in):
        bound = 1.0 / jnp.sqrt(jnp.float32(fan_in))
        return jax.random.uniform(k, shape, jnp.float32, -bound, bound)

    ks = jax.random.split(key, 8)
    hw = input_image_size
    fc_in = 8 * hw * hw
    return {
        "w1": uinit(ks[0], (32, in_channels, 3, 3), in_channels * 9),
        "b1": uinit(ks[1], (32,), in_channels * 9),
        "w2": uinit(ks[2], (16, 32, 3, 3), 32 * 9),
        "b2": uinit(ks[3], (16,), 32 * 9),
        "w3": uinit(ks[4], (8, 16, 3, 3), 16 * 9),
        "b3": uinit(ks[5], (8,), 16 * 9),
        "wfc": uinit(ks[6], (128, fc_in), fc_in),
        "bfc": uinit(ks[7], (128,), fc_in),
    }


# ---------------------------------------------------------------------------
# Pure-JAX reference (lax.conv) for validation against the original semantics.
# ---------------------------------------------------------------------------
def reference_forward(x, params):
    def conv(h, w, b):
        y = lax.conv_general_dilated(
            h, w, (1, 1), ((1, 1), (1, 1)),
            dimension_numbers=("NCHW", "OIHW", "NCHW"),
        )
        return jax.nn.relu(y + b[None, :, None, None])

    h = conv(x, params["w1"], params["b1"])
    h = conv(h, params["w2"], params["b2"])
    h = conv(h, params["w3"], params["b3"])
    flat = h.reshape(x.shape[0], -1)
    return flat @ params["wfc"].T + params["bfc"]


if __name__ == "__main__":
    batch = 2
    in_channels = 1
    input_image_size = 16

    key = jax.random.PRNGKey(0)
    key_x, key_p = jax.random.split(key)
    x = jax.random.normal(
        key_x, (batch, in_channels, input_image_size, input_image_size),
        jnp.float32)
    params = init_params(key_p, input_image_size, in_channels)
    packed = pack_params(params, input_image_size, input_image_size, in_channels)

    fwd = jax.jit(conv_encoder_forward)
    out = fwd(x, packed)
    out = jax.block_until_ready(out)
    assert out.shape == (batch, 128), out.shape

    ref = reference_forward(x, params)
    max_err = float(jnp.max(jnp.abs(out - ref)))
    assert jnp.allclose(out, ref, rtol=1e-3, atol=1e-3), max_err

    print("KERNEL_OK")
</pallas_src>

<mosaic_0001>
module attributes {stable_mosaic.version = 11 : i64} {
  func.func @_fc_kernel(%arg0: i32, %arg1: i32, %arg2: memref<2x512xf32, #tpu.memory_space<vmem>>, %arg3: memref<512x128xf32, #tpu.memory_space<vmem>>, %arg4: memref<1x128xf32, #tpu.memory_space<vmem>>, %arg5: memref<2x128xf32, #tpu.memory_space<vmem>>, %arg6: memref<2x128xf32, #tpu.memory_space<vmem>>) attributes {dimension_semantics = [#tpu.dimension_semantics<parallel>, #tpu.dimension_semantics<arbitrary>], iteration_bounds = array<i64: 1, 4>, scalar_prefetch = 0 : i64, scratch_operands = 1 : i64, tpu.core_type = #tpu.core_type<tc>, window_params = [{transform_indices = @transform_0, window_bounds = array<i64: 2, 512>}, {transform_indices = @transform_1, window_bounds = array<i64: 512, 128>}, {pipeline_mode = #tpu.pipeline_mode<synchronous>, transform_indices = @transform_2, window_bounds = array<i64: 1, 128>}, {transform_indices = @transform_3, window_bounds = array<i64: 2, 128>}]} {
    %c0_i32 = arith.constant 0 : i32
    %0 = arith.cmpi eq, %arg1, %c0_i32 : i32
    %1 = arith.extui %0 : i1 to i32
    %c0_i32_0 = arith.constant 0 : i32
    %2 = arith.cmpi ne, %1, %c0_i32_0 : i32
    scf.if %2 {
      %cst_9 = arith.constant 0.000000e+00 : f32
      %12 = vector.broadcast %cst_9 : f32 to vector<2x128xf32>
      %c0_10 = arith.constant 0 : index
      %c0_11 = arith.constant 0 : index
      %13 = vector.load %arg6[%c0_10, %c0_11] : memref<2x128xf32, #tpu.memory_space<vmem>>, vector<2x128xf32>
      tpu.vector_store %arg6[%c0_10, %c0_11], %12 {strides = array<i32>} : memref<2x128xf32, #tpu.memory_space<vmem>>, vector<2x128xf32>,
    } else {
    }
    %c0 = arith.constant 0 : index
    %c0_1 = arith.constant 0 : index
    %3 = vector.load %arg6[%c0, %c0_1] : memref<2x128xf32, #tpu.memory_space<vmem>>, vector<2x128xf32>
    %c0_2 = arith.constant 0 : index
    %c0_3 = arith.constant 0 : index
    %4 = vector.load %arg2[%c0_2, %c0_3] : memref<2x512xf32, #tpu.memory_space<vmem>>, vector<2x512xf32>
    %c0_4 = arith.constant 0 : index
    %c0_5 = arith.constant 0 : index
    %5 = vector.load %arg3[%c0_4, %c0_5] : memref<512x128xf32, #tpu.memory_space<vmem>>, vector<512x128xf32>
    %cst = arith.constant dense<0.000000e+00> : vector<2x128xf32>
    %6 = tpu.matmul %4, %5, %cst {dimension_numbers = #tpu.dot_dimension_numbers<[1], [0], [0], [1], [0, 0, 1, 1], [], []>} : vector<2x512xf32>, vector<512x128xf32>, vector<2x128xf32> -> vector<2x128xf32>
    %7 = arith.addf %3, %6 : vector<2x128xf32>
    %c0_6 = arith.constant 0 : index
    %c0_7 = arith.constant 0 : index
    %8 = vector.load %arg6[%c0_6, %c0_7] : memref<2x128xf32, #tpu.memory_space<vmem>>, vector<2x128xf32>
    tpu.vector_store %arg6[%c0_6, %c0_7], %7 {strides = array<i32>} : memref<2x128xf32, #tpu.memory_space<vmem>>, vector<2x128xf32>,
    %c3_i32 = arith.constant 3 : i32
    %9 = arith.cmpi eq, %arg1, %c3_i32 : i32
    %10 = arith.extui %9 : i1 to i32
    %c0_i32_8 = arith.constant 0 : i32
    %11 = arith.cmpi ne, %10, %c0_i32_8 : i32
    scf.if %11 {
      %c0_9 = arith.constant 0 : index
      %c0_10 = arith.constant 0 : index
      %12 = vector.load %arg6[%c0_9, %c0_10] : memref<2x128xf32, #tpu.memory_space<vmem>>, vector<2x128xf32>
      %c0_11 = arith.constant 0 : index
      %c0_12 = arith.constant 0 : index
      %13 = vector.load %arg4[%c0_11, %c0_12] : memref<1x128xf32, #tpu.memory_space<vmem>>, vector<1x128xf32>
      %14 = vector.broadcast %13 : vector<1x128xf32> to vector<2x128xf32>
      %15 = arith.addf %12, %14 : vector<2x128xf32>
      %c0_13 = arith.constant 0 : index
      %c0_14 = arith.constant 0 : index
      %16 = vector.load %arg5[%c0_13, %c0_14] : memref<2x128xf32, #tpu.memory_space<vmem>>, vector<2x128xf32>
      tpu.vector_store %arg5[%c0_13, %c0_14], %15 {strides = array<i32>} : memref<2x128xf32, #tpu.memory_space<vmem>>, vector<2x128xf32>,
    } else {
    }
    return
  }
  func.func @transform_0(%arg0: i32, %arg1: i32) -> (i32, i32) {
    %c0_i32 = arith.constant 0 : i32
    return %arg0, %arg1 : i32, i32
  }
  func.func @transform_1(%arg0: i32, %arg1: i32) -> (i32, i32) {
    %c0_i32 = arith.constant 0 : i32
    %c0_i32_0 = arith.constant 0 : i32
    return %arg1, %c0_i32 : i32, i32
  }
  func.func @transform_2(%arg0: i32, %arg1: i32) -> (i32, i32) {
    %c0_i32 = arith.constant 0 : i32
    %c0_i32_0 = arith.constant 0 : i32
    %c0_i32_1 = arith.constant 0 : i32
    return %c0_i32, %c0_i32_0 : i32, i32
  }
  func.func @transform_3(%arg0: i32, %arg1: i32) -> (i32, i32) {
    %c0_i32 = arith.constant 0 : i32
    %c0_i32_0 = arith.constant 0 : i32
    return %arg0, %c0_i32 : i32, i32
  }
}

module attributes {stable_mosaic.version = 11 : i64} {
  func.func @_conv_stack_kernel(%arg0: i32, %arg1: memref<1x16x16xf32, #tpu.memory_space<vmem>>, %arg2: memref<3x16x512xf32, #tpu.memory_space<vmem>>, %arg3: memref<1x512xf32, #tpu.memory_space<vmem>>, %arg4: memref<3x512x256xf32, #tpu.memory_space<vmem>>, %arg5: memref<1x256xf32, #tpu.memory_space<vmem>>, %arg6: memref<3x256x128xf32, #tpu.memory_space<vmem>>, %arg7: memref<1x128xf32, #tpu.memory_space<vmem>>, %arg8: memref<1x16x128xf32, #tpu.memory_space<vmem>>, %arg9: memref<18x16xf32, #tpu.memory_space<vmem>>, %arg10: memref<18x512xf32, #tpu.memory_space<vmem>>, %arg11: memref<18x256xf32, #tpu.memory_space<vmem>>) attributes {dimension_semantics = [#tpu.dimension_semantics<parallel>], iteration_bounds = array<i64: 2>, scalar_prefetch = 0 : i64, scratch_operands = 3 : i64, tpu.core_type = #tpu.core_type<tc>, window_params = [{transform_indices = @transform_0, window_bounds = array<i64: 1, 16, 16>}, {pipeline_mode = #tpu.pipeline_mode<synchronous>, transform_indices = @transform_1, window_bounds = array<i64: 3, 16, 512>}, {pipeline_mode = #tpu.pipeline_mode<synchronous>, transform_indices = @transform_2, window_bounds = array<i64: 1, 512>}, {pipeline_mode = #tpu.pipeline_mode<synchronous>, transform_indices = @transform_3, window_bounds = array<i64: 3, 512, 256>}, {pipeline_mode = #tpu.pipeline_mode<synchronous>, transform_indices = @transform_4, window_bounds = array<i64: 1, 256>}, {pipeline_mode = #tpu.pipeline_mode<synchronous>, transform_indices = @transform_5, window_bounds = array<i64: 3, 256, 128>}, {pipeline_mode = #tpu.pipeline_mode<synchronous>, transform_indices = @transform_6, window_bounds = array<i64: 1, 128>}, {transform_indices = @transform_7, window_bounds = array<i64: 1, 16, 128>}]} {
    %cst = arith.constant 0.000000e+00 : f32
    %0 = vector.broadcast %cst : f32 to vector<18x16xf32>
    %c0 = arith.constant 0 : index
    %c0_0 = arith.constant 0 : index
    %1 = vector.load %arg9[%c0, %c0_0] : memref<18x16xf32, #tpu.memory_space<vmem>>, vector<18x16xf32>
    tpu.vector_store %arg9[%c0, %c0_0], %0 {strides = array<i32>} : memref<18x16xf32, #tpu.memory_space<vmem>>, vector<18x16xf32>,
    %c0_1 = arith.constant 0 : index
    %c0_2 = arith.constant 0 : index
    %c0_3 = arith.constant 0 : index
    %2 = vector.load %arg1[%c0_1, %c0_2, %c0_3] : memref<1x16x16xf32, #tpu.memory_space<vmem>>, vector<1x16x16xf32>
    %3 = vector.shape_cast %2 : vector<1x16x16xf32> to vector<16x16xf32>
    %c1 = arith.constant 1 : index
    %c0_4 = arith.constant 0 : index
    %4 = vector.load %arg9[%c1, %c0_4] : memref<18x16xf32, #tpu.memory_space<vmem>>, vector<16x16xf32>
    tpu.vector_store %arg9[%c1, %c0_4], %3 {strides = array<i32>} : memref<18x16xf32, #tpu.memory_space<vmem>>, vector<16x16xf32>,
    %c0_5 = arith.constant 0 : index
    %c0_6 = arith.constant 0 : index
    %5 = vector.load %arg9[%c0_5, %c0_6] : memref<18x16xf32, #tpu.memory_space<vmem>>, vector<16x16xf32>
    %c0_7 = arith.constant 0 : index
    %c0_8 = arith.constant 0 : index
    %c0_9 = arith.constant 0 : index
    %6 = vector.load %arg2[%c0_7, %c0_8, %c0_9] : memref<3x16x512xf32, #tpu.memory_space<vmem>>, vector<1x16x512xf32>
    %7 = vector.shape_cast %6 : vector<1x16x512xf32> to vector<16x512xf32>
    %cst_10 = arith.constant dense<0.000000e+00> : vector<16x512xf32>
    %8 = tpu.matmul %5, %7, %cst_10 {dimension_numbers = #tpu.dot_dimension_numbers<[1], [0], [0], [1], [0, 0, 1, 1], [], []>} : vector<16x16xf32>, vector<16x512xf32>, vector<16x512xf32> -> vector<16x512xf32>
    %c1_11 = arith.constant 1 : index
    %c0_12 = arith.constant 0 : index
    %9 = vector.load %arg9[%c1_11, %c0_12] : memref<18x16xf32, #tpu.memory_space<vmem>>, vector<16x16xf32>
    %c1_13 = arith.constant 1 : index
    %c0_14 = arith.constant 0 : index
    %c0_15 = arith.constant 0 : index
    %10 = vector.load %arg2[%c1_13, %c0_14, %c0_15] : memref<3x16x512xf32, #tpu.memory_space<vmem>>, vector<1x16x512xf32>
    %11 = vector.shape_cast %10 : vector<1x16x512xf32> to vector<16x512xf32>
    %cst_16 = arith.constant dense<0.000000e+00> : vector<16x512xf32>
    %12 = tpu.matmul %9, %11, %cst_16 {dimension_numbers = #tpu.dot_dimension_numbers<[1], [0], [0], [1], [0, 0, 1, 1], [], []>} : vector<16x16xf32>, vector<16x512xf32>, vector<16x512xf32> -> vector<16x512xf32>
    %13 = arith.addf %8, %12 : vector<16x512xf32>
    %c2 = arith.constant 2 : index
    %c0_17 = arith.constant 0 : index
    %14 = vector.load %arg9[%c2, %c0_17] : memref<18x16xf32, #tpu.memory_space<vmem>>, vector<16x16xf32>
    %c2_18 = arith.constant 2 : index
    %c0_19 = arith.constant 0 : index
    %c0_20 = arith.constant 0 : index
    %15 = vector.load %arg2[%c2_18, %c0_19, %c0_20] : memref<3x16x512xf32, #tpu.memory_space<vmem>>, vector<1x16x512xf32>
    %16 = vector.shape_cast %15 : vector<1x16x512xf32> to vector<16x512xf32>
    %cst_21 = arith.constant dense<0.000000e+00> : vector<16x512xf32>
    %17 = tpu.matmul %14, %16, %cst_21 {dimension_numbers = #tpu.dot_dimension_numbers<[1], [0], [0], [1], [0, 0, 1, 1], [], []>} : vector<16x16xf32>, vector<16x512xf32>, vector<16x512xf32> -> vector<16x512xf32>
    %18 = arith.addf %13, %17 : vector<16x512xf32>
    %c0_22 = arith.constant 0 : index
    %c0_23 = arith.constant 0 : index
    %19 = vector.load %arg3[%c0_22, %c0_23] : memref<1x512xf32, #tpu.memory_space<vmem>>, vector<1x512xf32>
    %20 = vector.broadcast %19 : vector<1x512xf32> to vector<16x512xf32>
    %21 = arith.addf %18, %20 : vector<16x512xf32>
    %cst_24 = arith.constant 0.000000e+00 : f32
    %22 = vector.broadcast %cst_24 : f32 to vector<16x512xf32>
    %23 = arith.maximumf %21, %22 : vector<16x512xf32>
    %cst_25 = arith.constant 0.000000e+00 : f32
    %24 = vector.broadcast %cst_25 : f32 to vector<18x512xf32>
    %c0_26 = arith.constant 0 : index
    %c0_27 = arith.constant 0 : index
    %25 = vector.load %arg10[%c0_26, %c0_27] : memref<18x512xf32, #tpu.memory_space<vmem>>, vector<18x512xf32>
    tpu.vector_store %arg10[%c0_26, %c0_27], %24 {strides = array<i32>} : memref<18x512xf32, #tpu.memory_space<vmem>>, vector<18x512xf32>,
    %c1_28 = arith.constant 1 : index
    %c0_29 = arith.constant 0 : index
    %26 = vector.load %arg10[%c1_28, %c0_29] : memref<18x512xf32, #tpu.memory_space<vmem>>, vector<16x512xf32>
    tpu.vector_store %arg10[%c1_28, %c0_29], %23 {strides = array<i32>} : memref<18x512xf32, #tpu.memory_space<vmem>>, vector<16x512xf32>,
    %c0_30 = arith.constant 0 : index
    %c0_31 = arith.constant 0 : index
    %27 = vector.load %arg10[%c0_30, %c0_31] : memref<18x512xf32, #tpu.memory_space<vmem>>, vector<16x512xf32>
    %c0_32 = arith.constant 0 : index
    %c0_33 = arith.constant 0 : index
    %c0_34 = arith.constant 0 : index
    %28 = vector.load %arg4[%c0_32, %c0_33, %c0_34] : memref<3x512x256xf32, #tpu.memory_space<vmem>>, vector<1x512x256xf32>
    %29 = vector.shape_cast %28 : vector<1x512x256xf32> to vector<512x256xf32>
    %cst_35 = arith.constant dense<0.000000e+00> : vector<16x256xf32>
    %30 = tpu.matmul %27, %29, %cst_35 {dimension_numbers = #tpu.dot_dimension_numbers<[1], [0], [0], [1], [0, 0, 1, 1], [], []>} : vector<16x512xf32>, vector<512x256xf32>, vector<16x256xf32> -> vector<16x256xf32>
    %c1_36 = arith.constant 1 : index
    %c0_37 = arith.constant 0 : index
    %31 = vector.load %arg10[%c1_36, %c0_37] : memref<18x512xf32, #tpu.memory_space<vmem>>, vector<16x512xf32>
    %c1_38 = arith.constant 1 : index
    %c0_39 = arith.constant 0 : index
    %c0_40 = arith.constant 0 : index
    %32 = vector.load %arg4[%c1_38, %c0_39, %c0_40] : memref<3x512x256xf32, #tpu.memory_space<vmem>>, vector<1x512x256xf32>
    %33 = vector.shape_cast %32 : vector<1x512x256xf32> to vector<512x256xf32>
    %cst_41 = arith.constant dense<0.000000e+00> : vector<16x256xf32>
    %34 = tpu.matmul %31, %33, %cst_41 {dimension_numbers = #tpu.dot_dimension_numbers<[1], [0], [0], [1], [0, 0, 1, 1], [], []>} : vector<16x512xf32>, vector<512x256xf32>, vector<16x256xf32> -> vector<16x256xf32>
    %35 = arith.addf %30, %34 : vector<16x256xf32>
    %c2_42 = arith.constant 2 : index
    %c0_43 = arith.constant 0 : index
    %36 = vector.load %arg10[%c2_42, %c0_43] : memref<18x512xf32, #tpu.memory_space<vmem>>, vector<16x512xf32>
    %c2_44 = arith.constant 2 : index
    %c0_45 = arith.constant 0 : index
    %c0_46 = arith.constant 0 : index
    %37 = vector.load %arg4[%c2_44, %c0_45, %c0_46] : memref<3x512x256xf32, #tpu.memory_space<vmem>>, vector<1x512x256xf32>
    %38 = vector.shape_cast %37 : vector<1x512x256xf32> to vector<512x256xf32>
    %cst_47 = arith.constant dense<0.000000e+00> : vector<16x256xf32>
    %39 = tpu.matmul %36, %38, %cst_47 {dimension_numbers = #tpu.dot_dimension_numbers<[1], [0], [0], [1], [0, 0, 1, 1], [], []>} : vector<16x512xf32>, vector<512x256xf32>, vector<16x256xf32> -> vector<16x256xf32>
    %40 = arith.addf %35, %39 : vector<16x256xf32>
    %c0_48 = arith.constant 0 : index
    %c0_49 = arith.constant 0 : index
    %41 = vector.load %arg5[%c0_48, %c0_49] : memref<1x256xf32, #tpu.memory_space<vmem>>, vector<1x256xf32>
    %42 = vector.broadcast %41 : vector<1x256xf32> to vector<16x256xf32>
    %43 = arith.addf %40, %42 : vector<16x256xf32>
    %cst_50 = arith.constant 0.000000e+00 : f32
    %44 = vector.broadcast %cst_50 : f32 to vector<16x256xf32>
    %45 = arith.maximumf %43, %44 : vector<16x256xf32>
    %cst_51 = arith.constant 0.000000e+00 : f32
    %46 = vector.broadcast %cst_51 : f32 to vector<18x256xf32>
    %c0_52 = arith.constant 0 : index
    %c0_53 = arith.constant 0 : index
    %47 = vector.load %arg11[%c0_52, %c0_53] : memref<18x256xf32, #tpu.memory_space<vmem>>, vector<18x256xf32>
    tpu.vector_store %arg11[%c0_52, %c0_53], %46 {strides = array<i32>} : memref<18x256xf32, #tpu.memory_space<vmem>>, vector<18x256xf32>,
    %c1_54 = arith.constant 1 : index
    %c0_55 = arith.constant 0 : index
    %48 = vector.load %arg11[%c1_54, %c0_55] : memref<18x256xf32, #tpu.memory_space<vmem>>, vector<16x256xf32>
    tpu.vector_store %arg11[%c1_54, %c0_55], %45 {strides = array<i32>} : memref<18x256xf32, #tpu.memory_space<vmem>>, vector<16x256xf32>,
    %c0_56 = arith.constant 0 : index
    %c0_57 = arith.constant 0 : index
    %49 = vector.load %arg11[%c0_56, %c0_57] : memref<18x256xf32, #tpu.memory_space<vmem>>, vector<16x256xf32>
    %c0_58 = arith.constant 0 : index
    %c0_59 = arith.constant 0 : index
    %c0_60 = arith.constant 0 : index
    %50 = vector.load %arg6[%c0_58, %c0_59, %c0_60] : memref<3x256x128xf32, #tpu.memory_space<vmem>>, vector<1x256x128xf32>
    %51 = vector.shape_cast %50 : vector<1x256x128xf32> to vector<256x128xf32>
    %cst_61 = arith.constant dense<0.000000e+00> : vector<16x128xf32>
    %52 = tpu.matmul %49, %51, %cst_61 {dimension_numbers = #tpu.dot_dimension_numbers<[1], [0], [0], [1], [0, 0, 1, 1], [], []>} : vector<16x256xf32>, vector<256x128xf32>, vector<16x128xf32> -> vector<16x128xf32>
    %c1_62 = arith.constant 1 : index
    %c0_63 = arith.constant 0 : index
    %53 = vector.load %arg11[%c1_62, %c0_63] : memref<18x256xf32, #tpu.memory_space<vmem>>, vector<16x256xf32>
    %c1_64 = arith.constant 1 : index
    %c0_65 = arith.constant 0 : index
    %c0_66 = arith.constant 0 : index
    %54 = vector.load %arg6[%c1_64, %c0_65, %c0_66] : memref<3x256x128xf32, #tpu.memory_space<vmem>>, vector<1x256x128xf32>
    %55 = vector.shape_cast %54 : vector<1x256x128xf32> to vector<256x128xf32>
    %cst_67 = arith.constant dense<0.000000e+00> : vector<16x128xf32>
    %56 = tpu.matmul %53, %55, %cst_67 {dimension_numbers = #tpu.dot_dimension_numbers<[1], [0], [0], [1], [0, 0, 1, 1], [], []>} : vector<16x256xf32>, vector<256x128xf32>, vector<16x128xf32> -> vector<16x128xf32>
    %57 = arith.addf %52, %56 : vector<16x128xf32>
    %c2_68 = arith.constant 2 : index
    %c0_69 = arith.constant 0 : index
    %58 = vector.load %arg11[%c2_68, %c0_69] : memref<18x256xf32, #tpu.memory_space<vmem>>, vector<16x256xf32>
    %c2_70 = arith.constant 2 : index
    %c0_71 = arith.constant 0 : index
    %c0_72 = arith.constant 0 : index
    %59 = vector.load %arg6[%c2_70, %c0_71, %c0_72] : memref<3x256x128xf32, #tpu.memory_space<vmem>>, vector<1x256x128xf32>
    %60 = vector.shape_cast %59 : vector<1x256x128xf32> to vector<256x128xf32>
    %cst_73 = arith.constant dense<0.000000e+00> : vector<16x128xf32>
    %61 = tpu.matmul %58, %60, %cst_73 {dimension_numbers = #tpu.dot_dimension_numbers<[1], [0], [0], [1], [0, 0, 1, 1], [], []>} : vector<16x256xf32>, vector<256x128xf32>, vector<16x128xf32> -> vector<16x128xf32>
    %62 = arith.addf %57, %61 : vector<16x128xf32>
    %c0_74 = arith.constant 0 : index
    %c0_75 = arith.constant 0 : index
    %63 = vector.load %arg7[%c0_74, %c0_75] : memref<1x128xf32, #tpu.memory_space<vmem>>, vector<1x128xf32>
    %64 = vector.broadcast %63 : vector<1x128xf32> to vector<16x128xf32>
    %65 = arith.addf %62, %64 : vector<16x128xf32>
    %cst_76 = arith.constant 0.000000e+00 : f32
    %66 = vector.broadcast %cst_76 : f32 to vector<16x128xf32>
    %67 = arith.maximumf %65, %66 : vector<16x128xf32>
    %c0_77 = arith.constant 0 : index
    %c0_78 = arith.constant 0 : index
    %c0_79 = arith.constant 0 : index
    %68 = vector.load %arg8[%c0_77, %c0_78, %c0_79] : memref<1x16x128xf32, #tpu.memory_space<vmem>>, vector<1x16x128xf32>
    %69 = vector.shape_cast %68 : vector<1x16x128xf32> to vector<16x128xf32>
    %70 = vector.shape_cast %67 : vector<16x128xf32> to vector<1x16x128xf32>
    tpu.vector_store %arg8[%c0_77, %c0_78, %c0_79], %70 {strides = array<i32>} : memref<1x16x128xf32, #tpu.memory_space<vmem>>, vector<1x16x128xf32>,
    return
  }
  func.func @transform_0(%arg0: i32) -> (i32, i32, i32) {
    %c0_i32 = arith.constant 0 : i32
    %c0_i32_0 = arith.constant 0 : i32
    %c0_i32_1 = arith.constant 0 : i32
    return %arg0, %c0_i32, %c0_i32_0 : i32, i32, i32
  }
  func.func @transform_1(%arg0: i32) -> (i32, i32, i32) {
    %c0_i32 = arith.constant 0 : i32
    %c0_i32_0 = arith.constant 0 : i32
    %c0_i32_1 = arith.constant 0 : i32
    %c0_i32_2 = arith.constant 0 : i32
    return %c0_i32, %c0_i32_0, %c0_i32_1 : i32, i32, i32
  }
  func.func @transform_2(%arg0: i32) -> (i32, i32) {
    %c0_i32 = arith.constant 0 : i32
    %c0_i32_0 = arith.constant 0 : i32
    %c0_i32_1 = arith.constant 0 : i32
    return %c0_i32, %c0_i32_0 : i32, i32
  }
  func.func @transform_3(%arg0: i32) -> (i32, i32, i32) {
    %c0_i32 = arith.constant 0 : i32
    %c0_i32_0 = arith.constant 0 : i32
    %c0_i32_1 = arith.constant 0 : i32
    %c0_i32_2 = arith.constant 0 : i32
    return %c0_i32, %c0_i32_0, %c0_i32_1 : i32, i32, i32
  }
  func.func @transform_4(%arg0: i32) -> (i32, i32) {
    %c0_i32 = arith.constant 0 : i32
    %c0_i32_0 = arith.constant 0 : i32
    %c0_i32_1 = arith.constant 0 : i32
    return %c0_i32, %c0_i32_0 : i32, i32
  }
  func.func @transform_5(%arg0: i32) -> (i32, i32, i32) {
    %c0_i32 = arith.constant 0 : i32
    %c0_i32_0 = arith.constant 0 : i32
    %c0_i32_1 = arith.constant 0 : i32
    %c0_i32_2 = arith.constant 0 : i32
    return %c0_i32, %c0_i32_0, %c0_i32_1 : i32, i32, i32
  }
  func.func @transform_6(%arg0: i32) -> (i32, i32) {
    %c0_i32 = arith.constant 0 : i32
    %c0_i32_0 = arith.constant 0 : i32
    %c0_i32_1 = arith.constant 0 : i32
    return %c0_i32, %c0_i32_0 : i32, i32
  }
  func.func @transform_7(%arg0: i32) -> (i32, i32, i32) {
    %c0_i32 = arith.constant 0 : i32
    %c0_i32_0 = arith.constant 0 : i32
    %c0_i32_1 = arith.constant 0 : i32
    return %arg0, %c0_i32, %c0_i32_0 : i32, i32, i32
  }
}

</mosaic_0001>

<llo_original>
// kernel: conv_encoder_forward.3
$region0: #{conv_encoder_forward.3}
  #allocation0 [shape = 'u32[]', space=smem, size = 0x4, offset = 0x4, fixed_abs, tag = 'smem constant byte address 0x4 - core index']
  #allocation1 [shape = 'u32[144,128]{1,0:T(1,128)}', space=vmem, size = 0x12000, scoped, tag = 'internal scratch']
  #allocation2 [shape = 'f32[2,128]{1,0:T(2,128)}', space=vmem, size = 0x400, scoped, tag = 'scratch operand']
  %s0 = inlined_call_operand.vmem [shape: f32[2,2048], index: 0, kind: input, shape index: {}]
  %s1 = inlined_call_operand.vmem [shape: f32[2048,128], index: 1, kind: input, shape index: {}]
  %s2 = inlined_call_operand.vmem [shape: f32[1,128], index: 2, kind: input, shape index: {}]
  %s3 = inlined_call_operand.hbm [shape: f32[2,128], index: 3, kind: output, shape index: {}]
  %s4 = sld [smem:[#allocation0]]
  $region53: #{conv_encoder_forward.3} parent=0
    _
  %s6 = ssub.s32 1, %s4
  %s7 = scalar_select 0, %s6, %s4
  $region1: #{conv_encoder_forward.3} parent=0
    #allocation3 [shape = 'u8[1024]{0}', space=vmem, size = 0x400, scoped, tag = 'output window, operand 0, single buffered']
    #allocation4 [shape = 's32[2]{0}', space=sflag, size = 0x8, scoped, tag = 'scoped memory for conv_encoder_forward.3']
    %8 = vsyncpa [#allocation4], 0
    loop: start=0, step=1, limit=6
    $region2: #{conv_encoder_forward.3} parent=1 // loop_pre_header
      _
    $region3: #{conv_encoder_forward.3} parent=1 // loop_header
      %s10 = sphi 0, %s14
      %p11 = scmp.ge.s32.totalorder %s10, 6
      %s17 = sphi 0, %s29
      %s18 = sphi 0, %s25
      %s19 = sphi 0, %s17
      %s20 = sphi 0, %s18
      %s21 = sphi 0, %s19
      %s22 = sphi 0, %s20
      %s34 = sphi 0, %s36
      %s37 = sphi 0, %s34
      %s38 = sphi 0, %s37
      %s54 = sphi 0, %s38
      %s60 = sphi 0, %s62
      %s63 = sphi 0, %s60
      %s64 = sphi 0, %s63
      %s80 = sphi 0, %s64
      %s84 = sphi 0, %s84
      %s86 = sphi 0, %s84
      %s87 = sphi 0, %s86
      %s101 = sphi 0, %s87
      %s107 = sphi 0, %s109
      %s110 = sphi 0, %s107
      %s111 = sphi 0, %s110
      %s127 = sphi 0, %s111
    $region4: #{conv_encoder_forward.3} parent=1 // loop_header_branch
      %13 = sbr.rel (%p11) target = $region8
    $region5: #{conv_encoder_forward.3} parent=1 // loop_body
      %s15 = ssub.s32 %s10, 1
      %s16 = ssub.s32 %s10, 2
      %s23 = sadd.s32 1, %s18
      %p24 = scmp.ge.s32.totalorder %s23, 4
      %s25 = scalar_select %p24, 0, %s23
      %s26 = sadd.s32 1, %s17
      %s27 = scalar_select %p24, %s26, %s17
      %p28 = scmp.ge.s32.totalorder %s27, 1
      %s29 = scalar_select %p28, 0, %s27
      %s30 = ssub.s32 %s17, %s29
      %s31 = ssub.s32 %s18, %s25
      %s32 = sor.u32 %s30, %s31
      %p33 = scmp.eq.s32.totalorder %s32, 0
      %s35 = sadd.s32 %s34, 1
      %s36 = scalar_select %p33, %s34, %s35
      %p39 = pneg %p33
      %p40 = scmp.eq.s32.totalorder %s10, 3
      %p41 = por %p39, %p40
      %p42 = scmp.ne.s32.totalorder %s34, %s37
      %p43 = scmp.eq.s32.totalorder %s10, 0
      %p44 = por %p42, %p43
      %p45 = scmp.ne.s32.totalorder %s34, %s37
      %p46 = scmp.eq.s32.totalorder %s15, 3
      %p47 = por %p45, %p46
      %p48 = scmp.ne.s32.totalorder %s37, %s38
      %p49 = scmp.eq.s32.totalorder %s15, 0
      %p50 = por %p48, %p49
      %p51 = scmp.ne.s32.totalorder %s37, %s38
      %p52 = scmp.eq.s32.totalorder %s16, 3
      %p53 = por %p51, %p52
      %p55 = scmp.ne.s32.totalorder %s38, %s54
      %p56 = scmp.eq.s32.totalorder %s16, 0
      %p57 = por %p55, %p56
      %s58 = ssub.s32 %s18, %s25
      %p59 = scmp.eq.s32.totalorder %s58, 0
      %s61 = sadd.s32 %s60, 1
      %s62 = scalar_select %p59, %s60, %s61
      %p65 = pneg %p59
      %p66 = scmp.eq.s32.totalorder %s10, 3
      %p67 = por %p65, %p66
      %p68 = scmp.ne.s32.totalorder %s60, %s63
      %p69 = scmp.eq.s32.totalorder %s10, 0
      %p70 = por %p68, %p69
      %p71 = scmp.ne.s32.totalorder %s60, %s63
      %p72 = scmp.eq.s32.totalorder %s15, 3
      %p73 = por %p71, %p72
      %p74 = scmp.ne.s32.totalorder %s63, %s64
      %p75 = scmp.eq.s32.totalorder %s15, 0
      %p76 = por %p74, %p75
      %p77 = scmp.ne.s32.totalorder %s63, %s64
      %p78 = scmp.eq.s32.totalorder %s16, 3
      %p79 = por %p77, %p78
      %p81 = scmp.ne.s32.totalorder %s64, %s80
      %p82 = scmp.eq.s32.totalorder %s16, 0
      %p83 = por %p81, %p82
      %s85 = sadd.s32 %s84, 1
      %p88 = scmp.eq.s32.totalorder %s10, 3
      %p89 = scmp.ne.s32.totalorder %s84, %s86
      %p90 = scmp.eq.s32.totalorder %s10, 0
      %p91 = por %p89, %p90
      %p92 = scmp.ne.s32.totalorder %s84, %s86
      %p93 = scmp.eq.s32.totalorder %s15, 3
      %p94 = por %p92, %p93
      %p95 = scmp.ne.s32.totalorder %s86, %s87
      %p96 = scmp.eq.s32.totalorder %s15, 0
      %p97 = por %p95, %p96
      %p98 = scmp.ne.s32.totalorder %s86, %s87
      %p99 = scmp.eq.s32.totalorder %s16, 3
      %p100 = por %p98, %p99
      %p102 = scmp.ne.s32.totalorder %s87, %s101
      %p103 = scmp.eq.s32.totalorder %s16, 0
      %p104 = por %p102, %p103
      %s105 = ssub.s32 %s17, %s29
      %p106 = scmp.eq.s32.totalorder %s105, 0
      %s108 = sadd.s32 %s107, 1
      %s109 = scalar_select %p106, %s107, %s108
      %p112 = pneg %p106
      %p113 = scmp.eq.s32.totalorder %s10, 3
      %p114 = por %p112, %p113
      %p115 = scmp.ne.s32.totalorder %s107, %s110
      %p116 = scmp.eq.s32.totalorder %s10, 0
      %p117 = por %p115, %p116
      %p118 = scmp.ne.s32.totalorder %s107, %s110
      %p119 = scmp.eq.s32.totalorder %s15, 3
      %p120 = por %p118, %p119
      %p121 = scmp.ne.s32.totalorder %s110, %s111
      %p122 = scmp.eq.s32.totalorder %s15, 0
      %p123 = por %p121, %p122
      %p124 = scmp.ne.s32.totalorder %s110, %s111
      %p125 = scmp.eq.s32.totalorder %s16, 3
      %p126 = por %p124, %p125
      %p128 = scmp.ne.s32.totalorder %s111, %s127
      %p129 = scmp.eq.s32.totalorder %s16, 0
      %p130 = por %p128, %p129
      %p131 = scmp.le.s32.totalorder 1, %s10
      %p132 = scmp.lt.s32.totalorder %s10, 5
      %p133 = pnand %p131, %p132
      %p134 = pneg %p133
      // Predicated region
      $region9: #{conv_encoder_forward.3} parent=5 // pred_check
        _
      $region10: #{conv_encoder_forward.3} parent=5 // pred_check_branch
        %136 = sbr.rel (%p133) target = $region12
      $region11: #{conv_encoder_forward.3} parent=5 // pred_region
        %s137 = ssub.s32 %s10, 1
        // Predicated region
        $region13: #{conv_encoder_forward.3} parent=11 // pred_check
          %p138 = pneg %p97
        $region14: #{conv_encoder_forward.3} parent=11 // pred_check_branch
          %140 = sbr.rel (%p138) target = $region16
        $region15: #{conv_encoder_forward.3} parent=11 // pred_region
          _
        $region16: #{conv_encoder_forward.3} parent=11 // pred_fallthru
          _
      $region12: #{conv_encoder_forward.3} parent=5 // pred_fallthru
        _
      %p141 = scmp.lt.s32.totalorder %s10, 4
      // Predicated region
      $region17: #{conv_encoder_forward.3} parent=5 // pred_check
        %p142 = pneg %p141
      $region18: #{conv_encoder_forward.3} parent=5 // pred_check_branch
        %144 = sbr.rel (%p142) target = $region20
      $region19: #{conv_encoder_forward.3} parent=5 // pred_region
        // Predicated region
        $region21: #{conv_encoder_forward.3} parent=19 // pred_check
          %p145 = pneg %p44
        $region22: #{conv_encoder_forward.3} parent=19 // pred_check_branch
          %147 = sbr.rel (%p145) target = $region24
        $region23: #{conv_encoder_forward.3} parent=19 // pred_region
          %s148 = smul.u32 4, %s18
          %p149 = scmp.lt.s32.totalorder %s17, 0
          %s150 = scalar_select %p149, %s17, 0
          %p151 = scmp.lt.s32.totalorder %s148, 15
          %s152 = scalar_select %p151, %s148, 15
          %s153 = smul.addr %s150, 16
          %s154 = sadd.s32 %s152, %s153
          %s155 = smul.addr %s154, 2
          %s156 = scalar_lea.vmem %s0, %s155
          %s157 = smul.u32 4, %s18
        $region24: #{conv_encoder_forward.3} parent=19 // pred_fallthru
          _
        // Predicated region
        $region25: #{conv_encoder_forward.3} parent=19 // pred_check
          %p158 = pneg %p70
        $region26: #{conv_encoder_forward.3} parent=19 // pred_check_branch
          %160 = sbr.rel (%p158) target = $region28
        $region27: #{conv_encoder_forward.3} parent=19 // pred_region
          %s161 = smul.u32 64, %s18
          %p162 = scmp.lt.s32.totalorder %s161, 255
          %s163 = scalar_select %p162, %s161, 255
          %s164 = smul.addr %s163, 8
          %s165 = scalar_lea.vmem %s1, %s164
          %s166 = smul.u32 64, %s18
        $region28: #{conv_encoder_forward.3} parent=19 // pred_fallthru
          _
      $region20: #{conv_encoder_forward.3} parent=5 // pred_fallthru
        _
      %p167 = scmp.le.s32.totalorder 1, %s10
      %p168 = scmp.lt.s32.totalorder %s10, 5
      %p169 = pnand %p167, %p168
      %p170 = pneg %p169
      // Predicated region
      $region29: #{conv_encoder_forward.3} parent=5 // pred_check
        _
      $region30: #{conv_encoder_forward.3} parent=5 // pred_check_branch
        %172 = sbr.rel (%p169) target = $region32
      $region31: #{conv_encoder_forward.3} parent=5 // pred_region
        %s173 = ssub.s32 %s10, 1
        %s174 = smul.u32 4, %s20
        %p175 = scmp.lt.s32.totalorder %s19, 0
        %s176 = scalar_select %p175, %s19, 0
        %p177 = scmp.lt.s32.totalorder %s174, 15
        %s178 = scalar_select %p177, %s174, 15
        %s179 = smul.addr %s176, 16
        %s180 = sadd.s32 %s178, %s179
        %s181 = smul.addr %s180, 2
        %s182 = scalar_lea.vmem %s0, %s181
        %p183 = pneg %p50
        %p184 = pneg %p47
        %s185 = smul.u32 64, %s20
        %p186 = scmp.lt.s32.totalorder %s185, 255
        %s187 = scalar_select %p186, %s185, 255
        %s188 = smul.addr %s187, 8
        %s189 = scalar_lea.vmem %s1, %s188
        %p190 = pneg %p76
        %p191 = pneg %p73
        %p192 = pneg %p97
        %p193 = pneg %p94
        %p194 = pneg %p123
        %p195 = pneg %p120
        %s196 = smul.u32 4, %s20
        %p197 = scmp.lt.s32.totalorder %s19, 0
        %s198 = scalar_select %p197, %s19, 0
        %p199 = scmp.lt.s32.totalorder %s196, 15
        %s200 = scalar_select %p199, %s196, 15
        %s201 = smul.addr %s198, 16
        %s202 = sadd.s32 %s200, %s201
        %s203 = smul.addr %s202, 2
        %s204 = scalar_lea.vmem %s0, %s203
        %s205 = smul.u32 4, %s20
        %s206 = smul.u32 64, %s20
        %p207 = scmp.lt.s32.totalorder %s206, 255
        %s208 = scalar_select %p207, %s206, 255
        %s209 = smul.addr %s208, 8
        %s210 = scalar_lea.vmem %s1, %s209
        %s211 = smul.u32 64, %s20
        %p212 = scmp.eq.s32.totalorder %s20, 0
        // Predicated region
        $region33: #{conv_encoder_forward.3} parent=31 // pred_check
          %p213 = pneg %p212
        $region34: #{conv_encoder_forward.3} parent=31 // pred_check_branch
          %215 = sbr.rel (%p213) target = $region36
        $region35: #{conv_encoder_forward.3} parent=31 // pred_region
          %216 = vst [vmem:[#allocation2] sm:$0x3] 0.0
        $region36: #{conv_encoder_forward.3} parent=31 // pred_fallthru
          _
        %v217 = vld [vmem:[#allocation2] sm:$0x3]
        %v218 = vld [vmem:[%s204] sm:$0xff]
        %v219 = vld [vmem:[%s210] sm:$0xff]
        %v220 = vld [vmem:[%s210 + $0x8] sm:$0xff]
        %v221 = vld [vmem:[%s210 + $0x10] sm:$0xff]
        %v222 = vld [vmem:[%s210 + $0x18] sm:$0xff]
        %v223 = vld [vmem:[%s210 + $0x20] sm:$0xff]
        %v224 = vld [vmem:[%s210 + $0x28] sm:$0xff]
        %v225 = vld [vmem:[%s210 + $0x30] sm:$0xff]
        %v226 = vld [vmem:[%s210 + $0x38] sm:$0xff]
        %v227 = vld [vmem:[%s210 + $0x40] sm:$0xff]
        %v228 = vld [vmem:[%s210 + $0x48] sm:$0xff]
        %v229 = vld [vmem:[%s210 + $0x50] sm:$0xff]
        %v230 = vld [vmem:[%s210 + $0x58] sm:$0xff]
        %v231 = vld [vmem:[%s210 + $0x60] sm:$0xff]
        %v232 = vld [vmem:[%s210 + $0x68] sm:$0xff]
        %v233 = vld [vmem:[%s210 + $0x70] sm:$0xff]
        %v234 = vld [vmem:[%s210 + $0x78] sm:$0xff]
        %v235 = vld [vmem:[%s210 + $0x80] sm:$0xff]
        %v236 = vld [vmem:[%s210 + $0x88] sm:$0xff]
        %v237 = vld [vmem:[%s210 + $0x90] sm:$0xff]
        %v238 = vld [vmem:[%s210 + $0x98] sm:$0xff]
        %v239 = vld [vmem:[%s210 + $0xa0] sm:$0xff]
        %v240 = vld [vmem:[%s210 + $0xa8] sm:$0xff]
        %v241 = vld [vmem:[%s210 + $0xb0] sm:$0xff]
        %v242 = vld [vmem:[%s210 + $0xb8] sm:$0xff]
        %v243 = vld [vmem:[%s210 + $0xc0] sm:$0xff]
        %v244 = vld [vmem:[%s210 + $0xc8] sm:$0xff]
        %v245 = vld [vmem:[%s210 + $0xd0] sm:$0xff]
        %v246 = vld [vmem:[%s210 + $0xd8] sm:$0xff]
        %v247 = vld [vmem:[%s210 + $0xe0] sm:$0xff]
        %v248 = vld [vmem:[%s210 + $0xe8] sm:$0xff]
        %v249 = vld [vmem:[%s210 + $0xf0] sm:$0xff]
        %v250 = vld [vmem:[%s210 + $0xf8] sm:$0xff]
        %v251 = vld [vmem:[%s210 + $0x100] sm:$0xff]
        %v252 = vld [vmem:[%s210 + $0x108] sm:$0xff]
        %v253 = vld [vmem:[%s210 + $0x110] sm:$0xff]
        %v254 = vld [vmem:[%s210 + $0x118] sm:$0xff]
        %v255 = vld [vmem:[%s210 + $0x120] sm:$0xff]
        %v256 = vld [vmem:[%s210 + $0x128] sm:$0xff]
        %v257 = vld [vmem:[%s210 + $0x130] sm:$0xff]
        %v258 = vld [vmem:[%s210 + $0x138] sm:$0xff]
        %v259 = vld [vmem:[%s210 + $0x140] sm:$0xff]
        %v260 = vld [vmem:[%s210 + $0x148] sm:$0xff]
        %v261 = vld [vmem:[%s210 + $0x150] sm:$0xff]
        %v262 = vld [vmem:[%s210 + $0x158] sm:$0xff]
        %v263 = vld [vmem:[%s210 + $0x160] sm:$0xff]
        %v264 = vld [vmem:[%s210 + $0x168] sm:$0xff]
        %v265 = vld [vmem:[%s210 + $0x170] sm:$0xff]
        %v266 = vld [vmem:[%s210 + $0x178] sm:$0xff]
        %v267 = vld [vmem:[%s210 + $0x180] sm:$0xff]
        %v268 = vld [vmem:[%s210 + $0x188] sm:$0xff]
        %v269 = vld [vmem:[%s210 + $0x190] sm:$0xff]
        %v270 = vld [vmem:[%s210 + $0x198] sm:$0xff]
        %v271 = vld [vmem:[%s210 + $0x1a0] sm:$0xff]
        %v272 = vld [vmem:[%s210 + $0x1a8] sm:$0xff]
        %v273 = vld [vmem:[%s210 + $0x1b0] sm:$0xff]
        %v274 = vld [vmem:[%s210 + $0x1b8] sm:$0xff]
        %v275 = vld [vmem:[%s210 + $0x1c0] sm:$0xff]
        %v276 = vld [vmem:[%s210 + $0x1c8] sm:$0xff]
        %v277 = vld [vmem:[%s210 + $0x1d0] sm:$0xff]
        %v278 = vld [vmem:[%s210 + $0x1d8] sm:$0xff]
        %v279 = vld [vmem:[%s210 + $0x1e0] sm:$0xff]
        %v280 = vld [vmem:[%s210 + $0x1e8] sm:$0xff]
        %v281 = vld [vmem:[%s210 + $0x1f0] sm:$0xff]
        %v282 = vld [vmem:[%s210 + $0x1f8] sm:$0xff]
        %v284 = vcombine.high %v218, %v218
        %v286 = vunpack.c.l.s4 1983009808
        %v287 = vunpack.c.0.s8 %v286
        %v288 = vlaneseq
        %v289 = vshrl.u32 %v288, 7
        %v290 = vsub.s32 %v287, %v289
        %v291 = vrot.slane %v218, %v290
        %v293 = vunpack.c.l.s4 1983009808
        %v294 = vunpack.c.0.s8 %v293
        %v295 = vlaneseq
        %v296 = vshrl.u32 %v295, 7
        %v297 = vsub.s32 %v294, %v296
        %v298 = vrot.slane %v284, %v297
        %v299 = vcombine.high %v291, %v291
        %v300 = vcombine.high %v298, %v298
        %305 = vmatprep.subr.mxu0 0.0
        %306 = vmatpush1.msra.mxu0 %v234
        %307 = vmatprep.subr.mxu0 0.0
        %308 = vmatpush1.msra.mxu0 %v233
        %309 = vmatprep.subr.mxu0 0.0
        %310 = vmatpush1.msra.mxu0 %v232
        %311 = vmatprep.subr.mxu0 0.0
        %312 = vmatpush1.msra.mxu0 %v231
        %313 = vmatprep.subr.mxu0 0.0
        %314 = vmatpush1.msra.mxu0 %v230
        %315 = vmatprep.subr.mxu0 0.0
        %316 = vmatpush1.msra.mxu0 %v229
        %317 = vmatprep.subr.mxu0 0.0
        %318 = vmatpush1.msra.mxu0 %v228
        %319 = vmatprep.subr.mxu0 0.0
        %320 = vmatpush1.msra.mxu0 %v227
        %321 = vmatprep.subr.mxu0 0.0
        %322 = vmatpush1.msra.mxu0 %v226
        %323 = vmatprep.subr.mxu0 0.0
        %324 = vmatpush1.msra.mxu0 %v225
        %325 = vmatprep.subr.mxu0 0.0
        %326 = vmatpush1.msra.mxu0 %v224
        %327 = vmatprep.subr.mxu0 0.0
        %328 = vmatpush1.msra.mxu0 %v223
        %329 = vmatprep.subr.mxu0 0.0
        %330 = vmatpush1.msra.mxu0 %v222
        %331 = vmatprep.subr.mxu0 0.0
        %332 = vmatpush1.msra.mxu0 %v221
        %333 = vmatprep.subr.mxu0 0.0
        %334 = vmatpush1.msra.mxu0 %v220
        %335 = vmatprep.subr.mxu0 0.0
        %336 = vmatpush1.msra.mxu0 %v219
        %337 = vmatprep.subr.mxu0 0.0
        %338 = vmatpush2.msra.mxu0 %v250
        %339 = vmatprep.subr.mxu0 0.0
        %340 = vmatpush2.msra.mxu0 %v249
        %341 = vmatprep.subr.mxu0 0.0
        %342 = vmatpush2.msra.mxu0 %v248
        %343 = vmatprep.subr.mxu0 0.0
        %344 = vmatpush2.msra.mxu0 %v247
        %345 = vmatprep.subr.mxu0 0.0
        %346 = vmatpush2.msra.mxu0 %v246
        %347 = vmatprep.subr.mxu0 0.0
        %348 = vmatpush2.msra.mxu0 %v245
        %349 = vmatprep.subr.mxu0 0.0
        %350 = vmatpush2.msra.mxu0 %v244
        %351 = vmatprep.subr.mxu0 0.0
        %352 = vmatpush2.msra.mxu0 %v243
        %353 = vmatprep.subr.mxu0 0.0
        %354 = vmatpush2.msra.mxu0 %v242
        %355 = vmatprep.subr.mxu0 0.0
        %356 = vmatpush2.msra.mxu0 %v241
        %357 = vmatprep.subr.mxu0 0.0
        %358 = vmatpush2.msra.mxu0 %v240
        %359 = vmatprep.subr.mxu0 0.0
        %360 = vmatpush2.msra.mxu0 %v239
        %361 = vmatprep.subr.mxu0 0.0
        %362 = vmatpush2.msra.mxu0 %v238
        %363 = vmatprep.subr.mxu0 0.0
        %364 = vmatpush2.msra.mxu0 %v237
        %365 = vmatprep.subr.mxu0 0.0
        %366 = vmatpush2.msra.mxu0 %v236
        %367 = vmatprep.subr.mxu0 0.0
        %368 = vmatpush2.msra.mxu0 %v235
        %369 = vmatprep.mubr.f32.mxu0 %v299
        %370 = vmatmul.mubr.f32.gmra.mxu0 %v291
        %v371 = vpop.f32.mrf.mxu0
        %v372 = vadd.f32 0.0, %v371
        %v373 = vpop.f32.mrf.mxu0
        %374 = vdwg.mxu0
        %375 = vmatprep.subr.mxu0 0.0
        %376 = vmatpush1.msra.mxu0 %v266
        %377 = vmatprep.subr.mxu0 0.0
        %378 = vmatpush1.msra.mxu0 %v265
        %379 = vmatprep.subr.mxu0 0.0
        %380 = vmatpush1.msra.mxu0 %v264
        %381 = vmatprep.subr.mxu0 0.0
        %382 = vmatpush1.msra.mxu0 %v263
        %383 = vmatprep.subr.mxu0 0.0
        %384 = vmatpush1.msra.mxu0 %v262
        %385 = vmatprep.subr.mxu0 0.0
        %386 = vmatpush1.msra.mxu0 %v261
        %387 = vmatprep.subr.mxu0 0.0
        %388 = vmatpush1.msra.mxu0 %v260
        %389 = vmatprep.subr.mxu0 0.0
        %390 = vmatpush1.msra.mxu0 %v259
        %391 = vmatprep.subr.mxu0 0.0
        %392 = vmatpush1.msra.mxu0 %v258
        %393 = vmatprep.subr.mxu0 0.0
        %394 = vmatpush1.msra.mxu0 %v257
        %395 = vmatprep.subr.mxu0 0.0
        %396 = vmatpush1.msra.mxu0 %v256
        %397 = vmatprep.subr.mxu0 0.0
        %398 = vmatpush1.msra.mxu0 %v255
        %399 = vmatprep.subr.mxu0 0.0
        %400 = vmatpush1.msra.mxu0 %v254
        %401 = vmatprep.subr.mxu0 0.0
        %402 = vmatpush1.msra.mxu0 %v253
        %403 = vmatprep.subr.mxu0 0.0
        %404 = vmatpush1.msra.mxu0 %v252
        %405 = vmatprep.subr.mxu0 0.0
        %406 = vmatpush1.msra.mxu0 %v251
        %407 = vmatprep.subr.mxu0 0.0
        %408 = vmatpush2.msra.mxu0 %v282
        %409 = vmatprep.subr.mxu0 0.0
        %410 = vmatpush2.msra.mxu0 %v281
        %411 = vmatprep.subr.mxu0 0.0
        %412 = vmatpush2.msra.mxu0 %v280
        %413 = vmatprep.subr.mxu0 0.0
        %414 = vmatpush2.msra.mxu0 %v279
        %415 = vmatprep.subr.mxu0 0.0
        %416 = vmatpush2.msra.mxu0 %v278
        %417 = vmatprep.subr.mxu0 0.0
        %418 = vmatpush2.msra.mxu0 %v277
        %419 = vmatprep.subr.mxu0 0.0
        %420 = vmatpush2.msra.mxu0 %v276
        %421 = vmatprep.subr.mxu0 0.0
        %422 = vmatpush2.msra.mxu0 %v275
        %423 = vmatprep.subr.mxu0 0.0
        %424 = vmatpush2.msra.mxu0 %v274
        %425 = vmatprep.subr.mxu0 0.0
        %426 = vmatpush2.msra.mxu0 %v273
        %427 = vmatprep.subr.mxu0 0.0
        %428 = vmatpush2.msra.mxu0 %v272
        %429 = vmatprep.subr.mxu0 0.0
        %430 = vmatpush2.msra.mxu0 %v271
        %431 = vmatprep.subr.mxu0 0.0
        %432 = vmatpush2.msra.mxu0 %v270
        %433 = vmatprep.subr.mxu0 0.0
        %434 = vmatpush2.msra.mxu0 %v269
        %435 = vmatprep.subr.mxu0 0.0
        %436 = vmatpush2.msra.mxu0 %v268
        %437 = vmatprep.subr.mxu0 0.0
        %438 = vmatpush2.msra.mxu0 %v267
        %439 = vmatprep.mubr.f32.mxu0 %v300
        %440 = vmatmul.mubr.f32.gmra.mxu0 %v298
        %v441 = vpop.f32.mrf.mxu0
        %v442 = vadd.f32 %v372, %v441
        %v443 = vpop.f32.mrf.mxu0
        %444 = vdwg.mxu0
        %v445 = vadd.f32 %v217, %v442
        %446 = vst [vmem:[#allocation2] sm:$0x3] %v445
        %p447 = scmp.eq.s32.totalorder %s20, 3
        // Predicated region
        $region37: #{conv_encoder_forward.3} parent=31 // pred_check
          %p448 = pneg %p447
        $region38: #{conv_encoder_forward.3} parent=31 // pred_check_branch
          %450 = sbr.rel (%p448) target = $region40
        $region39: #{conv_encoder_forward.3} parent=31 // pred_region
          %v451 = vld [vmem:[#allocation2] sm:$0x3]
          %v452 = vld [vmem:[%s2] sm:$0x1]
          %v454 = vlaneseq
          %v455 = vshrl.u32 %v454, 7
          %v456 = vsub.s32 0, %v455
          %v457 = vrot.slane %v452, %v456
          %v459 = vadd.f32 %v451, %v457
          %460 = vst [vmem:[#allocation3] sm:$0x3] %v459
        $region40: #{conv_encoder_forward.3} parent=31 // pred_fallthru
          _
        // Predicated region
        $region41: #{conv_encoder_forward.3} parent=31 // pred_check
          %p461 = pneg %p120
        $region42: #{conv_encoder_forward.3} parent=31 // pred_check_branch
          %463 = sbr.rel (%p461) target = $region44
        $region43: #{conv_encoder_forward.3} parent=31 // pred_region
          %s465 = ssub.s32 32, 32
          %466 = vsyncadd [#allocation4], %s465
          %s467 = smul.addr %s19, 32
          %s468 = scalar_lea.hbm %s3, %s467
          %s470 = sshll.u32 [#allocation3], 4
          %s471 = int_to_ptr.vmem [resolvable:$true] %s470
          %473 = dma.vmem_to_hbm [thread:$0]  %s471, 32, %s468, [#allocation4]
        $region44: #{conv_encoder_forward.3} parent=31 // pred_fallthru
          _
        // Predicated region
        $region45: #{conv_encoder_forward.3} parent=31 // pred_check
          %p474 = pneg %p120
        $region46: #{conv_encoder_forward.3} parent=31 // pred_check_branch
          %476 = sbr.rel (%p474) target = $region48
        $region47: #{conv_encoder_forward.3} parent=31 // pred_region
          %477 = dma.done [#allocation4], 32
        $region48: #{conv_encoder_forward.3} parent=31 // pred_fallthru
          _
      $region32: #{conv_encoder_forward.3} parent=5 // pred_fallthru
        _
      %p478 = scmp.le.s32.totalorder 2, %s10
      // Predicated region
      $region49: #{conv_encoder_forward.3} parent=5 // pred_check
        %p479 = pneg %p478
      $region50: #{conv_encoder_forward.3} parent=5 // pred_check_branch
        %481 = sbr.rel (%p479) target = $region52
      $region51: #{conv_encoder_forward.3} parent=5 // pred_region
        %s482 = ssub.s32 %s10, 2
      $region52: #{conv_encoder_forward.3} parent=5 // pred_fallthru
        _
    $region6: #{conv_encoder_forward.3} parent=1 // loop_footer
      %s14 = sadd.s32 1, %s10
    $region7: #{conv_encoder_forward.3} parent=1 // loop_footer_branch
      %9 = sbr.rel target = $region3
    $region8: #{conv_encoder_forward.3} parent=1 // loop_exit
      _
    %483 = vsyncpa [#allocation4], 1
    %s484 = scalar_lea.sflag [#allocation4], 1
    %485 = vsyncpa %s484, 1

// kernel: conv_encoder_forward.2
$region0: #{conv_encoder_forward.2}
  #allocation0 [shape = 'u32[]', space=smem, size = 0x4, offset = 0x4, fixed_abs, tag = 'smem constant byte address 0x4 - core index']
  #allocation1 [shape = 'u32[144,128]{1,0:T(1,128)}', space=vmem, size = 0x12000, scoped, tag = 'internal scratch']
  #allocation2 [shape = 'f32[18,16]{1,0:T(8,128)}', space=vmem, size = 0x3000, scoped, tag = 'scratch operand']
  #allocation3 [shape = 'f32[18,512]{1,0:T(8,128)}', space=vmem, size = 0xc000, scoped, tag = 'scratch operand']
  #allocation4 [shape = 'f32[18,256]{1,0:T(8,128)}', space=vmem, size = 0x6000, scoped, tag = 'scratch operand']
  %s0 = inlined_call_operand.hbm [shape: f32[2,16,16], index: 0, kind: input, shape index: {}]
  %s1 = inlined_call_operand.hbm [shape: f32[3,16,512], index: 1, kind: input, shape index: {}]
  %s2 = inlined_call_operand.hbm [shape: f32[1,512], index: 2, kind: input, shape index: {}]
  %s3 = inlined_call_operand.hbm [shape: f32[3,512,256], index: 3, kind: input, shape index: {}]
  %s4 = inlined_call_operand.hbm [shape: f32[1,256], index: 4, kind: input, shape index: {}]
  %s5 = inlined_call_operand.hbm [shape: f32[3,256,128], index: 5, kind: input, shape index: {}]
  %s6 = inlined_call_operand.hbm [shape: f32[1,128], index: 6, kind: input, shape index: {}]
  %s7 = inlined_call_operand.vmem [shape: f32[2,16,128], index: 7, kind: output, shape index: {}]
  %s8 = sld [smem:[#allocation0]]
  $region89: #{conv_encoder_forward.2} parent=0
    _
  %s10 = ssub.s32 1, %s8
  %s11 = scalar_select 0, %s10, %s8
  $region1: #{conv_encoder_forward.2} parent=0
    #allocation5 [shape = 'u8[16384]{0}', space=vmem, size = 0x4000, scoped, tag = 'input window, operand 0']
    #allocation6 [shape = 's32[2]{0}', space=sflag, size = 0x8, scoped, tag = 'scoped memory for conv_encoder_forward.2']
    #allocation7 [shape = 'u8[98304]{0}', space=vmem, size = 0x18000, scoped, tag = 'input window, operand 1, single buffered']
    #allocation8 [shape = 's32[1]{0}', space=sflag, size = 0x4, scoped, tag = 'scoped memory for conv_encoder_forward.2']
    #allocation9 [shape = 'u8[2048]{0}', space=vmem, size = 0x800, scoped, tag = 'input window, operand 2, single buffered']
    #allocation10 [shape = 'u8[1572864]{0}', space=vmem, size = 0x180000, scoped, tag = 'input window, operand 3, single buffered']
    #allocation11 [shape = 's32[1]{0}', space=sflag, size = 0x4, scoped, tag = 'scoped memory for conv_encoder_forward.2']
    #allocation12 [shape = 'u8[1024]{0}', space=vmem, size = 0x400, scoped, tag = 'input window, operand 4, single buffered']
    #allocation13 [shape = 'u8[393216]{0}', space=vmem, size = 0x60000, scoped, tag = 'input window, operand 5, single buffered']
    #allocation14 [shape = 's32[1]{0}', space=sflag, size = 0x4, scoped, tag = 'scoped memory for conv_encoder_forward.2']
    #allocation15 [shape = 'u8[512]{0}', space=vmem, size = 0x400, scoped, tag = 'input window, operand 6, single buffered']
    %12 = vsyncpa [#allocation6], 0
    %s13 = scalar_lea.sflag [#allocation6], 1
    %14 = vsyncpa %s13, 0
    %15 = vsyncpa [#allocation8], 0
    %16 = vsyncpa [#allocation11], 0
    %17 = vsyncpa [#allocation14], 0
    loop: start=0, step=1, limit=4
    $region2: #{conv_encoder_forward.2} parent=1 // loop_pre_header
      _
    $region3: #{conv_encoder_forward.2} parent=1 // loop_header
      %s19 = sphi 0, %s23
      %p20 = scmp.ge.s32.totalorder %s19, 4
      %s29 = sphi 0, %s31
      %s32 = sphi 0, %s29
      %s33 = sphi 0, %s32
      %s49 = sphi 0, %s33
      %s53 = sphi 0, %s53
      %s55 = sphi 0, %s53
      %s56 = sphi 0, %s55
      %s70 = sphi 0, %s56
      %s74 = sphi 0, %s74
      %s76 = sphi 0, %s74
      %s77 = sphi 0, %s76
      %s91 = sphi 0, %s77
      %s95 = sphi 0, %s95
      %s97 = sphi 0, %s95
      %s98 = sphi 0, %s97
      %s112 = sphi 0, %s98
      %s116 = sphi 0, %s116
      %s118 = sphi 0, %s116
      %s119 = sphi 0, %s118
      %s133 = sphi 0, %s119
      %s137 = sphi 0, %s137
      %s139 = sphi 0, %s137
      %s140 = sphi 0, %s139
      %s154 = sphi 0, %s140
      %s158 = sphi 0, %s158
      %s160 = sphi 0, %s158
      %s161 = sphi 0, %s160
      %s175 = sphi 0, %s161
      %s181 = sphi 0, %s183
      %s184 = sphi 0, %s181
      %s185 = sphi 0, %s184
      %s201 = sphi 0, %s185
    $region4: #{conv_encoder_forward.2} parent=1 // loop_header_branch
      %22 = sbr.rel (%p20) target = $region8
    $region5: #{conv_encoder_forward.2} parent=1 // loop_body
      %s24 = ssub.s32 %s19, 1
      %s25 = ssub.s32 %s19, 2
      %s26 = sadd.s32 %s19, 1
      %s27 = ssub.s32 %s19, %s26
      %p28 = scmp.eq.s32.totalorder %s27, 0
      %s30 = sadd.s32 %s29, 1
      %s31 = scalar_select %p28, %s29, %s30
      %p34 = pneg %p28
      %p35 = scmp.eq.s32.totalorder %s19, 1
      %p36 = por %p34, %p35
      %p37 = scmp.ne.s32.totalorder %s29, %s32
      %p38 = scmp.eq.s32.totalorder %s19, 0
      %p39 = por %p37, %p38
      %p40 = scmp.ne.s32.totalorder %s29, %s32
      %p41 = scmp.eq.s32.totalorder %s24, 1
      %p42 = por %p40, %p41
      %p43 = scmp.ne.s32.totalorder %s32, %s33
      %p44 = scmp.eq.s32.totalorder %s24, 0
      %p45 = por %p43, %p44
      %p46 = scmp.ne.s32.totalorder %s32, %s33
      %p47 = scmp.eq.s32.totalorder %s25, 1
      %p48 = por %p46, %p47
      %p50 = scmp.ne.s32.totalorder %s33, %s49
      %p51 = scmp.eq.s32.totalorder %s25, 0
      %p52 = por %p50, %p51
      %s54 = sadd.s32 %s53, 1
      %p57 = scmp.eq.s32.totalorder %s19, 1
      %p58 = scmp.ne.s32.totalorder %s53, %s55
      %p59 = scmp.eq.s32.totalorder %s19, 0
      %p60 = por %p58, %p59
      %p61 = scmp.ne.s32.totalorder %s53, %s55
      %p62 = scmp.eq.s32.totalorder %s24, 1
      %p63 = por %p61, %p62
      %p64 = scmp.ne.s32.totalorder %s55, %s56
      %p65 = scmp.eq.s32.totalorder %s24, 0
      %p66 = por %p64, %p65
      %p67 = scmp.ne.s32.totalorder %s55, %s56
      %p68 = scmp.eq.s32.totalorder %s25, 1
      %p69 = por %p67, %p68
      %p71 = scmp.ne.s32.totalorder %s56, %s70
      %p72 = scmp.eq.s32.totalorder %s25, 0
      %p73 = por %p71, %p72
      %s75 = sadd.s32 %s74, 1
      %p78 = scmp.eq.s32.totalorder %s19, 1
      %p79 = scmp.ne.s32.totalorder %s74, %s76
      %p80 = scmp.eq.s32.totalorder %s19, 0
      %p81 = por %p79, %p80
      %p82 = scmp.ne.s32.totalorder %s74, %s76
      %p83 = scmp.eq.s32.totalorder %s24, 1
      %p84 = por %p82, %p83
      %p85 = scmp.ne.s32.totalorder %s76, %s77
      %p86 = scmp.eq.s32.totalorder %s24, 0
      %p87 = por %p85, %p86
      %p88 = scmp.ne.s32.totalorder %s76, %s77
      %p89 = scmp.eq.s32.totalorder %s25, 1
      %p90 = por %p88, %p89
      %p92 = scmp.ne.s32.totalorder %s77, %s91
      %p93 = scmp.eq.s32.totalorder %s25, 0
      %p94 = por %p92, %p93
      %s96 = sadd.s32 %s95, 1
      %p99 = scmp.eq.s32.totalorder %s19, 1
      %p100 = scmp.ne.s32.totalorder %s95, %s97
      %p101 = scmp.eq.s32.totalorder %s19, 0
      %p102 = por %p100, %p101
      %p103 = scmp.ne.s32.totalorder %s95, %s97
      %p104 = scmp.eq.s32.totalorder %s24, 1
      %p105 = por %p103, %p104
      %p106 = scmp.ne.s32.totalorder %s97, %s98
      %p107 = scmp.eq.s32.totalorder %s24, 0
      %p108 = por %p106, %p107
      %p109 = scmp.ne.s32.totalorder %s97, %s98
      %p110 = scmp.eq.s32.totalorder %s25, 1
      %p111 = por %p109, %p110
      %p113 = scmp.ne.s32.totalorder %s98, %s112
      %p114 = scmp.eq.s32.totalorder %s25, 0
      %p115 = por %p113, %p114
      %s117 = sadd.s32 %s116, 1
      %p120 = scmp.eq.s32.totalorder %s19, 1
      %p121 = scmp.ne.s32.totalorder %s116, %s118
      %p122 = scmp.eq.s32.totalorder %s19, 0
      %p123 = por %p121, %p122
      %p124 = scmp.ne.s32.totalorder %s116, %s118
      %p125 = scmp.eq.s32.totalorder %s24, 1
      %p126 = por %p124, %p125
      %p127 = scmp.ne.s32.totalorder %s118, %s119
      %p128 = scmp.eq.s32.totalorder %s24, 0
      %p129 = por %p127, %p128
      %p130 = scmp.ne.s32.totalorder %s118, %s119
      %p131 = scmp.eq.s32.totalorder %s25, 1
      %p132 = por %p130, %p131
      %p134 = scmp.ne.s32.totalorder %s119, %s133
      %p135 = scmp.eq.s32.totalorder %s25, 0
      %p136 = por %p134, %p135
      %s138 = sadd.s32 %s137, 1
      %p141 = scmp.eq.s32.totalorder %s19, 1
      %p142 = scmp.ne.s32.totalorder %s137, %s139
      %p143 = scmp.eq.s32.totalorder %s19, 0
      %p144 = por %p142, %p143
      %p145 = scmp.ne.s32.totalorder %s137, %s139
      %p146 = scmp.eq.s32.totalorder %s24, 1
      %p147 = por %p145, %p146
      %p148 = scmp.ne.s32.totalorder %s139, %s140
      %p149 = scmp.eq.s32.totalorder %s24, 0
      %p150 = por %p148, %p149
      %p151 = scmp.ne.s32.totalorder %s139, %s140
      %p152 = scmp.eq.s32.totalorder %s25, 1
      %p153 = por %p151, %p152
      %p155 = scmp.ne.s32.totalorder %s140, %s154
      %p156 = scmp.eq.s32.totalorder %s25, 0
      %p157 = por %p155, %p156
      %s159 = sadd.s32 %s158, 1
      %p162 = scmp.eq.s32.totalorder %s19, 1
      %p163 = scmp.ne.s32.totalorder %s158, %s160
      %p164 = scmp.eq.s32.totalorder %s19, 0
      %p165 = por %p163, %p164
      %p166 = scmp.ne.s32.totalorder %s158, %s160
      %p167 = scmp.eq.s32.totalorder %s24, 1
      %p168 = por %p166, %p167
      %p169 = scmp.ne.s32.totalorder %s160, %s161
      %p170 = scmp.eq.s32.totalorder %s24, 0
      %p171 = por %p169, %p170
      %p172 = scmp.ne.s32.totalorder %s160, %s161
      %p173 = scmp.eq.s32.totalorder %s25, 1
      %p174 = por %p172, %p173
      %p176 = scmp.ne.s32.totalorder %s161, %s175
      %p177 = scmp.eq.s32.totalorder %s25, 0
      %p178 = por %p176, %p177
      %s179 = ssub.s32 %s19, %s26
      %p180 = scmp.eq.s32.totalorder %s179, 0
      %s182 = sadd.s32 %s181, 1
      %s183 = scalar_select %p180, %s181, %s182
      %p186 = pneg %p180
      %p187 = scmp.eq.s32.totalorder %s19, 1
      %p188 = por %p186, %p187
      %p189 = scmp.ne.s32.totalorder %s181, %s184
      %p190 = scmp.eq.s32.totalorder %s19, 0
      %p191 = por %p189, %p190
      %p192 = scmp.ne.s32.totalorder %s181, %s184
      %p193 = scmp.eq.s32.totalorder %s24, 1
      %p194 = por %p192, %p193
      %p195 = scmp.ne.s32.totalorder %s184, %s185
      %p196 = scmp.eq.s32.totalorder %s24, 0
      %p197 = por %p195, %p196
      %p198 = scmp.ne.s32.totalorder %s184, %s185
      %p199 = scmp.eq.s32.totalorder %s25, 1
      %p200 = por %p198, %p199
      %p202 = scmp.ne.s32.totalorder %s185, %s201
      %p203 = scmp.eq.s32.totalorder %s25, 0
      %p204 = por %p202, %p203
      %p205 = scmp.le.s32.totalorder 1, %s19
      %p206 = scmp.lt.s32.totalorder %s19, 3
      %p207 = pnand %p205, %p206
      %p208 = pneg %p207
      // Predicated region
      $region9: #{conv_encoder_forward.2} parent=5 // pred_check
        _
      $region10: #{conv_encoder_forward.2} parent=5 // pred_check_branch
        %210 = sbr.rel (%p207) target = $region12
      $region11: #{conv_encoder_forward.2} parent=5 // pred_region
        %s211 = ssub.s32 %s19, 1
        // Predicated region
        $region13: #{conv_encoder_forward.2} parent=11 // pred_check
          %p212 = pneg %p66
        $region14: #{conv_encoder_forward.2} parent=11 // pred_check_branch
          %214 = sbr.rel (%p212) target = $region16
        $region15: #{conv_encoder_forward.2} parent=11 // pred_region
          %s216 = ssub.s32 3072, 3072
          %217 = vsyncadd [#allocation8], %s216
          %s218 = sshll.u32 [#allocation7], 4
          %s219 = int_to_ptr.vmem [resolvable:$true] %s218
          %224 = dma.hbm_to_vmem [thread:$0]  %s1, 3072, %s219, [#allocation8], 512, 512, 32
        $region16: #{conv_encoder_forward.2} parent=11 // pred_fallthru
          _
        // Predicated region
        $region17: #{conv_encoder_forward.2} parent=11 // pred_check
          %p225 = pneg %p87
        $region18: #{conv_encoder_forward.2} parent=11 // pred_check_branch
          %227 = sbr.rel (%p225) target = $region20
        $region19: #{conv_encoder_forward.2} parent=11 // pred_region
          %s229 = ssub.s32 64, 64
          %230 = vsyncadd [#allocation8], %s229
          %s232 = sshll.u32 [#allocation9], 4
          %s233 = int_to_ptr.vmem [resolvable:$true] %s232
          %235 = dma.hbm_to_vmem [thread:$0]  %s2, 64, %s233, [#allocation8]
        $region20: #{conv_encoder_forward.2} parent=11 // pred_fallthru
          _
        // Predicated region
        $region21: #{conv_encoder_forward.2} parent=11 // pred_check
          %p236 = pneg %p108
        $region22: #{conv_encoder_forward.2} parent=11 // pred_check_branch
          %238 = sbr.rel (%p236) target = $region24
        $region23: #{conv_encoder_forward.2} parent=11 // pred_region
          %s240 = ssub.s32 49152, 49152
          %241 = vsyncadd [#allocation11], %s240
          %s242 = sshll.u32 [#allocation10], 4
          %s243 = int_to_ptr.vmem [resolvable:$true] %s242
          %248 = dma.hbm_to_vmem [thread:$0]  %s3, 49152, %s243, [#allocation11], 256, 256, 16
        $region24: #{conv_encoder_forward.2} parent=11 // pred_fallthru
          _
        // Predicated region
        $region25: #{conv_encoder_forward.2} parent=11 // pred_check
          %p249 = pneg %p129
        $region26: #{conv_encoder_forward.2} parent=11 // pred_check_branch
          %251 = sbr.rel (%p249) target = $region28
        $region27: #{conv_encoder_forward.2} parent=11 // pred_region
          %s253 = ssub.s32 32, 32
          %254 = vsyncadd [#allocation11], %s253
          %s256 = sshll.u32 [#allocation12], 4
          %s257 = int_to_ptr.vmem [resolvable:$true] %s256
          %259 = dma.hbm_to_vmem [thread:$0]  %s4, 32, %s257, [#allocation11]
        $region28: #{conv_encoder_forward.2} parent=11 // pred_fallthru
          _
        // Predicated region
        $region29: #{conv_encoder_forward.2} parent=11 // pred_check
          %p260 = pneg %p150
        $region30: #{conv_encoder_forward.2} parent=11 // pred_check_branch
          %262 = sbr.rel (%p260) target = $region32
        $region31: #{conv_encoder_forward.2} parent=11 // pred_region
          %s264 = ssub.s32 12288, 12288
          %265 = vsyncadd [#allocation14], %s264
          %s266 = sshll.u32 [#allocation13], 4
          %s267 = int_to_ptr.vmem [resolvable:$true] %s266
          %272 = dma.hbm_to_vmem [thread:$0]  %s5, 12288, %s267, [#allocation14], 128, 128, 8
        $region32: #{conv_encoder_forward.2} parent=11 // pred_fallthru
          _
        // Predicated region
        $region33: #{conv_encoder_forward.2} parent=11 // pred_check
          %p273 = pneg %p171
        $region34: #{conv_encoder_forward.2} parent=11 // pred_check_branch
          %275 = sbr.rel (%p273) target = $region36
        $region35: #{conv_encoder_forward.2} parent=11 // pred_region
          %s277 = ssub.s32 16, 16
          %278 = vsyncadd [#allocation14], %s277
          %s280 = sshll.u32 [#allocation15], 4
          %s281 = int_to_ptr.vmem [resolvable:$true] %s280
          %283 = dma.hbm_to_vmem [thread:$0]  %s6, 16, %s281, [#allocation14]
        $region36: #{conv_encoder_forward.2} parent=11 // pred_fallthru
          _
      $region12: #{conv_encoder_forward.2} parent=5 // pred_fallthru
        _
      %p284 = scmp.lt.s32.totalorder %s19, 2
      // Predicated region
      $region37: #{conv_encoder_forward.2} parent=5 // pred_check
        %p285 = pneg %p284
      $region38: #{conv_encoder_forward.2} parent=5 // pred_check_branch
        %287 = sbr.rel (%p285) target = $region40
      $region39: #{conv_encoder_forward.2} parent=5 // pred_region
        // Predicated region
        $region41: #{conv_encoder_forward.2} parent=39 // pred_check
          %p288 = pneg %p39
        $region42: #{conv_encoder_forward.2} parent=39 // pred_check_branch
          %290 = sbr.rel (%p288) target = $region44
        $region43: #{conv_encoder_forward.2} parent=39 // pred_region
          %s291 = sand.u32 %s29, 1
          %s292 = scalar_lea.sflag [#allocation6], %s291
          %s293 = sand.u32 %s29, 1
          %s294 = smul.addr %s293, 16
          %s295 = scalar_lea.vmem [#allocation5], %s294
          %s297 = ssub.s32 256, 256
          %298 = vsyncadd %s292, %s297
          %s299 = smul.addr %s19, 2
          %s300 = smul.addr %s299, 128
          %s301 = scalar_lea.hbm %s0, %s300
          %s302 = sshll.u32 %s295, 4
          %s303 = int_to_ptr.vmem [resolvable:$true] %s302
          %308 = dma.hbm_to_vmem [thread:$0]  %s301, 256, %s303, %s292, 128, 128, 8
        $region44: #{conv_encoder_forward.2} parent=39 // pred_fallthru
          _
      $region40: #{conv_encoder_forward.2} parent=5 // pred_fallthru
        _
      %p309 = scmp.le.s32.totalorder 1, %s19
      %p310 = scmp.lt.s32.totalorder %s19, 3
      %p311 = pnand %p309, %p310
      %p312 = pneg %p311
      // Predicated region
      $region45: #{conv_encoder_forward.2} parent=5 // pred_check
        _
      $region46: #{conv_encoder_forward.2} parent=5 // pred_check_branch
        %314 = sbr.rel (%p311) target = $region48
      $region47: #{conv_encoder_forward.2} parent=5 // pred_region
        %s315 = ssub.s32 %s19, 1
        %s316 = sand.u32 %s32, 1
        %s317 = scalar_lea.sflag [#allocation6], %s316
        %s318 = sand.u32 %s32, 1
        %s319 = smul.addr %s318, 16
        %s320 = scalar_lea.vmem [#allocation5], %s319
        // Predicated region
        $region49: #{conv_encoder_forward.2} parent=47 // pred_check
          %p321 = pneg %p45
        $region50: #{conv_encoder_forward.2} parent=47 // pred_check_branch
          %323 = sbr.rel (%p321) target = $region52
        $region51: #{conv_encoder_forward.2} parent=47 // pred_region
          %324 = dma.done %s317, 256
        $region52: #{conv_encoder_forward.2} parent=47 // pred_fallthru
          _
        // Predicated region
        $region53: #{conv_encoder_forward.2} parent=47 // pred_check
          %p325 = pneg %p66
        $region54: #{conv_encoder_forward.2} parent=47 // pred_check_branch
          %327 = sbr.rel (%p325) target = $region56
        $region55: #{conv_encoder_forward.2} parent=47 // pred_region
          %328 = dma.done [#allocation8], 3072
        $region56: #{conv_encoder_forward.2} parent=47 // pred_fallthru
          _
        // Predicated region
        $region57: #{conv_encoder_forward.2} parent=47 // pred_check
          %p329 = pneg %p87
        $region58: #{conv_encoder_forward.2} parent=47 // pred_check_branch
          %331 = sbr.rel (%p329) target = $region60
        $region59: #{conv_encoder_forward.2} parent=47 // pred_region
          %332 = dma.done [#allocation8], 64
        $region60: #{conv_encoder_forward.2} parent=47 // pred_fallthru
          _
        // Predicated region
        $region61: #{conv_encoder_forward.2} parent=47 // pred_check
          %p333 = pneg %p108
        $region62: #{conv_encoder_forward.2} parent=47 // pred_check_branch
          %335 = sbr.rel (%p333) target = $region64
        $region63: #{conv_encoder_forward.2} parent=47 // pred_region
          %336 = dma.done [#allocation11], 49152
        $region64: #{conv_encoder_forward.2} parent=47 // pred_fallthru
          _
        // Predicated region
        $region65: #{conv_encoder_forward.2} parent=47 // pred_check
          %p337 = pneg %p129
        $region66: #{conv_encoder_forward.2} parent=47 // pred_check_branch
          %339 = sbr.rel (%p337) target = $region68
        $region67: #{conv_encoder_forward.2} parent=47 // pred_region
          %340 = dma.done [#allocation11], 32
        $region68: #{conv_encoder_forward.2} parent=47 // pred_fallthru
          _
        // Predicated region
        $region69: #{conv_encoder_forward.2} parent=47 // pred_check
          %p341 = pneg %p150
        $region70: #{conv_encoder_forward.2} parent=47 // pred_check_branch
          %343 = sbr.rel (%p341) target = $region72
        $region71: #{conv_encoder_forward.2} parent=47 // pred_region
          %344 = dma.done [#allocation14], 12288
        $region72: #{conv_encoder_forward.2} parent=47 // pred_fallthru
          _
        // Predicated region
        $region73: #{conv_encoder_forward.2} parent=47 // pred_check
          %p345 = pneg %p171
        $region74: #{conv_encoder_forward.2} parent=47 // pred_check_branch
          %347 = sbr.rel (%p345) target = $region76
        $region75: #{conv_encoder_forward.2} parent=47 // pred_region
          %348 = dma.done [#allocation14], 16
        $region76: #{conv_encoder_forward.2} parent=47 // pred_fallthru
          _
        %s349 = sand.u32 %s32, 1
        %s350 = scalar_lea.sflag [#allocation6], %s349
        %s351 = sand.u32 %s32, 1
        %s352 = smul.addr %s351, 16
        %s353 = scalar_lea.vmem [#allocation5], %s352
        %p354 = pneg %p45
        %p355 = pneg %p42
        %p356 = pneg %p66
        %p357 = pneg %p63
        %p358 = pneg %p87
        %p359 = pneg %p84
        %p360 = pneg %p108
        %p361 = pneg %p105
        %p362 = pneg %p129
        %p363 = pneg %p126
        %p364 = pneg %p150
        %p365 = pneg %p147
        %p366 = pneg %p171
        %p367 = pneg %p168
        %p368 = pneg %p197
        %p369 = pneg %p194
        %p370 = scmp.lt.s32.totalorder %s24, 1
        %s371 = scalar_select %p370, %s24, 1
        %s372 = smul.addr %s371, 2
        %s373 = smul.addr %s372, 8
        %s374 = scalar_lea.vmem %s7, %s373
        %p375 = scmp.lt.s32.totalorder %s24, 1
        %s376 = scalar_select %p375, %s24, 1
        %s377 = smul.addr %s376, 2
        %s378 = smul.addr %s377, 8
        %s379 = scalar_lea.vmem %s7, %s378
        %vm380 = vcmask 130048
        %381 = vst.msk [vmem:[#allocation2] sm:$0xff] %vm380, 0.0
        %382 = vst.msk [vmem:[#allocation2 + $0x8] sm:$0xff] %vm380, 0.0
        %vm383 = vcmask 123904
        %384 = vst.msk [vmem:[#allocation2 + $0x10] sm:$0x3] %vm383, 0.0
        %v385 = vld [vmem:[%s320] sm:$0xff]
        %v386 = vld [vmem:[%s320 + $0x8] sm:$0xff]
        %387 = vst.msk [vmem:[#allocation2 + $0x1] sm:$0xff] %vm380, %v385
        %388 = vst.msk [vmem:[#allocation2 + $0x9] sm:$0xff] %vm380, %v386
        %v389 = vld [vmem:[#allocation2] sm:$0xff]
        %v390 = vld [vmem:[#allocation2 + $0x8] sm:$0xff]
        %v391 = vld [vmem:[#allocation7] sm:$0xff]
        %v392 = vld [vmem:[#allocation7 + $0x8] sm:$0xff]
        %v393 = vld [vmem:[#allocation7 + $0x10] sm:$0xff]
        %v394 = vld [vmem:[#allocation7 + $0x18] sm:$0xff]
        %v395 = vld [vmem:[#allocation7 + $0x20] sm:$0xff]
        %v396 = vld [vmem:[#allocation7 + $0x28] sm:$0xff]
        %v397 = vld [vmem:[#allocation7 + $0x30] sm:$0xff]
        %v398 = vld [vmem:[#allocation7 + $0x38] sm:$0xff]
        %v399 = vld [vmem:[#allocation2 + $0x1] sm:$0xff]
        %v400 = vld [vmem:[#allocation2 + $0x9] sm:$0xff]
        %s401 = scalar_lea.vmem [#allocation7], 64
        %v402 = vld [vmem:[%s401] sm:$0xff]
        %v403 = vld [vmem:[%s401 + $0x8] sm:$0xff]
        %v404 = vld [vmem:[%s401 + $0x10] sm:$0xff]
        %v405 = vld [vmem:[%s401 + $0x18] sm:$0xff]
        %v406 = vld [vmem:[%s401 + $0x20] sm:$0xff]
        %v407 = vld [vmem:[%s401 + $0x28] sm:$0xff]
        %v408 = vld [vmem:[%s401 + $0x30] sm:$0xff]
        %v409 = vld [vmem:[%s401 + $0x38] sm:$0xff]
        %v411 = vsel %vm380, %v399, 0
        %v414 = vsel %vm380, %v400, 0
        %416 = vmatprep.subr.mxu0 0.0
        %417 = vmatpush1.msra.mxu0 0.0
        %418 = vmatprep.subr.mxu0 0.0
        %419 = vmatpush1.msra.mxu0 0.0
        %420 = vmatprep.subr.mxu0 0.0
        %421 = vmatpush1.msra.mxu0 0.0
        %422 = vmatprep.subr.mxu0 0.0
        %423 = vmatpush1.msra.mxu0 0.0
        %424 = vmatprep.subr.mxu0 0.0
        %425 = vmatpush1.msra.mxu0 0.0
        %426 = vmatprep.subr.mxu0 0.0
        %427 = vmatpush1.msra.mxu0 0.0
        %428 = vmatprep.subr.mxu0 0.0
        %429 = vmatpush1.msra.mxu0 0.0
        %430 = vmatprep.subr.mxu0 0.0
        %431 = vmatpush1.msra.mxu0 0.0
        %432 = vmatprep.subr.mxu0 0.0
        %433 = vmatpush1.msra.mxu0 0.0
        %434 = vmatprep.subr.mxu0 0.0
        %435 = vmatpush1.msra.mxu0 0.0
        %436 = vmatprep.subr.mxu0 0.0
        %437 = vmatpush1.msra.mxu0 0.0
        %438 = vmatprep.subr.mxu0 0.0
        %439 = vmatpush1.msra.mxu0 0.0
        %440 = vmatprep.subr.mxu0 0.0
        %441 = vmatpush1.msra.mxu0 0.0
        %442 = vmatprep.subr.mxu0 0.0
        %443 = vmatpush1.msra.mxu0 0.0
        %444 = vmatprep.subr.mxu0 %v407
        %445 = vmatpush1.msra.mxu0 %v406
        %446 = vmatprep.subr.mxu0 %v403
        %447 = vmatpush1.msra.mxu0 %v402
        %448 = vmatprep.subr.mxu0 0.0
        %449 = vmatpush2.msra.mxu0 0.0
        %450 = vmatprep.subr.mxu0 0.0
        %451 = vmatpush2.msra.mxu0 0.0
        %452 = vmatprep.subr.mxu0 0.0
        %453 = vmatpush2.msra.mxu0 0.0
        %454 = vmatprep.subr.mxu0 0.0
        %455 = vmatpush2.msra.mxu0 0.0
        %456 = vmatprep.subr.mxu0 0.0
        %457 = vmatpush2.msra.mxu0 0.0
        %458 = vmatprep.subr.mxu0 0.0
        %459 = vmatpush2.msra.mxu0 0.0
        %460 = vmatprep.subr.mxu0 0.0
        %461 = vmatpush2.msra.mxu0 0.0
        %462 = vmatprep.subr.mxu0 0.0
        %463 = vmatpush2.msra.mxu0 0.0
        %464 = vmatprep.subr.mxu0 0.0
        %465 = vmatpush2.msra.mxu0 0.0
        %466 = vmatprep.subr.mxu0 0.0
        %467 = vmatpush2.msra.mxu0 0.0
        %468 = vmatprep.subr.mxu0 0.0
        %469 = vmatpush2.msra.mxu0 0.0
        %470 = vmatprep.subr.mxu0 0.0
        %471 = vmatpush2.msra.mxu0 0.0
        %472 = vmatprep.subr.mxu0 0.0
        %473 = vmatpush2.msra.mxu0 0.0
        %474 = vmatprep.subr.mxu0 0.0
        %475 = vmatpush2.msra.mxu0 0.0
        %476 = vmatprep.subr.mxu0 0.0
        %477 = vmatpush2.msra.mxu0 0.0
        %478 = vmatprep.subr.mxu0 0.0
        %479 = vmatpush2.msra.mxu0 0.0
        %480 = vmatprep.mubr.f32.mxu0 0.0
        %481 = vmatmul.mubr.f32.gmra.mxu0 %v411
        %v482 = vpop.f32.mrf.mxu0
        %v483 = vadd.f32 0.0, %v482
        %v484 = vpop.f32.mrf.mxu0
        %v485 = vadd.f32 0.0, %v484
        %486 = vmatprep.mubr.f32.mxu0 0.0
        %487 = vmatmul.mubr.f32.gmra.mxu0 %v414
        %v488 = vpop.f32.mrf.mxu0
        %v489 = vadd.f32 0.0, %v488
        %v490 = vpop.f32.mrf.mxu0
        %v491 = vadd.f32 0.0, %v490
        %492 = vdwg.mxu0
        %493 = vmatprep.subr.mxu0 0.0
        %494 = vmatpush1.msra.mxu0 0.0
        %495 = vmatprep.subr.mxu0 0.0
        %496 = vmatpush1.msra.mxu0 0.0
        %497 = vmatprep.subr.mxu0 0.0
        %498 = vmatpush1.msra.mxu0 0.0
        %499 = vmatprep.subr.mxu0 0.0
        %500 = vmatpush1.msra.mxu0 0.0
        %501 = vmatprep.subr.mxu0 0.0
        %502 = vmatpush1.msra.mxu0 0.0
        %503 = vmatprep.subr.mxu0 0.0
        %504 = vmatpush1.msra.mxu0 0.0
        %505 = vmatprep.subr.mxu0 0.0
        %506 = vmatpush1.msra.mxu0 0.0
        %507 = vmatprep.subr.mxu0 0.0
        %508 = vmatpush1.msra.mxu0 0.0
        %509 = vmatprep.subr.mxu0 0.0
        %510 = vmatpush1.msra.mxu0 0.0
        %511 = vmatprep.subr.mxu0 0.0
        %512 = vmatpush1.msra.mxu0 0.0
        %513 = vmatprep.subr.mxu0 0.0
        %514 = vmatpush1.msra.mxu0 0.0
        %515 = vmatprep.subr.mxu0 0.0
        %516 = vmatpush1.msra.mxu0 0.0
        %517 = vmatprep.subr.mxu0 0.0
        %518 = vmatpush1.msra.mxu0 0.0
        %519 = vmatprep.subr.mxu0 0.0
        %520 = vmatpush1.msra.mxu0 0.0
        %521 = vmatprep.subr.mxu0 %v409
        %522 = vmatpush1.msra.mxu0 %v408
        %523 = vmatprep.subr.mxu0 %v405
        %524 = vmatpush1.msra.mxu0 %v404
        %525 = vmatprep.subr.mxu0 0.0
        %526 = vmatpush2.msra.mxu0 0.0
        %527 = vmatprep.subr.mxu0 0.0
        %528 = vmatpush2.msra.mxu0 0.0
        %529 = vmatprep.subr.mxu0 0.0
        %530 = vmatpush2.msra.mxu0 0.0
        %531 = vmatprep.subr.mxu0 0.0
        %532 = vmatpush2.msra.mxu0 0.0
        %533 = vmatprep.subr.mxu0 0.0
        %534 = vmatpush2.msra.mxu0 0.0
        %535 = vmatprep.subr.mxu0 0.0
        %536 = vmatpush2.msra.mxu0 0.0
        %537 = vmatprep.subr.mxu0 0.0
        %538 = vmatpush2.msra.mxu0 0.0
        %539 = vmatprep.subr.mxu0 0.0
        %540 = vmatpush2.msra.mxu0 0.0
        %541 = vmatprep.subr.mxu0 0.0
        %542 = vmatpush2.msra.mxu0 0.0
        %543 = vmatprep.subr.mxu0 0.0
        %544 = vmatpush2.msra.mxu0 0.0
        %545 = vmatprep.subr.mxu0 0.0
        %546 = vmatpush2.msra.mxu0 0.0
        %547 = vmatprep.subr.mxu0 0.0
        %548 = vmatpush2.msra.mxu0 0.0
        %549 = vmatprep.subr.mxu0 0.0
        %550 = vmatpush2.msra.mxu0 0.0
        %551 = vmatprep.subr.mxu0 0.0
        %552 = vmatpush2.msra.mxu0 0.0
        %553 = vmatprep.subr.mxu0 0.0
        %554 = vmatpush2.msra.mxu0 0.0
        %555 = vmatprep.subr.mxu0 0.0
        %556 = vmatpush2.msra.mxu0 0.0
        %557 = vmatprep.mubr.f32.mxu0 0.0
        %558 = vmatmul.mubr.f32.gmra.mxu0 %v411
        %v559 = vpop.f32.mrf.mxu0
        %v560 = vadd.f32 0.0, %v559
        %v561 = vpop.f32.mrf.mxu0
        %v562 = vadd.f32 0.0, %v561
        %563 = vmatprep.mubr.f32.mxu0 0.0
        %564 = vmatmul.mubr.f32.gmra.mxu0 %v414
        %v565 = vpop.f32.mrf.mxu0
        %v566 = vadd.f32 0.0, %v565
        %v567 = vpop.f32.mrf.mxu0
        %v568 = vadd.f32 0.0, %v567
        %569 = vdwg.mxu0
        %v571 = vsel %vm380, %v389, 0
        %v574 = vsel %vm380, %v390, 0
        %576 = vmatprep.subr.mxu0 0.0
        %577 = vmatpush1.msra.mxu0 0.0
        %578 = vmatprep.subr.mxu0 0.0
        %579 = vmatpush1.msra.mxu0 0.0
        %580 = vmatprep.subr.mxu0 0.0
        %581 = vmatpush1.msra.mxu0 0.0
        %582 = vmatprep.subr.mxu0 0.0
        %583 = vmatpush1.msra.mxu0 0.0
        %584 = vmatprep.subr.mxu0 0.0
        %585 = vmatpush1.msra.mxu0 0.0
        %586 = vmatprep.subr.mxu0 0.0
        %587 = vmatpush1.msra.mxu0 0.0
        %588 = vmatprep.subr.mxu0 0.0
        %589 = vmatpush1.msra.mxu0 0.0
        %590 = vmatprep.subr.mxu0 0.0
        %591 = vmatpush1.msra.mxu0 0.0
        %592 = vmatprep.subr.mxu0 0.0
        %593 = vmatpush1.msra.mxu0 0.0
        %594 = vmatprep.subr.mxu0 0.0
        %595 = vmatpush1.msra.mxu0 0.0
        %596 = vmatprep.subr.mxu0 0.0
        %597 = vmatpush1.msra.mxu0 0.0
        %598 = vmatprep.subr.mxu0 0.0
        %599 = vmatpush1.msra.mxu0 0.0
        %600 = vmatprep.subr.mxu0 0.0
        %601 = vmatpush1.msra.mxu0 0.0
        %602 = vmatprep.subr.mxu0 0.0
        %603 = vmatpush1.msra.mxu0 0.0
        %604 = vmatprep.subr.mxu0 %v396
        %605 = vmatpush1.msra.mxu0 %v395
        %606 = vmatprep.subr.mxu0 %v392
        %607 = vmatpush1.msra.mxu0 %v391
        %608 = vmatprep.subr.mxu0 0.0
        %609 = vmatpush2.msra.mxu0 0.0
        %610 = vmatprep.subr.mxu0 0.0
        %611 = vmatpush2.msra.mxu0 0.0
        %612 = vmatprep.subr.mxu0 0.0
        %613 = vmatpush2.msra.mxu0 0.0
        %614 = vmatprep.subr.mxu0 0.0
        %615 = vmatpush2.msra.mxu0 0.0
        %616 = vmatprep.subr.mxu0 0.0
        %617 = vmatpush2.msra.mxu0 0.0
        %618 = vmatprep.subr.mxu0 0.0
        %619 = vmatpush2.msra.mxu0 0.0
        %620 = vmatprep.subr.mxu0 0.0
        %621 = vmatpush2.msra.mxu0 0.0
        %622 = vmatprep.subr.mxu0 0.0
        %623 = vmatpush2.msra.mxu0 0.0
        %624 = vmatprep.subr.mxu0 0.0
        %625 = vmatpush2.msra.mxu0 0.0
        %626 = vmatprep.subr.mxu0 0.0
        %627 = vmatpush2.msra.mxu0 0.0
        %628 = vmatprep.subr.mxu0 0.0
        %629 = vmatpush2.msra.mxu0 0.0
        %630 = vmatprep.subr.mxu0 0.0
        %631 = vmatpush2.msra.mxu0 0.0
        %632 = vmatprep.subr.mxu0 0.0
        %633 = vmatpush2.msra.mxu0 0.0
        %634 = vmatprep.subr.mxu0 0.0
        %635 = vmatpush2.msra.mxu0 0.0
        %636 = vmatprep.subr.mxu0 0.0
        %637 = vmatpush2.msra.mxu0 0.0
        %638 = vmatprep.subr.mxu0 0.0
        %639 = vmatpush2.msra.mxu0 0.0
        %640 = vmatprep.mubr.f32.mxu0 0.0
        %641 = vmatmul.mubr.f32.gmra.mxu0 %v571
        %v642 = vpop.f32.mrf.mxu0
        %v643 = vadd.f32 %v483, %v642
        %v644 = vpop.f32.mrf.mxu0
        %v645 = vadd.f32 %v485, %v644
        %646 = vmatprep.mubr.f32.mxu0 0.0
        %647 = vmatmul.mubr.f32.gmra.mxu0 %v574
        %v648 = vpop.f32.mrf.mxu0
        %v649 = vadd.f32 %v489, %v648
        %v650 = vpop.f32.mrf.mxu0
        %v651 = vadd.f32 %v491, %v650
        %652 = vdwg.mxu0
        %653 = vmatprep.subr.mxu0 0.0
        %654 = vmatpush1.msra.mxu0 0.0
        %655 = vmatprep.subr.mxu0 0.0
        %656 = vmatpush1.msra.mxu0 0.0
        %657 = vmatprep.subr.mxu0 0.0
        %658 = vmatpush1.msra.mxu0 0.0
        %659 = vmatprep.subr.mxu0 0.0
        %660 = vmatpush1.msra.mxu0 0.0
        %661 = vmatprep.subr.mxu0 0.0
        %662 = vmatpush1.msra.mxu0 0.0
        %663 = vmatprep.subr.mxu0 0.0
        %664 = vmatpush1.msra.mxu0 0.0
        %665 = vmatprep.subr.mxu0 0.0
        %666 = vmatpush1.msra.mxu0 0.0
        %667 = vmatprep.subr.mxu0 0.0
        %668 = vmatpush1.msra.mxu0 0.0
        %669 = vmatprep.subr.mxu0 0.0
        %670 = vmatpush1.msra.mxu0 0.0
        %671 = vmatprep.subr.mxu0 0.0
        %672 = vmatpush1.msra.mxu0 0.0
        %673 = vmatprep.subr.mxu0 0.0
        %674 = vmatpush1.msra.mxu0 0.0
        %675 = vmatprep.subr.mxu0 0.0
        %676 = vmatpush1.msra.mxu0 0.0
        %677 = vmatprep.subr.mxu0 0.0
        %678 = vmatpush1.msra.mxu0 0.0
        %679 = vmatprep.subr.mxu0 0.0
        %680 = vmatpush1.msra.mxu0 0.0
        %681 = vmatprep.subr.mxu0 %v398
        %682 = vmatpush1.msra.mxu0 %v397
        %683 = vmatprep.subr.mxu0 %v394
        %684 = vmatpush1.msra.mxu0 %v393
        %685 = vmatprep.subr.mxu0 0.0
        %686 = vmatpush2.msra.mxu0 0.0
        %687 = vmatprep.subr.mxu0 0.0
        %688 = vmatpush2.msra.mxu0 0.0
        %689 = vmatprep.subr.mxu0 0.0
        %690 = vmatpush2.msra.mxu0 0.0
        %691 = vmatprep.subr.mxu0 0.0
        %692 = vmatpush2.msra.mxu0 0.0
        %693 = vmatprep.subr.mxu0 0.0
        %694 = vmatpush2.msra.mxu0 0.0
        %695 = vmatprep.subr.mxu0 0.0
        %696 = vmatpush2.msra.mxu0 0.0
        %697 = vmatprep.subr.mxu0 0.0
        %698 = vmatpush2.msra.mxu0 0.0
        %699 = vmatprep.subr.mxu0 0.0
        %700 = vmatpush2.msra.mxu0 0.0
        %701 = vmatprep.subr.mxu0 0.0
        %702 = vmatpush2.msra.mxu0 0.0
        %703 = vmatprep.subr.mxu0 0.0
        %704 = vmatpush2.msra.mxu0 0.0
        %705 = vmatprep.subr.mxu0 0.0
        %706 = vmatpush2.msra.mxu0 0.0
        %707 = vmatprep.subr.mxu0 0.0
        %708 = vmatpush2.msra.mxu0 0.0
        %709 = vmatprep.subr.mxu0 0.0
        %710 = vmatpush2.msra.mxu0 0.0
        %711 = vmatprep.subr.mxu0 0.0
        %712 = vmatpush2.msra.mxu0 0.0
        %713 = vmatprep.subr.mxu0 0.0
        %714 = vmatpush2.msra.mxu0 0.0
        %715 = vmatprep.subr.mxu0 0.0
        %716 = vmatpush2.msra.mxu0 0.0
        %717 = vmatprep.mubr.f32.mxu0 0.0
        %718 = vmatmul.mubr.f32.gmra.mxu0 %v571
        %v719 = vpop.f32.mrf.mxu0
        %v720 = vadd.f32 %v560, %v719
        %v721 = vpop.f32.mrf.mxu0
        %v722 = vadd.f32 %v562, %v721
        %723 = vmatprep.mubr.f32.mxu0 0.0
        %724 = vmatmul.mubr.f32.gmra.mxu0 %v574
        %v725 = vpop.f32.mrf.mxu0
        %v726 = vadd.f32 %v566, %v725
        %v727 = vpop.f32.mrf.mxu0
        %v728 = vadd.f32 %v568, %v727
        %729 = vdwg.mxu0
        %v730 = vld [vmem:[#allocation2 + $0x2] sm:$0xff]
        %v731 = vld [vmem:[#allocation2 + $0xa] sm:$0xff]
        %s732 = scalar_lea.vmem [#allocation7], 128
        %v733 = vld [vmem:[%s732] sm:$0xff]
        %v734 = vld [vmem:[%s732 + $0x8] sm:$0xff]
        %v735 = vld [vmem:[%s732 + $0x10] sm:$0xff]
        %v736 = vld [vmem:[%s732 + $0x18] sm:$0xff]
        %v737 = vld [vmem:[%s732 + $0x20] sm:$0xff]
        %v738 = vld [vmem:[%s732 + $0x28] sm:$0xff]
        %v739 = vld [vmem:[%s732 + $0x30] sm:$0xff]
        %v740 = vld [vmem:[%s732 + $0x38] sm:$0xff]
        %v742 = vsel %vm380, %v730, 0
        %v745 = vsel %vm380, %v731, 0
        %747 = vmatprep.subr.mxu0 0.0
        %748 = vmatpush1.msra.mxu0 0.0
        %749 = vmatprep.subr.mxu0 0.0
        %750 = vmatpush1.msra.mxu0 0.0
        %751 = vmatprep.subr.mxu0 0.0
        %752 = vmatpush1.msra.mxu0 0.0
        %753 = vmatprep.subr.mxu0 0.0
        %754 = vmatpush1.msra.mxu0 0.0
        %755 = vmatprep.subr.mxu0 0.0
        %756 = vmatpush1.msra.mxu0 0.0
        %757 = vmatprep.subr.mxu0 0.0
        %758 = vmatpush1.msra.mxu0 0.0
        %759 = vmatprep.subr.mxu0 0.0
        %760 = vmatpush1.msra.mxu0 0.0
        %761 = vmatprep.subr.mxu0 0.0
        %762 = vmatpush1.msra.mxu0 0.0
        %763 = vmatprep.subr.mxu0 0.0
        %764 = vmatpush1.msra.mxu0 0.0
        %765 = vmatprep.subr.mxu0 0.0
        %766 = vmatpush1.msra.mxu0 0.0
        %767 = vmatprep.subr.mxu0 0.0
        %768 = vmatpush1.msra.mxu0 0.0
        %769 = vmatprep.subr.mxu0 0.0
        %770 = vmatpush1.msra.mxu0 0.0
        %771 = vmatprep.subr.mxu0 0.0
        %772 = vmatpush1.msra.mxu0 0.0
        %773 = vmatprep.subr.mxu0 0.0
        %774 = vmatpush1.msra.mxu0 0.0
        %775 = vmatprep.subr.mxu0 %v738
        %776 = vmatpush1.msra.mxu0 %v737
        %777 = vmatprep.subr.mxu0 %v734
        %778 = vmatpush1.msra.mxu0 %v733
        %779 = vmatprep.subr.mxu0 0.0
        %780 = vmatpush2.msra.mxu0 0.0
        %781 = vmatprep.subr.mxu0 0.0
        %782 = vmatpush2.msra.mxu0 0.0
        %783 = vmatprep.subr.mxu0 0.0
        %784 = vmatpush2.msra.mxu0 0.0
        %785 = vmatprep.subr.mxu0 0.0
        %786 = vmatpush2.msra.mxu0 0.0
        %787 = vmatprep.subr.mxu0 0.0
        %788 = vmatpush2.msra.mxu0 0.0
        %789 = vmatprep.subr.mxu0 0.0
        %790 = vmatpush2.msra.mxu0 0.0
        %791 = vmatprep.subr.mxu0 0.0
        %792 = vmatpush2.msra.mxu0 0.0
        %793 = vmatprep.subr.mxu0 0.0
        %794 = vmatpush2.msra.mxu0 0.0
        %795 = vmatprep.subr.mxu0 0.0
        %796 = vmatpush2.msra.mxu0 0.0
        %797 = vmatprep.subr.mxu0 0.0
        %798 = vmatpush2.msra.mxu0 0.0
        %799 = vmatprep.subr.mxu0 0.0
        %800 = vmatpush2.msra.mxu0 0.0
        %801 = vmatprep.subr.mxu0 0.0
        %802 = vmatpush2.msra.mxu0 0.0
        %803 = vmatprep.subr.mxu0 0.0
        %804 = vmatpush2.msra.mxu0 0.0
        %805 = vmatprep.subr.mxu0 0.0
        %806 = vmatpush2.msra.mxu0 0.0
        %807 = vmatprep.subr.mxu0 0.0
        %808 = vmatpush2.msra.mxu0 0.0
        %809 = vmatprep.subr.mxu0 0.0
        %810 = vmatpush2.msra.mxu0 0.0
        %811 = vmatprep.mubr.f32.mxu0 0.0
        %812 = vmatmul.mubr.f32.gmra.mxu0 %v742
        %v813 = vpop.f32.mrf.mxu0
        %v814 = vadd.f32 0.0, %v813
        %v815 = vpop.f32.mrf.mxu0
        %v816 = vadd.f32 0.0, %v815
        %817 = vmatprep.mubr.f32.mxu0 0.0
        %818 = vmatmul.mubr.f32.gmra.mxu0 %v745
        %v819 = vpop.f32.mrf.mxu0
        %v820 = vadd.f32 0.0, %v819
        %v821 = vpop.f32.mrf.mxu0
        %v822 = vadd.f32 0.0, %v821
        %823 = vdwg.mxu0
        %824 = vmatprep.subr.mxu0 0.0
        %825 = vmatpush1.msra.mxu0 0.0
        %826 = vmatprep.subr.mxu0 0.0
        %827 = vmatpush1.msra.mxu0 0.0
        %828 = vmatprep.subr.mxu0 0.0
        %829 = vmatpush1.msra.mxu0 0.0
        %830 = vmatprep.subr.mxu0 0.0
        %831 = vmatpush1.msra.mxu0 0.0
        %832 = vmatprep.subr.mxu0 0.0
        %833 = vmatpush1.msra.mxu0 0.0
        %834 = vmatprep.subr.mxu0 0.0
        %835 = vmatpush1.msra.mxu0 0.0
        %836 = vmatprep.subr.mxu0 0.0
        %837 = vmatpush1.msra.mxu0 0.0
        %838 = vmatprep.subr.mxu0 0.0
        %839 = vmatpush1.msra.mxu0 0.0
        %840 = vmatprep.subr.mxu0 0.0
        %841 = vmatpush1.msra.mxu0 0.0
        %842 = vmatprep.subr.mxu0 0.0
        %843 = vmatpush1.msra.mxu0 0.0
        %844 = vmatprep.subr.mxu0 0.0
        %845 = vmatpush1.msra.mxu0 0.0
        %846 = vmatprep.subr.mxu0 0.0
        %847 = vmatpush1.msra.mxu0 0.0
        %848 = vmatprep.subr.mxu0 0.0
        %849 = vmatpush1.msra.mxu0 0.0
        %850 = vmatprep.subr.mxu0 0.0
        %851 = vmatpush1.msra.mxu0 0.0
        %852 = vmatprep.subr.mxu0 %v740
        %853 = vmatpush1.msra.mxu0 %v739
        %854 = vmatprep.subr.mxu0 %v736
        %855 = vmatpush1.msra.mxu0 %v735
        %856 = vmatprep.subr.mxu0 0.0
        %857 = vmatpush2.msra.mxu0 0.0
        %858 = vmatprep.subr.mxu0 0.0
        %859 = vmatpush2.msra.mxu0 0.0
        %860 = vmatprep.subr.mxu0 0.0
        %861 = vmatpush2.msra.mxu0 0.0
        %862 = vmatprep.subr.mxu0 0.0
        %863 = vmatpush2.msra.mxu0 0.0
        %864 = vmatprep.subr.mxu0 0.0
        %865 = vmatpush2.msra.mxu0 0.0
        %866 = vmatprep.subr.mxu0 0.0
        %867 = vmatpush2.msra.mxu0 0.0
        %868 = vmatprep.subr.mxu0 0.0
        %869 = vmatpush2.msra.mxu0 0.0
        %870 = vmatprep.subr.mxu0 0.0
        %871 = vmatpush2.msra.mxu0 0.0
        %872 = vmatprep.subr.mxu0 0.0
        %873 = vmatpush2.msra.mxu0 0.0
        %874 = vmatprep.subr.mxu0 0.0
        %875 = vmatpush2.msra.mxu0 0.0
        %876 = vmatprep.subr.mxu0 0.0
        %877 = vmatpush2.msra.mxu0 0.0
        %878 = vmatprep.subr.mxu0 0.0
        %879 = vmatpush2.msra.mxu0 0.0
        %880 = vmatprep.subr.mxu0 0.0
        %881 = vmatpush2.msra.mxu0 0.0
        %882 = vmatprep.subr.mxu0 0.0
        %883 = vmatpush2.msra.mxu0 0.0
        %884 = vmatprep.subr.mxu0 0.0
        %885 = vmatpush2.msra.mxu0 0.0
        %886 = vmatprep.subr.mxu0 0.0
        %887 = vmatpush2.msra.mxu0 0.0
        %888 = vmatprep.mubr.f32.mxu0 0.0
        %889 = vmatmul.mubr.f32.gmra.mxu0 %v742
        %v890 = vpop.f32.mrf.mxu0
        %v891 = vadd.f32 0.0, %v890
        %v892 = vpop.f32.mrf.mxu0
        %v893 = vadd.f32 0.0, %v892
        %894 = vmatprep.mubr.f32.mxu0 0.0
        %895 = vmatmul.mubr.f32.gmra.mxu0 %v745
        %v896 = vpop.f32.mrf.mxu0
        %v897 = vadd.f32 0.0, %v896
        %v898 = vpop.f32.mrf.mxu0
        %v899 = vadd.f32 0.0, %v898
        %900 = vdwg.mxu0
        %v901 = vadd.f32 %v643, %v814
        %v902 = vadd.f32 %v645, %v816
        %v903 = vadd.f32 %v720, %v891
        %v904 = vadd.f32 %v722, %v893
        %v905 = vadd.f32 %v649, %v820
        %v906 = vadd.f32 %v651, %v822
        %v907 = vadd.f32 %v726, %v897
        %v908 = vadd.f32 %v728, %v899
        %v909 = vld [vmem:[#allocation9] sm:$0xf]
        %v911 = vlaneseq
        %v912 = vshrl.u32 %v911, 7
        %v913 = vsub.s32 0, %v912
        %v914 = vrot.slane %v909, %v913
        %v915 = vlaneseq
        %v916 = vshrl.u32 %v915, 7
        %v917 = vsub.s32 1, %v916
        %v918 = vrot.slane %v909, %v917
        %v919 = vlaneseq
        %v920 = vshrl.u32 %v919, 7
        %v921 = vsub.s32 2, %v920
        %v922 = vrot.slane %v909, %v921
        %v923 = vlaneseq
        %v924 = vshrl.u32 %v923, 7
        %v925 = vsub.s32 3, %v924
        %v926 = vrot.slane %v909, %v925
        %v931 = vadd.f32 %v901, %v914
        %v932 = vadd.f32 %v902, %v918
        %v933 = vadd.f32 %v903, %v922
        %v934 = vadd.f32 %v904, %v926
        %v935 = vadd.f32 %v905, %v914
        %v936 = vadd.f32 %v906, %v918
        %v937 = vadd.f32 %v907, %v922
        %v938 = vadd.f32 %v908, %v926
        %v939 = vmax.f32 %v931, 0.0
        %v940 = vmax.f32 %v932, 0.0
        %v941 = vmax.f32 %v933, 0.0
        %v942 = vmax.f32 %v934, 0.0
        %v943 = vmax.f32 %v935, 0.0
        %v944 = vmax.f32 %v936, 0.0
        %v945 = vmax.f32 %v937, 0.0
        %v946 = vmax.f32 %v938, 0.0
        %947 = vst [vmem:[#allocation3] sm:$0xff] 0.0
        %948 = vst [vmem:[#allocation3 + $0x8] sm:$0xff] 0.0
        %949 = vst [vmem:[#allocation3 + $0x10] sm:$0xff] 0.0
        %950 = vst [vmem:[#allocation3 + $0x18] sm:$0xff] 0.0
        %951 = vst [vmem:[#allocation3 + $0x20] sm:$0xff] 0.0
        %952 = vst [vmem:[#allocation3 + $0x28] sm:$0xff] 0.0
        %953 = vst [vmem:[#allocation3 + $0x30] sm:$0xff] 0.0
        %954 = vst [vmem:[#allocation3 + $0x38] sm:$0xff] 0.0
        %955 = vst [vmem:[#allocation3 + $0x40] sm:$0x3] 0.0
        %956 = vst [vmem:[#allocation3 + $0x48] sm:$0x3] 0.0
        %957 = vst [vmem:[#allocation3 + $0x50] sm:$0x3] 0.0
        %958 = vst [vmem:[#allocation3 + $0x58] sm:$0x3] 0.0
        %vm967 = vcmask 1040384
        %v968 = vrot.slane %v939, 7
        %v969 = vrot.slane %v940, 7
        %v970 = vrot.slane %v941, 7
        %v971 = vrot.slane %v942, 7
        %v972 = vrot.slane %v943, 7
        %v973 = vsel %vm967, %v968, %v972
        %v974 = vrot.slane %v944, 7
        %v975 = vsel %vm967, %v969, %v974
        %v976 = vrot.slane %v945, 7
        %v977 = vsel %vm967, %v970, %v976
        %v978 = vrot.slane %v946, 7
        %v979 = vsel %vm967, %v971, %v978
        %992 = vst [vmem:[#allocation3] sm:$0xfe] %v968
        %993 = vst [vmem:[#allocation3 + $0x8] sm:$0xfe] %v969
        %994 = vst [vmem:[#allocation3 + $0x10] sm:$0xfe] %v970
        %995 = vst [vmem:[#allocation3 + $0x18] sm:$0xfe] %v971
        %996 = vst [vmem:[#allocation3 + $0x20] sm:$0xff] %v973
        %997 = vst [vmem:[#allocation3 + $0x28] sm:$0xff] %v975
        %998 = vst [vmem:[#allocation3 + $0x30] sm:$0xff] %v977
        %999 = vst [vmem:[#allocation3 + $0x38] sm:$0xff] %v979
        %1000 = vst [vmem:[#allocation3 + $0x40] sm:$0x1] %v972
        %1001 = vst [vmem:[#allocation3 + $0x48] sm:$0x1] %v974
        %1002 = vst [vmem:[#allocation3 + $0x50] sm:$0x1] %v976
        %1003 = vst [vmem:[#allocation3 + $0x58] sm:$0x1] %v978
        %v1004 = vld [vmem:[#allocation3] sm:$0xff]
        %v1005 = vld [vmem:[#allocation3 + $0x8] sm:$0xff]
        %v1006 = vld [vmem:[#allocation3 + $0x10] sm:$0xff]
        %v1007 = vld [vmem:[#allocation3 + $0x18] sm:$0xff]
        %v1008 = vld [vmem:[#allocation3 + $0x20] sm:$0xff]
        %v1009 = vld [vmem:[#allocation3 + $0x28] sm:$0xff]
        %v1010 = vld [vmem:[#allocation3 + $0x30] sm:$0xff]
        %v1011 = vld [vmem:[#allocation3 + $0x38] sm:$0xff]
        %v1012 = vld [vmem:[#allocation10] sm:$0xff]
        %v1013 = vld [vmem:[#allocation10 + $0x8] sm:$0xff]
        %v1014 = vld [vmem:[#allocation10 + $0x10] sm:$0xff]
        %v1015 = vld [vmem:[#allocation10 + $0x18] sm:$0xff]
        %v1016 = vld [vmem:[#allocation10 + $0x20] sm:$0xff]
        %v1017 = vld [vmem:[#allocation10 + $0x28] sm:$0xff]
        %v1018 = vld [vmem:[#allocation10 + $0x30] sm:$0xff]
        %v1019 = vld [vmem:[#allocation10 + $0x38] sm:$0xff]
        %v1020 = vld [vmem:[#allocation10 + $0x40] sm:$0xff]
        %v1021 = vld [vmem:[#allocation10 + $0x48] sm:$0xff]
        %v1022 = vld [vmem:[#allocation10 + $0x50] sm:$0xff]
        %v1023 = vld [vmem:[#allocation10 + $0x58] sm:$0xff]
        %v1024 = vld [vmem:[#allocation10 + $0x60] sm:$0xff]
        %v1025 = vld [vmem:[#allocation10 + $0x68] sm:$0xff]
        %v1026 = vld [vmem:[#allocation10 + $0x70] sm:$0xff]
        %v1027 = vld [vmem:[#allocation10 + $0x78] sm:$0xff]
        %v1028 = vld [vmem:[#allocation10 + $0x80] sm:$0xff]
        %v1029 = vld [vmem:[#allocation10 + $0x88] sm:$0xff]
        %v1030 = vld [vmem:[#allocation10 + $0x90] sm:$0xff]
        %v1031 = vld [vmem:[#allocation10 + $0x98] sm:$0xff]
        %v1032 = vld [vmem:[#allocation10 + $0xa0] sm:$0xff]
        %v1033 = vld [vmem:[#allocation10 + $0xa8] sm:$0xff]
        %v1034 = vld [vmem:[#allocation10 + $0xb0] sm:$0xff]
        %v1035 = vld [vmem:[#allocation10 + $0xb8] sm:$0xff]
        %v1036 = vld [vmem:[#allocation10 + $0xc0] sm:$0xff]
        %v1037 = vld [vmem:[#allocation10 + $0xc8] sm:$0xff]
        %v1038 = vld [vmem:[#allocation10 + $0xd0] sm:$0xff]
        %v1039 = vld [vmem:[#allocation10 + $0xd8] sm:$0xff]
        %v1040 = vld [vmem:[#allocation10 + $0xe0] sm:$0xff]
        %v1041 = vld [vmem:[#allocation10 + $0xe8] sm:$0xff]
        %v1042 = vld [vmem:[#allocation10 + $0xf0] sm:$0xff]
        %v1043 = vld [vmem:[#allocation10 + $0xf8] sm:$0xff]
        %v1044 = vld [vmem:[#allocation10 + $0x100] sm:$0xff]
        %v1045 = vld [vmem:[#allocation10 + $0x108] sm:$0xff]
        %v1046 = vld [vmem:[#allocation10 + $0x110] sm:$0xff]
        %v1047 = vld [vmem:[#allocation10 + $0x118] sm:$0xff]
        %v1048 = vld [vmem:[#allocation10 + $0x120] sm:$0xff]
        %v1049 = vld [vmem:[#allocation10 + $0x128] sm:$0xff]
        %v1050 = vld [vmem:[#allocation10 + $0x130] sm:$0xff]
        %v1051 = vld [vmem:[#allocation10 + $0x138] sm:$0xff]
        %v1052 = vld [vmem:[#allocation10 + $0x140] sm:$0xff]
        %v1053 = vld [vmem:[#allocation10 + $0x148] sm:$0xff]
        %v1054 = vld [vmem:[#allocation10 + $0x150] sm:$0xff]
        %v1055 = vld [vmem:[#allocation10 + $0x158] sm:$0xff]
        %v1056 = vld [vmem:[#allocation10 + $0x160] sm:$0xff]
        %v1057 = vld [vmem:[#allocation10 + $0x168] sm:$0xff]
        %v1058 = vld [vmem:[#allocation10 + $0x170] sm:$0xff]
        %v1059 = vld [vmem:[#allocation10 + $0x178] sm:$0xff]
        %v1060 = vld [vmem:[#allocation10 + $0x180] sm:$0xff]
        %v1061 = vld [vmem:[#allocation10 + $0x188] sm:$0xff]
        %v1062 = vld [vmem:[#allocation10 + $0x190] sm:$0xff]
        %v1063 = vld [vmem:[#allocation10 + $0x198] sm:$0xff]
        %v1064 = vld [vmem:[#allocation10 + $0x1a0] sm:$0xff]
        %v1065 = vld [vmem:[#allocation10 + $0x1a8] sm:$0xff]
        %v1066 = vld [vmem:[#allocation10 + $0x1b0] sm:$0xff]
        %v1067 = vld [vmem:[#allocation10 + $0x1b8] sm:$0xff]
        %v1068 = vld [vmem:[#allocation10 + $0x1c0] sm:$0xff]
        %v1069 = vld [vmem:[#allocation10 + $0x1c8] sm:$0xff]
        %v1070 = vld [vmem:[#allocation10 + $0x1d0] sm:$0xff]
        %v1071 = vld [vmem:[#allocation10 + $0x1d8] sm:$0xff]
        %v1072 = vld [vmem:[#allocation10 + $0x1e0] sm:$0xff]
        %v1073 = vld [vmem:[#allocation10 + $0x1e8] sm:$0xff]
        %v1074 = vld [vmem:[#allocation10 + $0x1f0] sm:$0xff]
        %v1075 = vld [vmem:[#allocation10 + $0x1f8] sm:$0xff]
        %v1076 = vld [vmem:[#allocation10 + $0x200] sm:$0xff]
        %v1077 = vld [vmem:[#allocation10 + $0x208] sm:$0xff]
        %v1078 = vld [vmem:[#allocation10 + $0x210] sm:$0xff]
        %v1079 = vld [vmem:[#allocation10 + $0x218] sm:$0xff]
        %v1080 = vld [vmem:[#allocation10 + $0x220] sm:$0xff]
        %v1081 = vld [vmem:[#allocation10 + $0x228] sm:$0xff]
        %v1082 = vld [vmem:[#allocation10 + $0x230] sm:$0xff]
        %v1083 = vld [vmem:[#allocation10 + $0x238] sm:$0xff]
        %v1084 = vld [vmem:[#allocation10 + $0x240] sm:$0xff]
        %v1085 = vld [vmem:[#allocation10 + $0x248] sm:$0xff]
        %v1086 = vld [vmem:[#allocation10 + $0x250] sm:$0xff]
        %v1087 = vld [vmem:[#allocation10 + $0x258] sm:$0xff]
        %v1088 = vld [vmem:[#allocation10 + $0x260] sm:$0xff]
        %v1089 = vld [vmem:[#allocation10 + $0x268] sm:$0xff]
        %v1090 = vld [vmem:[#allocation10 + $0x270] sm:$0xff]
        %v1091 = vld [vmem:[#allocation10 + $0x278] sm:$0xff]
        %v1092 = vld [vmem:[#allocation10 + $0x280] sm:$0xff]
        %v1093 = vld [vmem:[#allocation10 + $0x288] sm:$0xff]
        %v1094 = vld [vmem:[#allocation10 + $0x290] sm:$0xff]
        %v1095 = vld [vmem:[#allocation10 + $0x298] sm:$0xff]
        %v1096 = vld [vmem:[#allocation10 + $0x2a0] sm:$0xff]
        %v1097 = vld [vmem:[#allocation10 + $0x2a8] sm:$0xff]
        %v1098 = vld [vmem:[#allocation10 + $0x2b0] sm:$0xff]
        %v1099 = vld [vmem:[#allocation10 + $0x2b8] sm:$0xff]
        %v1100 = vld [vmem:[#allocation10 + $0x2c0] sm:$0xff]
        %v1101 = vld [vmem:[#allocation10 + $0x2c8] sm:$0xff]
        %v1102 = vld [vmem:[#allocation10 + $0x2d0] sm:$0xff]
        %v1103 = vld [vmem:[#allocation10 + $0x2d8] sm:$0xff]
        %v1104 = vld [vmem:[#allocation10 + $0x2e0] sm:$0xff]
        %v1105 = vld [vmem:[#allocation10 + $0x2e8] sm:$0xff]
        %v1106 = vld [vmem:[#allocation10 + $0x2f0] sm:$0xff]
        %v1107 = vld [vmem:[#allocation10 + $0x2f8] sm:$0xff]
        %v1108 = vld [vmem:[#allocation10 + $0x300] sm:$0xff]
        %v1109 = vld [vmem:[#allocation10 + $0x308] sm:$0xff]
        %v1110 = vld [vmem:[#allocation10 + $0x310] sm:$0xff]
        %v1111 = vld [vmem:[#allocation10 + $0x318] sm:$0xff]
        %v1112 = vld [vmem:[#allocation10 + $0x320] sm:$0xff]
        %v1113 = vld [vmem:[#allocation10 + $0x328] sm:$0xff]
        %v1114 = vld [vmem:[#allocation10 + $0x330] sm:$0xff]
        %v1115 = vld [vmem:[#allocation10 + $0x338] sm:$0xff]
        %v1116 = vld [vmem:[#allocation10 + $0x340] sm:$0xff]
        %v1117 = vld [vmem:[#allocation10 + $0x348] sm:$0xff]
        %v1118 = vld [vmem:[#allocation10 + $0x350] sm:$0xff]
        %v1119 = vld [vmem:[#allocation10 + $0x358] sm:$0xff]
        %v1120 = vld [vmem:[#allocation10 + $0x360] sm:$0xff]
        %v1121 = vld [vmem:[#allocation10 + $0x368] sm:$0xff]
        %v1122 = vld [vmem:[#allocation10 + $0x370] sm:$0xff]
        %v1123 = vld [vmem:[#allocation10 + $0x378] sm:$0xff]
        %v1124 = vld [vmem:[#allocation10 + $0x380] sm:$0xff]
        %v1125 = vld [vmem:[#allocation10 + $0x388] sm:$0xff]
        %v1126 = vld [vmem:[#allocation10 + $0x390] sm:$0xff]
        %v1127 = vld [vmem:[#allocation10 + $0x398] sm:$0xff]
        %v1128 = vld [vmem:[#allocation10 + $0x3a0] sm:$0xff]
        %v1129 = vld [vmem:[#allocation10 + $0x3a8] sm:$0xff]
        %v1130 = vld [vmem:[#allocation10 + $0x3b0] sm:$0xff]
        %v1131 = vld [vmem:[#allocation10 + $0x3b8] sm:$0xff]
        %v1132 = vld [vmem:[#allocation10 + $0x3c0] sm:$0xff]
        %v1133 = vld [vmem:[#allocation10 + $0x3c8] sm:$0xff]
        %v1134 = vld [vmem:[#allocation10 + $0x3d0] sm:$0xff]
        %v1135 = vld [vmem:[#allocation10 + $0x3d8] sm:$0xff]
        %v1136 = vld [vmem:[#allocation10 + $0x3e0] sm:$0xff]
        %v1137 = vld [vmem:[#allocation10 + $0x3e8] sm:$0xff]
        %v1138 = vld [vmem:[#allocation10 + $0x3f0] sm:$0xff]
        %v1139 = vld [vmem:[#allocation10 + $0x3f8] sm:$0xff]
        %v1140 = vld [vmem:[#allocation3] sm:$0xfe]
        %v1141 = vld [vmem:[#allocation3 + $0x8] sm:$0xfe]
        %v1142 = vld [vmem:[#allocation3 + $0x10] sm:$0xfe]
        %v1143 = vld [vmem:[#allocation3 + $0x18] sm:$0xfe]
        %v1144 = vld [vmem:[#allocation3 + $0x40] sm:$0x1]
        %v1145 = vld [vmem:[#allocation3 + $0x48] sm:$0x1]
        %v1146 = vld [vmem:[#allocation3 + $0x50] sm:$0x1]
        %v1147 = vld [vmem:[#allocation3 + $0x58] sm:$0x1]
        %s1148 = scalar_lea.vmem [#allocation10], 1024
        %v1149 = vld [vmem:[%s1148] sm:$0xff]
        %v1150 = vld [vmem:[%s1148 + $0x8] sm:$0xff]
        %v1151 = vld [vmem:[%s1148 + $0x10] sm:$0xff]
        %v1152 = vld [vmem:[%s1148 + $0x18] sm:$0xff]
        %v1153 = vld [vmem:[%s1148 + $0x20] sm:$0xff]
        %v1154 = vld [vmem:[%s1148 + $0x28] sm:$0xff]
        %v1155 = vld [vmem:[%s1148 + $0x30] sm:$0xff]
        %v1156 = vld [vmem:[%s1148 + $0x38] sm:$0xff]
        %v1157 = vld [vmem:[%s1148 + $0x40] sm:$0xff]
        %v1158 = vld [vmem:[%s1148 + $0x48] sm:$0xff]
        %v1159 = vld [vmem:[%s1148 + $0x50] sm:$0xff]
        %v1160 = vld [vmem:[%s1148 + $0x58] sm:$0xff]
        %v1161 = vld [vmem:[%s1148 + $0x60] sm:$0xff]
        %v1162 = vld [vmem:[%s1148 + $0x68] sm:$0xff]
        %v1163 = vld [vmem:[%s1148 + $0x70] sm:$0xff]
        %v1164 = vld [vmem:[%s1148 + $0x78] sm:$0xff]
        %v1165 = vld [vmem:[%s1148 + $0x80] sm:$0xff]
        %v1166 = vld [vmem:[%s1148 + $0x88] sm:$0xff]
        %v1167 = vld [vmem:[%s1148 + $0x90] sm:$0xff]
        %v1168 = vld [vmem:[%s1148 + $0x98] sm:$0xff]
        %v1169 = vld [vmem:[%s1148 + $0xa0] sm:$0xff]
        %v1170 = vld [vmem:[%s1148 + $0xa8] sm:$0xff]
        %v1171 = vld [vmem:[%s1148 + $0xb0] sm:$0xff]
        %v1172 = vld [vmem:[%s1148 + $0xb8] sm:$0xff]
        %v1173 = vld [vmem:[%s1148 + $0xc0] sm:$0xff]
        %v1174 = vld [vmem:[%s1148 + $0xc8] sm:$0xff]
        %v1175 = vld [vmem:[%s1148 + $0xd0] sm:$0xff]
        %v1176 = vld [vmem:[%s1148 + $0xd8] sm:$0xff]
        %v1177 = vld [vmem:[%s1148 + $0xe0] sm:$0xff]
        %v1178 = vld [vmem:[%s1148 + $0xe8] sm:$0xff]
        %v1179 = vld [vmem:[%s1148 + $0xf0] sm:$0xff]
        %v1180 = vld [vmem:[%s1148 + $0xf8] sm:$0xff]
        %v1181 = vld [vmem:[%s1148 + $0x100] sm:$0xff]
        %v1182 = vld [vmem:[%s1148 + $0x108] sm:$0xff]
        %v1183 = vld [vmem:[%s1148 + $0x110] sm:$0xff]
        %v1184 = vld [vmem:[%s1148 + $0x118] sm:$0xff]
        %v1185 = vld [vmem:[%s1148 + $0x120] sm:$0xff]
        %v1186 = vld [vmem:[%s1148 + $0x128] sm:$0xff]
        %v1187 = vld [vmem:[%s1148 + $0x130] sm:$0xff]
        %v1188 = vld [vmem:[%s1148 + $0x138] sm:$0xff]
        %v1189 = vld [vmem:[%s1148 + $0x140] sm:$0xff]
        %v1190 = vld [vmem:[%s1148 + $0x148] sm:$0xff]
        %v1191 = vld [vmem:[%s1148 + $0x150] sm:$0xff]
        %v1192 = vld [vmem:[%s1148 + $0x158] sm:$0xff]
        %v1193 = vld [vmem:[%s1148 + $0x160] sm:$0xff]
        %v1194 = vld [vmem:[%s1148 + $0x168] sm:$0xff]
        %v1195 = vld [vmem:[%s1148 + $0x170] sm:$0xff]
        %v1196 = vld [vmem:[%s1148 + $0x178] sm:$0xff]
        %v1197 = vld [vmem:[%s1148 + $0x180] sm:$0xff]
        %v1198 = vld [vmem:[%s1148 + $0x188] sm:$0xff]
        %v1199 = vld [vmem:[%s1148 + $0x190] sm:$0xff]
        %v1200 = vld [vmem:[%s1148 + $0x198] sm:$0xff]
        %v1201 = vld [vmem:[%s1148 + $0x1a0] sm:$0xff]
        %v1202 = vld [vmem:[%s1148 + $0x1a8] sm:$0xff]
        %v1203 = vld [vmem:[%s1148 + $0x1b0] sm:$0xff]
        %v1204 = vld [vmem:[%s1148 + $0x1b8] sm:$0xff]
        %v1205 = vld [vmem:[%s1148 + $0x1c0] sm:$0xff]
        %v1206 = vld [vmem:[%s1148 + $0x1c8] sm:$0xff]
        %v1207 = vld [vmem:[%s1148 + $0x1d0] sm:$0xff]
        %v1208 = vld [vmem:[%s1148 + $0x1d8] sm:$0xff]
        %v1209 = vld [vmem:[%s1148 + $0x1e0] sm:$0xff]
        %v1210 = vld [vmem:[%s1148 + $0x1e8] sm:$0xff]
        %v1211 = vld [vmem:[%s1148 + $0x1f0] sm:$0xff]
        %v1212 = vld [vmem:[%s1148 + $0x1f8] sm:$0xff]
        %v1213 = vld [vmem:[%s1148 + $0x200] sm:$0xff]
        %v1214 = vld [vmem:[%s1148 + $0x208] sm:$0xff]
        %v1215 = vld [vmem:[%s1148 + $0x210] sm:$0xff]
        %v1216 = vld [vmem:[%s1148 + $0x218] sm:$0xff]
        %v1217 = vld [vmem:[%s1148 + $0x220] sm:$0xff]
        %v1218 = vld [vmem:[%s1148 + $0x228] sm:$0xff]
        %v1219 = vld [vmem:[%s1148 + $0x230] sm:$0xff]
        %v1220 = vld [vmem:[%s1148 + $0x238] sm:$0xff]
        %v1221 = vld [vmem:[%s1148 + $0x240] sm:$0xff]
        %v1222 = vld [vmem:[%s1148 + $0x248] sm:$0xff]
        %v1223 = vld [vmem:[%s1148 + $0x250] sm:$0xff]
        %v1224 = vld [vmem:[%s1148 + $0x258] sm:$0xff]
        %v1225 = vld [vmem:[%s1148 + $0x260] sm:$0xff]
        %v1226 = vld [vmem:[%s1148 + $0x268] sm:$0xff]
        %v1227 = vld [vmem:[%s1148 + $0x270] sm:$0xff]
        %v1228 = vld [vmem:[%s1148 + $0x278] sm:$0xff]
        %v1229 = vld [vmem:[%s1148 + $0x280] sm:$0xff]
        %v1230 = vld [vmem:[%s1148 + $0x288] sm:$0xff]
        %v1231 = vld [vmem:[%s1148 + $0x290] sm:$0xff]
        %v1232 = vld [vmem:[%s1148 + $0x298] sm:$0xff]
        %v1233 = vld [vmem:[%s1148 + $0x2a0] sm:$0xff]
        %v1234 = vld [vmem:[%s1148 + $0x2a8] sm:$0xff]
        %v1235 = vld [vmem:[%s1148 + $0x2b0] sm:$0xff]
        %v1236 = vld [vmem:[%s1148 + $0x2b8] sm:$0xff]
        %v1237 = vld [vmem:[%s1148 + $0x2c0] sm:$0xff]
        %v1238 = vld [vmem:[%s1148 + $0x2c8] sm:$0xff]
        %v1239 = vld [vmem:[%s1148 + $0x2d0] sm:$0xff]
        %v1240 = vld [vmem:[%s1148 + $0x2d8] sm:$0xff]
        %v1241 = vld [vmem:[%s1148 + $0x2e0] sm:$0xff]
        %v1242 = vld [vmem:[%s1148 + $0x2e8] sm:$0xff]
        %v1243 = vld [vmem:[%s1148 + $0x2f0] sm:$0xff]
        %v1244 = vld [vmem:[%s1148 + $0x2f8] sm:$0xff]
        %v1245 = vld [vmem:[%s1148 + $0x300] sm:$0xff]
        %v1246 = vld [vmem:[%s1148 + $0x308] sm:$0xff]
        %v1247 = vld [vmem:[%s1148 + $0x310] sm:$0xff]
        %v1248 = vld [vmem:[%s1148 + $0x318] sm:$0xff]
        %v1249 = vld [vmem:[%s1148 + $0x320] sm:$0xff]
        %v1250 = vld [vmem:[%s1148 + $0x328] sm:$0xff]
        %v1251 = vld [vmem:[%s1148 + $0x330] sm:$0xff]
        %v1252 = vld [vmem:[%s1148 + $0x338] sm:$0xff]
        %v1253 = vld [vmem:[%s1148 + $0x340] sm:$0xff]
        %v1254 = vld [vmem:[%s1148 + $0x348] sm:$0xff]
        %v1255 = vld [vmem:[%s1148 + $0x350] sm:$0xff]
        %v1256 = vld [vmem:[%s1148 + $0x358] sm:$0xff]
        %v1257 = vld [vmem:[%s1148 + $0x360] sm:$0xff]
        %v1258 = vld [vmem:[%s1148 + $0x368] sm:$0xff]
        %v1259 = vld [vmem:[%s1148 + $0x370] sm:$0xff]
        %v1260 = vld [vmem:[%s1148 + $0x378] sm:$0xff]
        %v1261 = vld [vmem:[%s1148 + $0x380] sm:$0xff]
        %v1262 = vld [vmem:[%s1148 + $0x388] sm:$0xff]
        %v1263 = vld [vmem:[%s1148 + $0x390] sm:$0xff]
        %v1264 = vld [vmem:[%s1148 + $0x398] sm:$0xff]
        %v1265 = vld [vmem:[%s1148 + $0x3a0] sm:$0xff]
        %v1266 = vld [vmem:[%s1148 + $0x3a8] sm:$0xff]
        %v1267 = vld [vmem:[%s1148 + $0x3b0] sm:$0xff]
        %v1268 = vld [vmem:[%s1148 + $0x3b8] sm:$0xff]
        %v1269 = vld [vmem:[%s1148 + $0x3c0] sm:$0xff]
        %v1270 = vld [vmem:[%s1148 + $0x3c8] sm:$0xff]
        %v1271 = vld [vmem:[%s1148 + $0x3d0] sm:$0xff]
        %v1272 = vld [vmem:[%s1148 + $0x3d8] sm:$0xff]
        %v1273 = vld [vmem:[%s1148 + $0x3e0] sm:$0xff]
        %v1274 = vld [vmem:[%s1148 + $0x3e8] sm:$0xff]
        %v1275 = vld [vmem:[%s1148 + $0x3f0] sm:$0xff]
        %v1276 = vld [vmem:[%s1148 + $0x3f8] sm:$0xff]
        %vm1289 = vcmask 1046528
        %v1290 = vrot.slane %v1140, 1
        %v1291 = vrot.slane %v1008, 1
        %v1292 = vsel %vm1289, %v1290, %v1291
        %v1293 = vrot.slane %v1141, 1
        %v1294 = vrot.slane %v1009, 1
        %v1295 = vsel %vm1289, %v1293, %v1294
        %v1296 = vrot.slane %v1142, 1
        %v1297 = vrot.slane %v1010, 1
        %v1298 = vsel %vm1289, %v1296, %v1297
        %v1299 = vrot.slane %v1143, 1
        %v1300 = vrot.slane %v1011, 1
        %v1301 = vsel %vm1289, %v1299, %v1300
        %v1302 = vrot.slane %v1144, 1
        %v1303 = vsel %vm1289, %v1291, %v1302
        %v1304 = vrot.slane %v1145, 1
        %v1305 = vsel %vm1289, %v1294, %v1304
        %v1306 = vrot.slane %v1146, 1
        %v1307 = vsel %vm1289, %v1297, %v1306
        %v1308 = vrot.slane %v1147, 1
        %v1309 = vsel %vm1289, %v1300, %v1308
        %1318 = vmatprep.subr.mxu0 %v1180
        %1319 = vmatpush1.msra.mxu0 %v1179
        %1320 = vmatprep.subr.mxu0 %v1178
        %1321 = vmatpush1.msra.mxu0 %v1177
        %1322 = vmatprep.subr.mxu0 %v1176
        %1323 = vmatpush1.msra.mxu0 %v1175
        %1324 = vmatprep.subr.mxu0 %v1174
        %1325 = vmatpush1.msra.mxu0 %v1173
        %1326 = vmatprep.subr.mxu0 %v1172
        %1327 = vmatpush1.msra.mxu0 %v1171
        %1328 = vmatprep.subr.mxu0 %v1170
        %1329 = vmatpush1.msra.mxu0 %v1169
        %1330 = vmatprep.subr.mxu0 %v1168
        %1331 = vmatpush1.msra.mxu0 %v1167
        %1332 = vmatprep.subr.mxu0 %v1166
        %1333 = vmatpush1.msra.mxu0 %v1165
        %1334 = vmatprep.subr.mxu0 %v1164
        %1335 = vmatpush1.msra.mxu0 %v1163
        %1336 = vmatprep.subr.mxu0 %v1162
        %1337 = vmatpush1.msra.mxu0 %v1161
        %1338 = vmatprep.subr.mxu0 %v1160
        %1339 = vmatpush1.msra.mxu0 %v1159
        %1340 = vmatprep.subr.mxu0 %v1158
        %1341 = vmatpush1.msra.mxu0 %v1157
        %1342 = vmatprep.subr.mxu0 %v1156
        %1343 = vmatpush1.msra.mxu0 %v1155
        %1344 = vmatprep.subr.mxu0 %v1154
        %1345 = vmatpush1.msra.mxu0 %v1153
        %1346 = vmatprep.subr.mxu0 %v1152
        %1347 = vmatpush1.msra.mxu0 %v1151
        %1348 = vmatprep.subr.mxu0 %v1150
        %1349 = vmatpush1.msra.mxu0 %v1149
        %1350 = vmatprep.subr.mxu0 %v1212
        %1351 = vmatpush2.msra.mxu0 %v1211
        %1352 = vmatprep.subr.mxu0 %v1210
        %1353 = vmatpush2.msra.mxu0 %v1209
        %1354 = vmatprep.subr.mxu0 %v1208
        %1355 = vmatpush2.msra.mxu0 %v1207
        %1356 = vmatprep.subr.mxu0 %v1206
        %1357 = vmatpush2.msra.mxu0 %v1205
        %1358 = vmatprep.subr.mxu0 %v1204
        %1359 = vmatpush2.msra.mxu0 %v1203
        %1360 = vmatprep.subr.mxu0 %v1202
        %1361 = vmatpush2.msra.mxu0 %v1201
        %1362 = vmatprep.subr.mxu0 %v1200
        %1363 = vmatpush2.msra.mxu0 %v1199
        %1364 = vmatprep.subr.mxu0 %v1198
        %1365 = vmatpush2.msra.mxu0 %v1197
        %1366 = vmatprep.subr.mxu0 %v1196
        %1367 = vmatpush2.msra.mxu0 %v1195
        %1368 = vmatprep.subr.mxu0 %v1194
        %1369 = vmatpush2.msra.mxu0 %v1193
        %1370 = vmatprep.subr.mxu0 %v1192
        %1371 = vmatpush2.msra.mxu0 %v1191
        %1372 = vmatprep.subr.mxu0 %v1190
        %1373 = vmatpush2.msra.mxu0 %v1189
        %1374 = vmatprep.subr.mxu0 %v1188
        %1375 = vmatpush2.msra.mxu0 %v1187
        %1376 = vmatprep.subr.mxu0 %v1186
        %1377 = vmatpush2.msra.mxu0 %v1185
        %1378 = vmatprep.subr.mxu0 %v1184
        %1379 = vmatpush2.msra.mxu0 %v1183
        %1380 = vmatprep.subr.mxu0 %v1182
        %1381 = vmatpush2.msra.mxu0 %v1181
        %1382 = vmatprep.mubr.f32.mxu0 %v1295
        %1383 = vmatmul.mubr.f32.gmra.mxu0 %v1292
        %v1384 = vpop.f32.mrf.mxu0
        %v1385 = vadd.f32 0.0, %v1384
        %v1386 = vpop.f32.mrf.mxu0
        %v1387 = vadd.f32 0.0, %v1386
        %1388 = vmatprep.mubr.f32.mxu0 %v1305
        %1389 = vmatmul.mubr.f32.gmra.mxu0 %v1303
        %v1390 = vpop.f32.mrf.mxu0
        %v1391 = vadd.f32 0.0, %v1390
        %v1392 = vpop.f32.mrf.mxu0
        %v1393 = vadd.f32 0.0, %v1392
        %1394 = vdwg.mxu0
        %1395 = vmatprep.subr.mxu0 %v1244
        %1396 = vmatpush1.msra.mxu0 %v1243
        %1397 = vmatprep.subr.mxu0 %v1242
        %1398 = vmatpush1.msra.mxu0 %v1241
        %1399 = vmatprep.subr.mxu0 %v1240
        %1400 = vmatpush1.msra.mxu0 %v1239
        %1401 = vmatprep.subr.mxu0 %v1238
        %1402 = vmatpush1.msra.mxu0 %v1237
        %1403 = vmatprep.subr.mxu0 %v1236
        %1404 = vmatpush1.msra.mxu0 %v1235
        %1405 = vmatprep.subr.mxu0 %v1234
        %1406 = vmatpush1.msra.mxu0 %v1233
        %1407 = vmatprep.subr.mxu0 %v1232
        %1408 = vmatpush1.msra.mxu0 %v1231
        %1409 = vmatprep.subr.mxu0 %v1230
        %1410 = vmatpush1.msra.mxu0 %v1229
        %1411 = vmatprep.subr.mxu0 %v1228
        %1412 = vmatpush1.msra.mxu0 %v1227
        %1413 = vmatprep.subr.mxu0 %v1226
        %1414 = vmatpush1.msra.mxu0 %v1225
        %1415 = vmatprep.subr.mxu0 %v1224
        %1416 = vmatpush1.msra.mxu0 %v1223
        %1417 = vmatprep.subr.mxu0 %v1222
        %1418 = vmatpush1.msra.mxu0 %v1221
        %1419 = vmatprep.subr.mxu0 %v1220
        %1420 = vmatpush1.msra.mxu0 %v1219
        %1421 = vmatprep.subr.mxu0 %v1218
        %1422 = vmatpush1.msra.mxu0 %v1217
        %1423 = vmatprep.subr.mxu0 %v1216
        %1424 = vmatpush1.msra.mxu0 %v1215
        %1425 = vmatprep.subr.mxu0 %v1214
        %1426 = vmatpush1.msra.mxu0 %v1213
        %1427 = vmatprep.subr.mxu0 %v1276
        %1428 = vmatpush2.msra.mxu0 %v1275
        %1429 = vmatprep.subr.mxu0 %v1274
        %1430 = vmatpush2.msra.mxu0 %v1273
        %1431 = vmatprep.subr.mxu0 %v1272
        %1432 = vmatpush2.msra.mxu0 %v1271
        %1433 = vmatprep.subr.mxu0 %v1270
        %1434 = vmatpush2.msra.mxu0 %v1269
        %1435 = vmatprep.subr.mxu0 %v1268
        %1436 = vmatpush2.msra.mxu0 %v1267
        %1437 = vmatprep.subr.mxu0 %v1266
        %1438 = vmatpush2.msra.mxu0 %v1265
        %1439 = vmatprep.subr.mxu0 %v1264
        %1440 = vmatpush2.msra.mxu0 %v1263
        %1441 = vmatprep.subr.mxu0 %v1262
        %1442 = vmatpush2.msra.mxu0 %v1261
        %1443 = vmatprep.subr.mxu0 %v1260
        %1444 = vmatpush2.msra.mxu0 %v1259
        %1445 = vmatprep.subr.mxu0 %v1258
        %1446 = vmatpush2.msra.mxu0 %v1257
        %1447 = vmatprep.subr.mxu0 %v1256
        %1448 = vmatpush2.msra.mxu0 %v1255
        %1449 = vmatprep.subr.mxu0 %v1254
        %1450 = vmatpush2.msra.mxu0 %v1253
        %1451 = vmatprep.subr.mxu0 %v1252
        %1452 = vmatpush2.msra.mxu0 %v1251
        %1453 = vmatprep.subr.mxu0 %v1250
        %1454 = vmatpush2.msra.mxu0 %v1249
        %1455 = vmatprep.subr.mxu0 %v1248
        %1456 = vmatpush2.msra.mxu0 %v1247
        %1457 = vmatprep.subr.mxu0 %v1246
        %1458 = vmatpush2.msra.mxu0 %v1245
        %1459 = vmatprep.mubr.f32.mxu0 %v1301
        %1460 = vmatmul.mubr.f32.gmra.mxu0 %v1298
        %v1461 = vpop.f32.mrf.mxu0
        %v1462 = vadd.f32 %v1385, %v1461
        %v1463 = vpop.f32.mrf.mxu0
        %v1464 = vadd.f32 %v1387, %v1463
        %1465 = vmatprep.mubr.f32.mxu0 %v1309
        %1466 = vmatmul.mubr.f32.gmra.mxu0 %v1307
        %v1467 = vpop.f32.mrf.mxu0
        %v1468 = vadd.f32 %v1391, %v1467
        %v1469 = vpop.f32.mrf.mxu0
        %v1470 = vadd.f32 %v1393, %v1469
        %1471 = vdwg.mxu0
        %1472 = vmatprep.subr.mxu0 %v1043
        %1473 = vmatpush1.msra.mxu0 %v1042
        %1474 = vmatprep.subr.mxu0 %v1041
        %1475 = vmatpush1.msra.mxu0 %v1040
        %1476 = vmatprep.subr.mxu0 %v1039
        %1477 = vmatpush1.msra.mxu0 %v1038
        %1478 = vmatprep.subr.mxu0 %v1037
        %1479 = vmatpush1.msra.mxu0 %v1036
        %1480 = vmatprep.subr.mxu0 %v1035
        %1481 = vmatpush1.msra.mxu0 %v1034
        %1482 = vmatprep.subr.mxu0 %v1033
        %1483 = vmatpush1.msra.mxu0 %v1032
        %1484 = vmatprep.subr.mxu0 %v1031
        %1485 = vmatpush1.msra.mxu0 %v1030
        %1486 = vmatprep.subr.mxu0 %v1029
        %1487 = vmatpush1.msra.mxu0 %v1028
        %1488 = vmatprep.subr.mxu0 %v1027
        %1489 = vmatpush1.msra.mxu0 %v1026
        %1490 = vmatprep.subr.mxu0 %v1025
        %1491 = vmatpush1.msra.mxu0 %v1024
        %1492 = vmatprep.subr.mxu0 %v1023
        %1493 = vmatpush1.msra.mxu0 %v1022
        %1494 = vmatprep.subr.mxu0 %v1021
        %1495 = vmatpush1.msra.mxu0 %v1020
        %1496 = vmatprep.subr.mxu0 %v1019
        %1497 = vmatpush1.msra.mxu0 %v1018
        %1498 = vmatprep.subr.mxu0 %v1017
        %1499 = vmatpush1.msra.mxu0 %v1016
        %1500 = vmatprep.subr.mxu0 %v1015
        %1501 = vmatpush1.msra.mxu0 %v1014
        %1502 = vmatprep.subr.mxu0 %v1013
        %1503 = vmatpush1.msra.mxu0 %v1012
        %1504 = vmatprep.subr.mxu0 %v1075
        %1505 = vmatpush2.msra.mxu0 %v1074
        %1506 = vmatprep.subr.mxu0 %v1073
        %1507 = vmatpush2.msra.mxu0 %v1072
        %1508 = vmatprep.subr.mxu0 %v1071
        %1509 = vmatpush2.msra.mxu0 %v1070
        %1510 = vmatprep.subr.mxu0 %v1069
        %1511 = vmatpush2.msra.mxu0 %v1068
        %1512 = vmatprep.subr.mxu0 %v1067
        %1513 = vmatpush2.msra.mxu0 %v1066
        %1514 = vmatprep.subr.mxu0 %v1065
        %1515 = vmatpush2.msra.mxu0 %v1064
        %1516 = vmatprep.subr.mxu0 %v1063
        %1517 = vmatpush2.msra.mxu0 %v1062
        %1518 = vmatprep.subr.mxu0 %v1061
        %1519 = vmatpush2.msra.mxu0 %v1060
        %1520 = vmatprep.subr.mxu0 %v1059
        %1521 = vmatpush2.msra.mxu0 %v1058
        %1522 = vmatprep.subr.mxu0 %v1057
        %1523 = vmatpush2.msra.mxu0 %v1056
        %1524 = vmatprep.subr.mxu0 %v1055
        %1525 = vmatpush2.msra.mxu0 %v1054
        %1526 = vmatprep.subr.mxu0 %v1053
        %1527 = vmatpush2.msra.mxu0 %v1052
        %1528 = vmatprep.subr.mxu0 %v1051
        %1529 = vmatpush2.msra.mxu0 %v1050
        %1530 = vmatprep.subr.mxu0 %v1049
        %1531 = vmatpush2.msra.mxu0 %v1048
        %1532 = vmatprep.subr.mxu0 %v1047
        %1533 = vmatpush2.msra.mxu0 %v1046
        %1534 = vmatprep.subr.mxu0 %v1045
        %1535 = vmatpush2.msra.mxu0 %v1044
        %1536 = vmatprep.mubr.f32.mxu0 %v1005
        %1537 = vmatmul.mubr.f32.gmra.mxu0 %v1004
        %v1538 = vpop.f32.mrf.mxu0
        %v1539 = vadd.f32 %v1462, %v1538
        %v1540 = vpop.f32.mrf.mxu0
        %v1541 = vadd.f32 %v1464, %v1540
        %1542 = vmatprep.mubr.f32.mxu0 %v1009
        %1543 = vmatmul.mubr.f32.gmra.mxu0 %v1008
        %v1544 = vpop.f32.mrf.mxu0
        %v1545 = vadd.f32 %v1468, %v1544
        %v1546 = vpop.f32.mrf.mxu0
        %v1547 = vadd.f32 %v1470, %v1546
        %1548 = vdwg.mxu0
        %1549 = vmatprep.subr.mxu0 %v1107
        %1550 = vmatpush1.msra.mxu0 %v1106
        %1551 = vmatprep.subr.mxu0 %v1105
        %1552 = vmatpush1.msra.mxu0 %v1104
        %1553 = vmatprep.subr.mxu0 %v1103
        %1554 = vmatpush1.msra.mxu0 %v1102
        %1555 = vmatprep.subr.mxu0 %v1101
        %1556 = vmatpush1.msra.mxu0 %v1100
        %1557 = vmatprep.subr.mxu0 %v1099
        %1558 = vmatpush1.msra.mxu0 %v1098
        %1559 = vmatprep.subr.mxu0 %v1097
        %1560 = vmatpush1.msra.mxu0 %v1096
        %1561 = vmatprep.subr.mxu0 %v1095
        %1562 = vmatpush1.msra.mxu0 %v1094
        %1563 = vmatprep.subr.mxu0 %v1093
        %1564 = vmatpush1.msra.mxu0 %v1092
        %1565 = vmatprep.subr.mxu0 %v1091
        %1566 = vmatpush1.msra.mxu0 %v1090
        %1567 = vmatprep.subr.mxu0 %v1089
        %1568 = vmatpush1.msra.mxu0 %v1088
        %1569 = vmatprep.subr.mxu0 %v1087
        %1570 = vmatpush1.msra.mxu0 %v1086
        %1571 = vmatprep.subr.mxu0 %v1085
        %1572 = vmatpush1.msra.mxu0 %v1084
        %1573 = vmatprep.subr.mxu0 %v1083
        %1574 = vmatpush1.msra.mxu0 %v1082
        %1575 = vmatprep.subr.mxu0 %v1081
        %1576 = vmatpush1.msra.mxu0 %v1080
        %1577 = vmatprep.subr.mxu0 %v1079
        %1578 = vmatpush1.msra.mxu0 %v1078
        %1579 = vmatprep.subr.mxu0 %v1077
        %1580 = vmatpush1.msra.mxu0 %v1076
        %1581 = vmatprep.subr.mxu0 %v1139
        %1582 = vmatpush2.msra.mxu0 %v1138
        %1583 = vmatprep.subr.mxu0 %v1137
        %1584 = vmatpush2.msra.mxu0 %v1136
        %1585 = vmatprep.subr.mxu0 %v1135
        %1586 = vmatpush2.msra.mxu0 %v1134
        %1587 = vmatprep.subr.mxu0 %v1133
        %1588 = vmatpush2.msra.mxu0 %v1132
        %1589 = vmatprep.subr.mxu0 %v1131
        %1590 = vmatpush2.msra.mxu0 %v1130
        %1591 = vmatprep.subr.mxu0 %v1129
        %1592 = vmatpush2.msra.mxu0 %v1128
        %1593 = vmatprep.subr.mxu0 %v1127
        %1594 = vmatpush2.msra.mxu0 %v1126
        %1595 = vmatprep.subr.mxu0 %v1125
        %1596 = vmatpush2.msra.mxu0 %v1124
        %1597 = vmatprep.subr.mxu0 %v1123
        %1598 = vmatpush2.msra.mxu0 %v1122
        %1599 = vmatprep.subr.mxu0 %v1121
        %1600 = vmatpush2.msra.mxu0 %v1120
        %1601 = vmatprep.subr.mxu0 %v1119
        %1602 = vmatpush2.msra.mxu0 %v1118
        %1603 = vmatprep.subr.mxu0 %v1117
        %1604 = vmatpush2.msra.mxu0 %v1116
        %1605 = vmatprep.subr.mxu0 %v1115
        %1606 = vmatpush2.msra.mxu0 %v1114
        %1607 = vmatprep.subr.mxu0 %v1113
        %1608 = vmatpush2.msra.mxu0 %v1112
        %1609 = vmatprep.subr.mxu0 %v1111
        %1610 = vmatpush2.msra.mxu0 %v1110
        %1611 = vmatprep.subr.mxu0 %v1109
        %1612 = vmatpush2.msra.mxu0 %v1108
        %1613 = vmatprep.mubr.f32.mxu0 %v1007
        %1614 = vmatmul.mubr.f32.gmra.mxu0 %v1006
        %v1615 = vpop.f32.mrf.mxu0
        %v1616 = vadd.f32 %v1539, %v1615
        %v1617 = vpop.f32.mrf.mxu0
        %v1618 = vadd.f32 %v1541, %v1617
        %1619 = vmatprep.mubr.f32.mxu0 %v1011
        %1620 = vmatmul.mubr.f32.gmra.mxu0 %v1010
        %v1621 = vpop.f32.mrf.mxu0
        %v1622 = vadd.f32 %v1545, %v1621
        %v1623 = vpop.f32.mrf.mxu0
        %v1624 = vadd.f32 %v1547, %v1623
        %1625 = vdwg.mxu0
        %v1626 = vld [vmem:[#allocation3] sm:$0xfc]
        %v1627 = vld [vmem:[#allocation3 + $0x8] sm:$0xfc]
        %v1628 = vld [vmem:[#allocation3 + $0x10] sm:$0xfc]
        %v1629 = vld [vmem:[#allocation3 + $0x18] sm:$0xfc]
        %v1630 = vld [vmem:[#allocation3 + $0x40] sm:$0x3]
        %v1631 = vld [vmem:[#allocation3 + $0x48] sm:$0x3]
        %v1632 = vld [vmem:[#allocation3 + $0x50] sm:$0x3]
        %v1633 = vld [vmem:[#allocation3 + $0x58] sm:$0x3]
        %s1634 = scalar_lea.vmem [#allocation10], 2048
        %v1635 = vld [vmem:[%s1634] sm:$0xff]
        %v1636 = vld [vmem:[%s1634 + $0x8] sm:$0xff]
        %v1637 = vld [vmem:[%s1634 + $0x10] sm:$0xff]
        %v1638 = vld [vmem:[%s1634 + $0x18] sm:$0xff]
        %v1639 = vld [vmem:[%s1634 + $0x20] sm:$0xff]
        %v1640 = vld [vmem:[%s1634 + $0x28] sm:$0xff]
        %v1641 = vld [vmem:[%s1634 + $0x30] sm:$0xff]
        %v1642 = vld [vmem:[%s1634 + $0x38] sm:$0xff]
        %v1643 = vld [vmem:[%s1634 + $0x40] sm:$0xff]
        %v1644 = vld [vmem:[%s1634 + $0x48] sm:$0xff]
        %v1645 = vld [vmem:[%s1634 + $0x50] sm:$0xff]
        %v1646 = vld [vmem:[%s1634 + $0x58] sm:$0xff]
        %v1647 = vld [vmem:[%s1634 + $0x60] sm:$0xff]
        %v1648 = vld [vmem:[%s1634 + $0x68] sm:$0xff]
        %v1649 = vld [vmem:[%s1634 + $0x70] sm:$0xff]
        %v1650 = vld [vmem:[%s1634 + $0x78] sm:$0xff]
        %v1651 = vld [vmem:[%s1634 + $0x80] sm:$0xff]
        %v1652 = vld [vmem:[%s1634 + $0x88] sm:$0xff]
        %v1653 = vld [vmem:[%s1634 + $0x90] sm:$0xff]
        %v1654 = vld [vmem:[%s1634 + $0x98] sm:$0xff]
        %v1655 = vld [vmem:[%s1634 + $0xa0] sm:$0xff]
        %v1656 = vld [vmem:[%s1634 + $0xa8] sm:$0xff]
        %v1657 = vld [vmem:[%s1634 + $0xb0] sm:$0xff]
        %v1658 = vld [vmem:[%s1634 + $0xb8] sm:$0xff]
        %v1659 = vld [vmem:[%s1634 + $0xc0] sm:$0xff]
        %v1660 = vld [vmem:[%s1634 + $0xc8] sm:$0xff]
        %v1661 = vld [vmem:[%s1634 + $0xd0] sm:$0xff]
        %v1662 = vld [vmem:[%s1634 + $0xd8] sm:$0xff]
        %v1663 = vld [vmem:[%s1634 + $0xe0] sm:$0xff]
        %v1664 = vld [vmem:[%s1634 + $0xe8] sm:$0xff]
        %v1665 = vld [vmem:[%s1634 + $0xf0] sm:$0xff]
        %v1666 = vld [vmem:[%s1634 + $0xf8] sm:$0xff]
        %v1667 = vld [vmem:[%s1634 + $0x100] sm:$0xff]
        %v1668 = vld [vmem:[%s1634 + $0x108] sm:$0xff]
        %v1669 = vld [vmem:[%s1634 + $0x110] sm:$0xff]
        %v1670 = vld [vmem:[%s1634 + $0x118] sm:$0xff]
        %v1671 = vld [vmem:[%s1634 + $0x120] sm:$0xff]
        %v1672 = vld [vmem:[%s1634 + $0x128] sm:$0xff]
        %v1673 = vld [vmem:[%s1634 + $0x130] sm:$0xff]
        %v1674 = vld [vmem:[%s1634 + $0x138] sm:$0xff]
        %v1675 = vld [vmem:[%s1634 + $0x140] sm:$0xff]
        %v1676 = vld [vmem:[%s1634 + $0x148] sm:$0xff]
        %v1677 = vld [vmem:[%s1634 + $0x150] sm:$0xff]
        %v1678 = vld [vmem:[%s1634 + $0x158] sm:$0xff]
        %v1679 = vld [vmem:[%s1634 + $0x160] sm:$0xff]
        %v1680 = vld [vmem:[%s1634 + $0x168] sm:$0xff]
        %v1681 = vld [vmem:[%s1634 + $0x170] sm:$0xff]
        %v1682 = vld [vmem:[%s1634 + $0x178] sm:$0xff]
        %v1683 = vld [vmem:[%s1634 + $0x180] sm:$0xff]
        %v1684 = vld [vmem:[%s1634 + $0x188] sm:$0xff]
        %v1685 = vld [vmem:[%s1634 + $0x190] sm:$0xff]
        %v1686 = vld [vmem:[%s1634 + $0x198] sm:$0xff]
        %v1687 = vld [vmem:[%s1634 + $0x1a0] sm:$0xff]
        %v1688 = vld [vmem:[%s1634 + $0x1a8] sm:$0xff]
        %v1689 = vld [vmem:[%s1634 + $0x1b0] sm:$0xff]
        %v1690 = vld [vmem:[%s1634 + $0x1b8] sm:$0xff]
        %v1691 = vld [vmem:[%s1634 + $0x1c0] sm:$0xff]
        %v1692 = vld [vmem:[%s1634 + $0x1c8] sm:$0xff]
        %v1693 = vld [vmem:[%s1634 + $0x1d0] sm:$0xff]
        %v1694 = vld [vmem:[%s1634 + $0x1d8] sm:$0xff]
        %v1695 = vld [vmem:[%s1634 + $0x1e0] sm:$0xff]
        %v1696 = vld [vmem:[%s1634 + $0x1e8] sm:$0xff]
        %v1697 = vld [vmem:[%s1634 + $0x1f0] sm:$0xff]
        %v1698 = vld [vmem:[%s1634 + $0x1f8] sm:$0xff]
        %v1699 = vld [vmem:[%s1634 + $0x200] sm:$0xff]
        %v1700 = vld [vmem:[%s1634 + $0x208] sm:$0xff]
        %v1701 = vld [vmem:[%s1634 + $0x210] sm:$0xff]
        %v1702 = vld [vmem:[%s1634 + $0x218] sm:$0xff]
        %v1703 = vld [vmem:[%s1634 + $0x220] sm:$0xff]
        %v1704 = vld [vmem:[%s1634 + $0x228] sm:$0xff]
        %v1705 = vld [vmem:[%s1634 + $0x230] sm:$0xff]
        %v1706 = vld [vmem:[%s1634 + $0x238] sm:$0xff]
        %v1707 = vld [vmem:[%s1634 + $0x240] sm:$0xff]
        %v1708 = vld [vmem:[%s1634 + $0x248] sm:$0xff]
        %v1709 = vld [vmem:[%s1634 + $0x250] sm:$0xff]
        %v1710 = vld [vmem:[%s1634 + $0x258] sm:$0xff]
        %v1711 = vld [vmem:[%s1634 + $0x260] sm:$0xff]
        %v1712 = vld [vmem:[%s1634 + $0x268] sm:$0xff]
        %v1713 = vld [vmem:[%s1634 + $0x270] sm:$0xff]
        %v1714 = vld [vmem:[%s1634 + $0x278] sm:$0xff]
        %v1715 = vld [vmem:[%s1634 + $0x280] sm:$0xff]
        %v1716 = vld [vmem:[%s1634 + $0x288] sm:$0xff]
        %v1717 = vld [vmem:[%s1634 + $0x290] sm:$0xff]
        %v1718 = vld [vmem:[%s1634 + $0x298] sm:$0xff]
        %v1719 = vld [vmem:[%s1634 + $0x2a0] sm:$0xff]
        %v1720 = vld [vmem:[%s1634 + $0x2a8] sm:$0xff]
        %v1721 = vld [vmem:[%s1634 + $0x2b0] sm:$0xff]
        %v1722 = vld [vmem:[%s1634 + $0x2b8] sm:$0xff]
        %v1723 = vld [vmem:[%s1634 + $0x2c0] sm:$0xff]
        %v1724 = vld [vmem:[%s1634 + $0x2c8] sm:$0xff]
        %v1725 = vld [vmem:[%s1634 + $0x2d0] sm:$0xff]
        %v1726 = vld [vmem:[%s1634 + $0x2d8] sm:$0xff]
        %v1727 = vld [vmem:[%s1634 + $0x2e0] sm:$0xff]
        %v1728 = vld [vmem:[%s1634 + $0x2e8] sm:$0xff]
        %v1729 = vld [vmem:[%s1634 + $0x2f0] sm:$0xff]
        %v1730 = vld [vmem:[%s1634 + $0x2f8] sm:$0xff]
        %v1731 = vld [vmem:[%s1634 + $0x300] sm:$0xff]
        %v1732 = vld [vmem:[%s1634 + $0x308] sm:$0xff]
        %v1733 = vld [vmem:[%s1634 + $0x310] sm:$0xff]
        %v1734 = vld [vmem:[%s1634 + $0x318] sm:$0xff]
        %v1735 = vld [vmem:[%s1634 + $0x320] sm:$0xff]
        %v1736 = vld [vmem:[%s1634 + $0x328] sm:$0xff]
        %v1737 = vld [vmem:[%s1634 + $0x330] sm:$0xff]
        %v1738 = vld [vmem:[%s1634 + $0x338] sm:$0xff]
        %v1739 = vld [vmem:[%s1634 + $0x340] sm:$0xff]
        %v1740 = vld [vmem:[%s1634 + $0x348] sm:$0xff]
        %v1741 = vld [vmem:[%s1634 + $0x350] sm:$0xff]
        %v1742 = vld [vmem:[%s1634 + $0x358] sm:$0xff]
        %v1743 = vld [vmem:[%s1634 + $0x360] sm:$0xff]
        %v1744 = vld [vmem:[%s1634 + $0x368] sm:$0xff]
        %v1745 = vld [vmem:[%s1634 + $0x370] sm:$0xff]
        %v1746 = vld [vmem:[%s1634 + $0x378] sm:$0xff]
        %v1747 = vld [vmem:[%s1634 + $0x380] sm:$0xff]
        %v1748 = vld [vmem:[%s1634 + $0x388] sm:$0xff]
        %v1749 = vld [vmem:[%s1634 + $0x390] sm:$0xff]
        %v1750 = vld [vmem:[%s1634 + $0x398] sm:$0xff]
        %v1751 = vld [vmem:[%s1634 + $0x3a0] sm:$0xff]
        %v1752 = vld [vmem:[%s1634 + $0x3a8] sm:$0xff]
        %v1753 = vld [vmem:[%s1634 + $0x3b0] sm:$0xff]
        %v1754 = vld [vmem:[%s1634 + $0x3b8] sm:$0xff]
        %v1755 = vld [vmem:[%s1634 + $0x3c0] sm:$0xff]
        %v1756 = vld [vmem:[%s1634 + $0x3c8] sm:$0xff]
        %v1757 = vld [vmem:[%s1634 + $0x3d0] sm:$0xff]
        %v1758 = vld [vmem:[%s1634 + $0x3d8] sm:$0xff]
        %v1759 = vld [vmem:[%s1634 + $0x3e0] sm:$0xff]
        %v1760 = vld [vmem:[%s1634 + $0x3e8] sm:$0xff]
        %v1761 = vld [vmem:[%s1634 + $0x3f0] sm:$0xff]
        %v1762 = vld [vmem:[%s1634 + $0x3f8] sm:$0xff]
        %vm1771 = vcmask 1045504
        %v1772 = vrot.slane %v1626, 2
        %v1773 = vrot.slane %v1008, 2
        %v1774 = vsel %vm1771, %v1772, %v1773
        %v1775 = vrot.slane %v1627, 2
        %v1776 = vrot.slane %v1009, 2
        %v1777 = vsel %vm1771, %v1775, %v1776
        %v1778 = vrot.slane %v1628, 2
        %v1779 = vrot.slane %v1010, 2
        %v1780 = vsel %vm1771, %v1778, %v1779
        %v1781 = vrot.slane %v1629, 2
        %v1782 = vrot.slane %v1011, 2
        %v1783 = vsel %vm1771, %v1781, %v1782
        %v1784 = vrot.slane %v1630, 2
        %v1785 = vsel %vm1771, %v1773, %v1784
        %v1786 = vrot.slane %v1631, 2
        %v1787 = vsel %vm1771, %v1776, %v1786
        %v1788 = vrot.slane %v1632, 2
        %v1789 = vsel %vm1771, %v1779, %v1788
        %v1790 = vrot.slane %v1633, 2
        %v1791 = vsel %vm1771, %v1782, %v1790
        %1800 = vmatprep.subr.mxu0 %v1666
        %1801 = vmatpush1.msra.mxu0 %v1665
        %1802 = vmatprep.subr.mxu0 %v1664
        %1803 = vmatpush1.msra.mxu0 %v1663
        %1804 = vmatprep.subr.mxu0 %v1662
        %1805 = vmatpush1.msra.mxu0 %v1661
        %1806 = vmatprep.subr.mxu0 %v1660
        %1807 = vmatpush1.msra.mxu0 %v1659
        %1808 = vmatprep.subr.mxu0 %v1658
        %1809 = vmatpush1.msra.mxu0 %v1657
        %1810 = vmatprep.subr.mxu0 %v1656
        %1811 = vmatpush1.msra.mxu0 %v1655
        %1812 = vmatprep.subr.mxu0 %v1654
        %1813 = vmatpush1.msra.mxu0 %v1653
        %1814 = vmatprep.subr.mxu0 %v1652
        %1815 = vmatpush1.msra.mxu0 %v1651
        %1816 = vmatprep.subr.mxu0 %v1650
        %1817 = vmatpush1.msra.mxu0 %v1649
        %1818 = vmatprep.subr.mxu0 %v1648
        %1819 = vmatpush1.msra.mxu0 %v1647
        %1820 = vmatprep.subr.mxu0 %v1646
        %1821 = vmatpush1.msra.mxu0 %v1645
        %1822 = vmatprep.subr.mxu0 %v1644
        %1823 = vmatpush1.msra.mxu0 %v1643
        %1824 = vmatprep.subr.mxu0 %v1642
        %1825 = vmatpush1.msra.mxu0 %v1641
        %1826 = vmatprep.subr.mxu0 %v1640
        %1827 = vmatpush1.msra.mxu0 %v1639
        %1828 = vmatprep.subr.mxu0 %v1638
        %1829 = vmatpush1.msra.mxu0 %v1637
        %1830 = vmatprep.subr.mxu0 %v1636
        %1831 = vmatpush1.msra.mxu0 %v1635
        %1832 = vmatprep.subr.mxu0 %v1698
        %1833 = vmatpush2.msra.mxu0 %v1697
        %1834 = vmatprep.subr.mxu0 %v1696
        %1835 = vmatpush2.msra.mxu0 %v1695
        %1836 = vmatprep.subr.mxu0 %v1694
        %1837 = vmatpush2.msra.mxu0 %v1693
        %1838 = vmatprep.subr.mxu0 %v1692
        %1839 = vmatpush2.msra.mxu0 %v1691
        %1840 = vmatprep.subr.mxu0 %v1690
        %1841 = vmatpush2.msra.mxu0 %v1689
        %1842 = vmatprep.subr.mxu0 %v1688
        %1843 = vmatpush2.msra.mxu0 %v1687
        %1844 = vmatprep.subr.mxu0 %v1686
        %1845 = vmatpush2.msra.mxu0 %v1685
        %1846 = vmatprep.subr.mxu0 %v1684
        %1847 = vmatpush2.msra.mxu0 %v1683
        %1848 = vmatprep.subr.mxu0 %v1682
        %1849 = vmatpush2.msra.mxu0 %v1681
        %1850 = vmatprep.subr.mxu0 %v1680
        %1851 = vmatpush2.msra.mxu0 %v1679
        %1852 = vmatprep.subr.mxu0 %v1678
        %1853 = vmatpush2.msra.mxu0 %v1677
        %1854 = vmatprep.subr.mxu0 %v1676
        %1855 = vmatpush2.msra.mxu0 %v1675
        %1856 = vmatprep.subr.mxu0 %v1674
        %1857 = vmatpush2.msra.mxu0 %v1673
        %1858 = vmatprep.subr.mxu0 %v1672
        %1859 = vmatpush2.msra.mxu0 %v1671
        %1860 = vmatprep.subr.mxu0 %v1670
        %1861 = vmatpush2.msra.mxu0 %v1669
        %1862 = vmatprep.subr.mxu0 %v1668
        %1863 = vmatpush2.msra.mxu0 %v1667
        %1864 = vmatprep.mubr.f32.mxu0 %v1777
        %1865 = vmatmul.mubr.f32.gmra.mxu0 %v1774
        %v1866 = vpop.f32.mrf.mxu0
        %v1867 = vadd.f32 0.0, %v1866
        %v1868 = vpop.f32.mrf.mxu0
        %v1869 = vadd.f32 0.0, %v1868
        %1870 = vmatprep.mubr.f32.mxu0 %v1787
        %1871 = vmatmul.mubr.f32.gmra.mxu0 %v1785
        %v1872 = vpop.f32.mrf.mxu0
        %v1873 = vadd.f32 0.0, %v1872
        %v1874 = vpop.f32.mrf.mxu0
        %v1875 = vadd.f32 0.0, %v1874
        %1876 = vdwg.mxu0
        %1877 = vmatprep.subr.mxu0 %v1730
        %1878 = vmatpush1.msra.mxu0 %v1729
        %1879 = vmatprep.subr.mxu0 %v1728
        %1880 = vmatpush1.msra.mxu0 %v1727
        %1881 = vmatprep.subr.mxu0 %v1726
        %1882 = vmatpush1.msra.mxu0 %v1725
        %1883 = vmatprep.subr.mxu0 %v1724
        %1884 = vmatpush1.msra.mxu0 %v1723
        %1885 = vmatprep.subr.mxu0 %v1722
        %1886 = vmatpush1.msra.mxu0 %v1721
        %1887 = vmatprep.subr.mxu0 %v1720
        %1888 = vmatpush1.msra.mxu0 %v1719
        %1889 = vmatprep.subr.mxu0 %v1718
        %1890 = vmatpush1.msra.mxu0 %v1717
        %1891 = vmatprep.subr.mxu0 %v1716
        %1892 = vmatpush1.msra.mxu0 %v1715
        %1893 = vmatprep.subr.mxu0 %v1714
        %1894 = vmatpush1.msra.mxu0 %v1713
        %1895 = vmatprep.subr.mxu0 %v1712
        %1896 = vmatpush1.msra.mxu0 %v1711
        %1897 = vmatprep.subr.mxu0 %v1710
        %1898 = vmatpush1.msra.mxu0 %v1709
        %1899 = vmatprep.subr.mxu0 %v1708
        %1900 = vmatpush1.msra.mxu0 %v1707
        %1901 = vmatprep.subr.mxu0 %v1706
        %1902 = vmatpush1.msra.mxu0 %v1705
        %1903 = vmatprep.subr.mxu0 %v1704
        %1904 = vmatpush1.msra.mxu0 %v1703
        %1905 = vmatprep.subr.mxu0 %v1702
        %1906 = vmatpush1.msra.mxu0 %v1701
        %1907 = vmatprep.subr.mxu0 %v1700
        %1908 = vmatpush1.msra.mxu0 %v1699
        %1909 = vmatprep.subr.mxu0 %v1762
        %1910 = vmatpush2.msra.mxu0 %v1761
        %1911 = vmatprep.subr.mxu0 %v1760
        %1912 = vmatpush2.msra.mxu0 %v1759
        %1913 = vmatprep.subr.mxu0 %v1758
        %1914 = vmatpush2.msra.mxu0 %v1757
        %1915 = vmatprep.subr.mxu0 %v1756
        %1916 = vmatpush2.msra.mxu0 %v1755
        %1917 = vmatprep.subr.mxu0 %v1754
        %1918 = vmatpush2.msra.mxu0 %v1753
        %1919 = vmatprep.subr.mxu0 %v1752
        %1920 = vmatpush2.msra.mxu0 %v1751
        %1921 = vmatprep.subr.mxu0 %v1750
        %1922 = vmatpush2.msra.mxu0 %v1749
        %1923 = vmatprep.subr.mxu0 %v1748
        %1924 = vmatpush2.msra.mxu0 %v1747
        %1925 = vmatprep.subr.mxu0 %v1746
        %1926 = vmatpush2.msra.mxu0 %v1745
        %1927 = vmatprep.subr.mxu0 %v1744
        %1928 = vmatpush2.msra.mxu0 %v1743
        %1929 = vmatprep.subr.mxu0 %v1742
        %1930 = vmatpush2.msra.mxu0 %v1741
        %1931 = vmatprep.subr.mxu0 %v1740
        %1932 = vmatpush2.msra.mxu0 %v1739
        %1933 = vmatprep.subr.mxu0 %v1738
        %1934 = vmatpush2.msra.mxu0 %v1737
        %1935 = vmatprep.subr.mxu0 %v1736
        %1936 = vmatpush2.msra.mxu0 %v1735
        %1937 = vmatprep.subr.mxu0 %v1734
        %1938 = vmatpush2.msra.mxu0 %v1733
        %1939 = vmatprep.subr.mxu0 %v1732
        %1940 = vmatpush2.msra.mxu0 %v1731
        %1941 = vmatprep.mubr.f32.mxu0 %v1783
        %1942 = vmatmul.mubr.f32.gmra.mxu0 %v1780
        %v1943 = vpop.f32.mrf.mxu0
        %v1944 = vadd.f32 %v1867, %v1943
        %v1945 = vpop.f32.mrf.mxu0
        %v1946 = vadd.f32 %v1869, %v1945
        %1947 = vmatprep.mubr.f32.mxu0 %v1791
        %1948 = vmatmul.mubr.f32.gmra.mxu0 %v1789
        %v1949 = vpop.f32.mrf.mxu0
        %v1950 = vadd.f32 %v1873, %v1949
        %v1951 = vpop.f32.mrf.mxu0
        %v1952 = vadd.f32 %v1875, %v1951
        %1953 = vdwg.mxu0
        %v1954 = vadd.f32 %v1616, %v1944
        %v1955 = vadd.f32 %v1618, %v1946
        %v1956 = vadd.f32 %v1622, %v1950
        %v1957 = vadd.f32 %v1624, %v1952
        %v1958 = vld [vmem:[#allocation12] sm:$0x3]
        %v1960 = vlaneseq
        %v1961 = vshrl.u32 %v1960, 7
        %v1962 = vsub.s32 0, %v1961
        %v1963 = vrot.slane %v1958, %v1962
        %v1964 = vlaneseq
        %v1965 = vshrl.u32 %v1964, 7
        %v1966 = vsub.s32 1, %v1965
        %v1967 = vrot.slane %v1958, %v1966
        %v1970 = vadd.f32 %v1954, %v1963
        %v1971 = vadd.f32 %v1955, %v1967
        %v1972 = vadd.f32 %v1956, %v1963
        %v1973 = vadd.f32 %v1957, %v1967
        %v1974 = vmax.f32 %v1970, 0.0
        %v1975 = vmax.f32 %v1971, 0.0
        %v1976 = vmax.f32 %v1972, 0.0
        %v1977 = vmax.f32 %v1973, 0.0
        %1978 = vst [vmem:[#allocation4] sm:$0xff] 0.0
        %1979 = vst [vmem:[#allocation4 + $0x8] sm:$0xff] 0.0
        %1980 = vst [vmem:[#allocation4 + $0x10] sm:$0xff] 0.0
        %1981 = vst [vmem:[#allocation4 + $0x18] sm:$0xff] 0.0
        %1982 = vst [vmem:[#allocation4 + $0x20] sm:$0x3] 0.0
        %1983 = vst [vmem:[#allocation4 + $0x28] sm:$0x3] 0.0
        %v1988 = vrot.slane %v1974, 7
        %v1989 = vrot.slane %v1975, 7
        %v1990 = vrot.slane %v1976, 7
        %v1991 = vsel %vm967, %v1988, %v1990
        %v1992 = vrot.slane %v1977, 7
        %v1993 = vsel %vm967, %v1989, %v1992
        %2000 = vst [vmem:[#allocation4] sm:$0xfe] %v1988
        %2001 = vst [vmem:[#allocation4 + $0x8] sm:$0xfe] %v1989
        %2002 = vst [vmem:[#allocation4 + $0x10] sm:$0xff] %v1991
        %2003 = vst [vmem:[#allocation4 + $0x18] sm:$0xff] %v1993
        %2004 = vst [vmem:[#allocation4 + $0x20] sm:$0x1] %v1990
        %2005 = vst [vmem:[#allocation4 + $0x28] sm:$0x1] %v1992
        %v2006 = vld [vmem:[#allocation4] sm:$0xff]
        %v2007 = vld [vmem:[#allocation4 + $0x8] sm:$0xff]
        %v2008 = vld [vmem:[#allocation4 + $0x10] sm:$0xff]
        %v2009 = vld [vmem:[#allocation4 + $0x18] sm:$0xff]
        %v2010 = vld [vmem:[#allocation13] sm:$0xff]
        %v2011 = vld [vmem:[#allocation13 + $0x8] sm:$0xff]
        %v2012 = vld [vmem:[#allocation13 + $0x10] sm:$0xff]
        %v2013 = vld [vmem:[#allocation13 + $0x18] sm:$0xff]
        %v2014 = vld [vmem:[#allocation13 + $0x20] sm:$0xff]
        %v2015 = vld [vmem:[#allocation13 + $0x28] sm:$0xff]
        %v2016 = vld [vmem:[#allocation13 + $0x30] sm:$0xff]
        %v2017 = vld [vmem:[#allocation13 + $0x38] sm:$0xff]
        %v2018 = vld [vmem:[#allocation13 + $0x40] sm:$0xff]
        %v2019 = vld [vmem:[#allocation13 + $0x48] sm:$0xff]
        %v2020 = vld [vmem:[#allocation13 + $0x50] sm:$0xff]
        %v2021 = vld [vmem:[#allocation13 + $0x58] sm:$0xff]
        %v2022 = vld [vmem:[#allocation13 + $0x60] sm:$0xff]
        %v2023 = vld [vmem:[#allocation13 + $0x68] sm:$0xff]
        %v2024 = vld [vmem:[#allocation13 + $0x70] sm:$0xff]
        %v2025 = vld [vmem:[#allocation13 + $0x78] sm:$0xff]
        %v2026 = vld [vmem:[#allocation13 + $0x80] sm:$0xff]
        %v2027 = vld [vmem:[#allocation13 + $0x88] sm:$0xff]
        %v2028 = vld [vmem:[#allocation13 + $0x90] sm:$0xff]
        %v2029 = vld [vmem:[#allocation13 + $0x98] sm:$0xff]
        %v2030 = vld [vmem:[#allocation13 + $0xa0] sm:$0xff]
        %v2031 = vld [vmem:[#allocation13 + $0xa8] sm:$0xff]
        %v2032 = vld [vmem:[#allocation13 + $0xb0] sm:$0xff]
        %v2033 = vld [vmem:[#allocation13 + $0xb8] sm:$0xff]
        %v2034 = vld [vmem:[#allocation13 + $0xc0] sm:$0xff]
        %v2035 = vld [vmem:[#allocation13 + $0xc8] sm:$0xff]
        %v2036 = vld [vmem:[#allocation13 + $0xd0] sm:$0xff]
        %v2037 = vld [vmem:[#allocation13 + $0xd8] sm:$0xff]
        %v2038 = vld [vmem:[#allocation13 + $0xe0] sm:$0xff]
        %v2039 = vld [vmem:[#allocation13 + $0xe8] sm:$0xff]
        %v2040 = vld [vmem:[#allocation13 + $0xf0] sm:$0xff]
        %v2041 = vld [vmem:[#allocation13 + $0xf8] sm:$0xff]
        %v2042 = vld [vmem:[#allocation4] sm:$0xfe]
        %v2043 = vld [vmem:[#allocation4 + $0x8] sm:$0xfe]
        %v2044 = vld [vmem:[#allocation4 + $0x20] sm:$0x1]
        %v2045 = vld [vmem:[#allocation4 + $0x28] sm:$0x1]
        %s2046 = scalar_lea.vmem [#allocation13], 256
        %v2047 = vld [vmem:[%s2046] sm:$0xff]
        %v2048 = vld [vmem:[%s2046 + $0x8] sm:$0xff]
        %v2049 = vld [vmem:[%s2046 + $0x10] sm:$0xff]
        %v2050 = vld [vmem:[%s2046 + $0x18] sm:$0xff]
        %v2051 = vld [vmem:[%s2046 + $0x20] sm:$0xff]
        %v2052 = vld [vmem:[%s2046 + $0x28] sm:$0xff]
        %v2053 = vld [vmem:[%s2046 + $0x30] sm:$0xff]
        %v2054 = vld [vmem:[%s2046 + $0x38] sm:$0xff]
        %v2055 = vld [vmem:[%s2046 + $0x40] sm:$0xff]
        %v2056 = vld [vmem:[%s2046 + $0x48] sm:$0xff]
        %v2057 = vld [vmem:[%s2046 + $0x50] sm:$0xff]
        %v2058 = vld [vmem:[%s2046 + $0x58] sm:$0xff]
        %v2059 = vld [vmem:[%s2046 + $0x60] sm:$0xff]
        %v2060 = vld [vmem:[%s2046 + $0x68] sm:$0xff]
        %v2061 = vld [vmem:[%s2046 + $0x70] sm:$0xff]
        %v2062 = vld [vmem:[%s2046 + $0x78] sm:$0xff]
        %v2063 = vld [vmem:[%s2046 + $0x80] sm:$0xff]
        %v2064 = vld [vmem:[%s2046 + $0x88] sm:$0xff]
        %v2065 = vld [vmem:[%s2046 + $0x90] sm:$0xff]
        %v2066 = vld [vmem:[%s2046 + $0x98] sm:$0xff]
        %v2067 = vld [vmem:[%s2046 + $0xa0] sm:$0xff]
        %v2068 = vld [vmem:[%s2046 + $0xa8] sm:$0xff]
        %v2069 = vld [vmem:[%s2046 + $0xb0] sm:$0xff]
        %v2070 = vld [vmem:[%s2046 + $0xb8] sm:$0xff]
        %v2071 = vld [vmem:[%s2046 + $0xc0] sm:$0xff]
        %v2072 = vld [vmem:[%s2046 + $0xc8] sm:$0xff]
        %v2073 = vld [vmem:[%s2046 + $0xd0] sm:$0xff]
        %v2074 = vld [vmem:[%s2046 + $0xd8] sm:$0xff]
        %v2075 = vld [vmem:[%s2046 + $0xe0] sm:$0xff]
        %v2076 = vld [vmem:[%s2046 + $0xe8] sm:$0xff]
        %v2077 = vld [vmem:[%s2046 + $0xf0] sm:$0xff]
        %v2078 = vld [vmem:[%s2046 + $0xf8] sm:$0xff]
        %v2085 = vrot.slane %v2042, 1
        %v2086 = vrot.slane %v2008, 1
        %v2087 = vsel %vm1289, %v2085, %v2086
        %v2088 = vrot.slane %v2043, 1
        %v2089 = vrot.slane %v2009, 1
        %v2090 = vsel %vm1289, %v2088, %v2089
        %v2091 = vrot.slane %v2044, 1
        %v2092 = vsel %vm1289, %v2086, %v2091
        %v2093 = vrot.slane %v2045, 1
        %v2094 = vsel %vm1289, %v2089, %v2093
        %2099 = vmatprep.subr.mxu0 0.0
        %2100 = vmatpush1.msra.mxu0 %v2062
        %2101 = vmatprep.subr.mxu0 0.0
        %2102 = vmatpush1.msra.mxu0 %v2061
        %2103 = vmatprep.subr.mxu0 0.0
        %2104 = vmatpush1.msra.mxu0 %v2060
        %2105 = vmatprep.subr.mxu0 0.0
        %2106 = vmatpush1.msra.mxu0 %v2059
        %2107 = vmatprep.subr.mxu0 0.0
        %2108 = vmatpush1.msra.mxu0 %v2058
        %2109 = vmatprep.subr.mxu0 0.0
        %2110 = vmatpush1.msra.mxu0 %v2057
        %2111 = vmatprep.subr.mxu0 0.0
        %2112 = vmatpush1.msra.mxu0 %v2056
        %2113 = vmatprep.subr.mxu0 0.0
        %2114 = vmatpush1.msra.mxu0 %v2055
        %2115 = vmatprep.subr.mxu0 0.0
        %2116 = vmatpush1.msra.mxu0 %v2054
        %2117 = vmatprep.subr.mxu0 0.0
        %2118 = vmatpush1.msra.mxu0 %v2053
        %2119 = vmatprep.subr.mxu0 0.0
        %2120 = vmatpush1.msra.mxu0 %v2052
        %2121 = vmatprep.subr.mxu0 0.0
        %2122 = vmatpush1.msra.mxu0 %v2051
        %2123 = vmatprep.subr.mxu0 0.0
        %2124 = vmatpush1.msra.mxu0 %v2050
        %2125 = vmatprep.subr.mxu0 0.0
        %2126 = vmatpush1.msra.mxu0 %v2049
        %2127 = vmatprep.subr.mxu0 0.0
        %2128 = vmatpush1.msra.mxu0 %v2048
        %2129 = vmatprep.subr.mxu0 0.0
        %2130 = vmatpush1.msra.mxu0 %v2047
        %2131 = vmatprep.subr.mxu0 0.0
        %2132 = vmatpush2.msra.mxu0 %v2078
        %2133 = vmatprep.subr.mxu0 0.0
        %2134 = vmatpush2.msra.mxu0 %v2077
        %2135 = vmatprep.subr.mxu0 0.0
        %2136 = vmatpush2.msra.mxu0 %v2076
        %2137 = vmatprep.subr.mxu0 0.0
        %2138 = vmatpush2.msra.mxu0 %v2075
        %2139 = vmatprep.subr.mxu0 0.0
        %2140 = vmatpush2.msra.mxu0 %v2074
        %2141 = vmatprep.subr.mxu0 0.0
        %2142 = vmatpush2.msra.mxu0 %v2073
        %2143 = vmatprep.subr.mxu0 0.0
        %2144 = vmatpush2.msra.mxu0 %v2072
        %2145 = vmatprep.subr.mxu0 0.0
        %2146 = vmatpush2.msra.mxu0 %v2071
        %2147 = vmatprep.subr.mxu0 0.0
        %2148 = vmatpush2.msra.mxu0 %v2070
        %2149 = vmatprep.subr.mxu0 0.0
        %2150 = vmatpush2.msra.mxu0 %v2069
        %2151 = vmatprep.subr.mxu0 0.0
        %2152 = vmatpush2.msra.mxu0 %v2068
        %2153 = vmatprep.subr.mxu0 0.0
        %2154 = vmatpush2.msra.mxu0 %v2067
        %2155 = vmatprep.subr.mxu0 0.0
        %2156 = vmatpush2.msra.mxu0 %v2066
        %2157 = vmatprep.subr.mxu0 0.0
        %2158 = vmatpush2.msra.mxu0 %v2065
        %2159 = vmatprep.subr.mxu0 0.0
        %2160 = vmatpush2.msra.mxu0 %v2064
        %2161 = vmatprep.subr.mxu0 0.0
        %2162 = vmatpush2.msra.mxu0 %v2063
        %2163 = vmatprep.mubr.f32.mxu0 %v2090
        %2164 = vmatmul.mubr.f32.gmra.mxu0 %v2087
        %v2165 = vpop.f32.mrf.mxu0
        %v2166 = vadd.f32 0.0, %v2165
        %v2167 = vpop.f32.mrf.mxu0
        %2168 = vmatprep.mubr.f32.mxu0 %v2094
        %2169 = vmatmul.mubr.f32.gmra.mxu0 %v2092
        %v2170 = vpop.f32.mrf.mxu0
        %v2171 = vadd.f32 0.0, %v2170
        %v2172 = vpop.f32.mrf.mxu0
        %2173 = vdwg.mxu0
        %2174 = vmatprep.subr.mxu0 0.0
        %2175 = vmatpush1.msra.mxu0 %v2025
        %2176 = vmatprep.subr.mxu0 0.0
        %2177 = vmatpush1.msra.mxu0 %v2024
        %2178 = vmatprep.subr.mxu0 0.0
        %2179 = vmatpush1.msra.mxu0 %v2023
        %2180 = vmatprep.subr.mxu0 0.0
        %2181 = vmatpush1.msra.mxu0 %v2022
        %2182 = vmatprep.subr.mxu0 0.0
        %2183 = vmatpush1.msra.mxu0 %v2021
        %2184 = vmatprep.subr.mxu0 0.0
        %2185 = vmatpush1.msra.mxu0 %v2020
        %2186 = vmatprep.subr.mxu0 0.0
        %2187 = vmatpush1.msra.mxu0 %v2019
        %2188 = vmatprep.subr.mxu0 0.0
        %2189 = vmatpush1.msra.mxu0 %v2018
        %2190 = vmatprep.subr.mxu0 0.0
        %2191 = vmatpush1.msra.mxu0 %v2017
        %2192 = vmatprep.subr.mxu0 0.0
        %2193 = vmatpush1.msra.mxu0 %v2016
        %2194 = vmatprep.subr.mxu0 0.0
        %2195 = vmatpush1.msra.mxu0 %v2015
        %2196 = vmatprep.subr.mxu0 0.0
        %2197 = vmatpush1.msra.mxu0 %v2014
        %2198 = vmatprep.subr.mxu0 0.0
        %2199 = vmatpush1.msra.mxu0 %v2013
        %2200 = vmatprep.subr.mxu0 0.0
        %2201 = vmatpush1.msra.mxu0 %v2012
        %2202 = vmatprep.subr.mxu0 0.0
        %2203 = vmatpush1.msra.mxu0 %v2011
        %2204 = vmatprep.subr.mxu0 0.0
        %2205 = vmatpush1.msra.mxu0 %v2010
        %2206 = vmatprep.subr.mxu0 0.0
        %2207 = vmatpush2.msra.mxu0 %v2041
        %2208 = vmatprep.subr.mxu0 0.0
        %2209 = vmatpush2.msra.mxu0 %v2040
        %2210 = vmatprep.subr.mxu0 0.0
        %2211 = vmatpush2.msra.mxu0 %v2039
        %2212 = vmatprep.subr.mxu0 0.0
        %2213 = vmatpush2.msra.mxu0 %v2038
        %2214 = vmatprep.subr.mxu0 0.0
        %2215 = vmatpush2.msra.mxu0 %v2037
        %2216 = vmatprep.subr.mxu0 0.0
        %2217 = vmatpush2.msra.mxu0 %v2036
        %2218 = vmatprep.subr.mxu0 0.0
        %2219 = vmatpush2.msra.mxu0 %v2035
        %2220 = vmatprep.subr.mxu0 0.0
        %2221 = vmatpush2.msra.mxu0 %v2034
        %2222 = vmatprep.subr.mxu0 0.0
        %2223 = vmatpush2.msra.mxu0 %v2033
        %2224 = vmatprep.subr.mxu0 0.0
        %2225 = vmatpush2.msra.mxu0 %v2032
        %2226 = vmatprep.subr.mxu0 0.0
        %2227 = vmatpush2.msra.mxu0 %v2031
        %2228 = vmatprep.subr.mxu0 0.0
        %2229 = vmatpush2.msra.mxu0 %v2030
        %2230 = vmatprep.subr.mxu0 0.0
        %2231 = vmatpush2.msra.mxu0 %v2029
        %2232 = vmatprep.subr.mxu0 0.0
        %2233 = vmatpush2.msra.mxu0 %v2028
        %2234 = vmatprep.subr.mxu0 0.0
        %2235 = vmatpush2.msra.mxu0 %v2027
        %2236 = vmatprep.subr.mxu0 0.0
        %2237 = vmatpush2.msra.mxu0 %v2026
        %2238 = vmatprep.mubr.f32.mxu0 %v2007
        %2239 = vmatmul.mubr.f32.gmra.mxu0 %v2006
        %v2240 = vpop.f32.mrf.mxu0
        %v2241 = vadd.f32 %v2166, %v2240
        %v2242 = vpop.f32.mrf.mxu0
        %2243 = vmatprep.mubr.f32.mxu0 %v2009
        %2244 = vmatmul.mubr.f32.gmra.mxu0 %v2008
        %v2245 = vpop.f32.mrf.mxu0
        %v2246 = vadd.f32 %v2171, %v2245
        %v2247 = vpop.f32.mrf.mxu0
        %2248 = vdwg.mxu0
        %v2249 = vld [vmem:[#allocation4] sm:$0xfc]
        %v2250 = vld [vmem:[#allocation4 + $0x8] sm:$0xfc]
        %v2251 = vld [vmem:[#allocation4 + $0x20] sm:$0x3]
        %v2252 = vld [vmem:[#allocation4 + $0x28] sm:$0x3]
        %s2253 = scalar_lea.vmem [#allocation13], 512
        %v2254 = vld [vmem:[%s2253] sm:$0xff]
        %v2255 = vld [vmem:[%s2253 + $0x8] sm:$0xff]
        %v2256 = vld [vmem:[%s2253 + $0x10] sm:$0xff]
        %v2257 = vld [vmem:[%s2253 + $0x18] sm:$0xff]
        %v2258 = vld [vmem:[%s2253 + $0x20] sm:$0xff]
        %v2259 = vld [vmem:[%s2253 + $0x28] sm:$0xff]
        %v2260 = vld [vmem:[%s2253 + $0x30] sm:$0xff]
        %v2261 = vld [vmem:[%s2253 + $0x38] sm:$0xff]
        %v2262 = vld [vmem:[%s2253 + $0x40] sm:$0xff]
        %v2263 = vld [vmem:[%s2253 + $0x48] sm:$0xff]
        %v2264 = vld [vmem:[%s2253 + $0x50] sm:$0xff]
        %v2265 = vld [vmem:[%s2253 + $0x58] sm:$0xff]
        %v2266 = vld [vmem:[%s2253 + $0x60] sm:$0xff]
        %v2267 = vld [vmem:[%s2253 + $0x68] sm:$0xff]
        %v2268 = vld [vmem:[%s2253 + $0x70] sm:$0xff]
        %v2269 = vld [vmem:[%s2253 + $0x78] sm:$0xff]
        %v2270 = vld [vmem:[%s2253 + $0x80] sm:$0xff]
        %v2271 = vld [vmem:[%s2253 + $0x88] sm:$0xff]
        %v2272 = vld [vmem:[%s2253 + $0x90] sm:$0xff]
        %v2273 = vld [vmem:[%s2253 + $0x98] sm:$0xff]
        %v2274 = vld [vmem:[%s2253 + $0xa0] sm:$0xff]
        %v2275 = vld [vmem:[%s2253 + $0xa8] sm:$0xff]
        %v2276 = vld [vmem:[%s2253 + $0xb0] sm:$0xff]
        %v2277 = vld [vmem:[%s2253 + $0xb8] sm:$0xff]
        %v2278 = vld [vmem:[%s2253 + $0xc0] sm:$0xff]
        %v2279 = vld [vmem:[%s2253 + $0xc8] sm:$0xff]
        %v2280 = vld [vmem:[%s2253 + $0xd0] sm:$0xff]
        %v2281 = vld [vmem:[%s2253 + $0xd8] sm:$0xff]
        %v2282 = vld [vmem:[%s2253 + $0xe0] sm:$0xff]
        %v2283 = vld [vmem:[%s2253 + $0xe8] sm:$0xff]
        %v2284 = vld [vmem:[%s2253 + $0xf0] sm:$0xff]
        %v2285 = vld [vmem:[%s2253 + $0xf8] sm:$0xff]
        %v2290 = vrot.slane %v2249, 2
        %v2291 = vrot.slane %v2008, 2
        %v2292 = vsel %vm1771, %v2290, %v2291
        %v2293 = vrot.slane %v2250, 2
        %v2294 = vrot.slane %v2009, 2
        %v2295 = vsel %vm1771, %v2293, %v2294
        %v2296 = vrot.slane %v2251, 2
        %v2297 = vsel %vm1771, %v2291, %v2296
        %v2298 = vrot.slane %v2252, 2
        %v2299 = vsel %vm1771, %v2294, %v2298
        %2304 = vmatprep.subr.mxu0 0.0
        %2305 = vmatpush1.msra.mxu0 %v2269
        %2306 = vmatprep.subr.mxu0 0.0
        %2307 = vmatpush1.msra.mxu0 %v2268
        %2308 = vmatprep.subr.mxu0 0.0
        %2309 = vmatpush1.msra.mxu0 %v2267
        %2310 = vmatprep.subr.mxu0 0.0
        %2311 = vmatpush1.msra.mxu0 %v2266
        %2312 = vmatprep.subr.mxu0 0.0
        %2313 = vmatpush1.msra.mxu0 %v2265
        %2314 = vmatprep.subr.mxu0 0.0
        %2315 = vmatpush1.msra.mxu0 %v2264
        %2316 = vmatprep.subr.mxu0 0.0
        %2317 = vmatpush1.msra.mxu0 %v2263
        %2318 = vmatprep.subr.mxu0 0.0
        %2319 = vmatpush1.msra.mxu0 %v2262
        %2320 = vmatprep.subr.mxu0 0.0
        %2321 = vmatpush1.msra.mxu0 %v2261
        %2322 = vmatprep.subr.mxu0 0.0
        %2323 = vmatpush1.msra.mxu0 %v2260
        %2324 = vmatprep.subr.mxu0 0.0
        %2325 = vmatpush1.msra.mxu0 %v2259
        %2326 = vmatprep.subr.mxu0 0.0
        %2327 = vmatpush1.msra.mxu0 %v2258
        %2328 = vmatprep.subr.mxu0 0.0
        %2329 = vmatpush1.msra.mxu0 %v2257
        %2330 = vmatprep.subr.mxu0 0.0
        %2331 = vmatpush1.msra.mxu0 %v2256
        %2332 = vmatprep.subr.mxu0 0.0
        %2333 = vmatpush1.msra.mxu0 %v2255
        %2334 = vmatprep.subr.mxu0 0.0
        %2335 = vmatpush1.msra.mxu0 %v2254
        %2336 = vmatprep.subr.mxu0 0.0
        %2337 = vmatpush2.msra.mxu0 %v2285
        %2338 = vmatprep.subr.mxu0 0.0
        %2339 = vmatpush2.msra.mxu0 %v2284
        %2340 = vmatprep.subr.mxu0 0.0
        %2341 = vmatpush2.msra.mxu0 %v2283
        %2342 = vmatprep.subr.mxu0 0.0
        %2343 = vmatpush2.msra.mxu0 %v2282
        %2344 = vmatprep.subr.mxu0 0.0
        %2345 = vmatpush2.msra.mxu0 %v2281
        %2346 = vmatprep.subr.mxu0 0.0
        %2347 = vmatpush2.msra.mxu0 %v2280
        %2348 = vmatprep.subr.mxu0 0.0
        %2349 = vmatpush2.msra.mxu0 %v2279
        %2350 = vmatprep.subr.mxu0 0.0
        %2351 = vmatpush2.msra.mxu0 %v2278
        %2352 = vmatprep.subr.mxu0 0.0
        %2353 = vmatpush2.msra.mxu0 %v2277
        %2354 = vmatprep.subr.mxu0 0.0
        %2355 = vmatpush2.msra.mxu0 %v2276
        %2356 = vmatprep.subr.mxu0 0.0
        %2357 = vmatpush2.msra.mxu0 %v2275
        %2358 = vmatprep.subr.mxu0 0.0
        %2359 = vmatpush2.msra.mxu0 %v2274
        %2360 = vmatprep.subr.mxu0 0.0
        %2361 = vmatpush2.msra.mxu0 %v2273
        %2362 = vmatprep.subr.mxu0 0.0
        %2363 = vmatpush2.msra.mxu0 %v2272
        %2364 = vmatprep.subr.mxu0 0.0
        %2365 = vmatpush2.msra.mxu0 %v2271
        %2366 = vmatprep.subr.mxu0 0.0
        %2367 = vmatpush2.msra.mxu0 %v2270
        %2368 = vmatprep.mubr.f32.mxu0 %v2295
        %2369 = vmatmul.mubr.f32.gmra.mxu0 %v2292
        %v2370 = vpop.f32.mrf.mxu0
        %v2371 = vadd.f32 0.0, %v2370
        %v2372 = vpop.f32.mrf.mxu0
        %2373 = vmatprep.mubr.f32.mxu0 %v2299
        %2374 = vmatmul.mubr.f32.gmra.mxu0 %v2297
        %v2375 = vpop.f32.mrf.mxu0
        %v2376 = vadd.f32 0.0, %v2375
        %v2377 = vpop.f32.mrf.mxu0
        %2378 = vdwg.mxu0
        %v2379 = vadd.f32 %v2241, %v2371
        %v2380 = vadd.f32 %v2246, %v2376
        %v2381 = vld [vmem:[#allocation15] sm:$0x1]
        %v2383 = vlaneseq
        %v2384 = vshrl.u32 %v2383, 7
        %v2385 = vsub.s32 0, %v2384
        %v2386 = vrot.slane %v2381, %v2385
        %v2388 = vadd.f32 %v2379, %v2386
        %v2389 = vadd.f32 %v2380, %v2386
        %v2390 = vmax.f32 %v2388, 0.0
        %v2391 = vmax.f32 %v2389, 0.0
        %2392 = vst [vmem:[%s379] sm:$0xff] %v2390
        %2393 = vst [vmem:[%s379 + $0x8] sm:$0xff] %v2391
        %p2394 = scmp.lt.s32.totalorder %s24, 1
        %s2395 = scalar_select %p2394, %s24, 1
        %s2396 = smul.addr %s2395, 2
        %s2397 = smul.addr %s2396, 8
        %s2398 = scalar_lea.vmem %s7, %s2397
        // Predicated region
        $region77: #{conv_encoder_forward.2} parent=47 // pred_check
          %p2399 = pneg %p194
        $region78: #{conv_encoder_forward.2} parent=47 // pred_check_branch
          %2401 = sbr.rel (%p2399) target = $region80
        $region79: #{conv_encoder_forward.2} parent=47 // pred_region
          _
        $region80: #{conv_encoder_forward.2} parent=47 // pred_fallthru
          _
      $region48: #{conv_encoder_forward.2} parent=5 // pred_fallthru
        _
      %p2402 = scmp.le.s32.totalorder 2, %s19
      // Predicated region
      $region81: #{conv_encoder_forward.2} parent=5 // pred_check
        %p2403 = pneg %p2402
      $region82: #{conv_encoder_forward.2} parent=5 // pred_check_branch
        %2405 = sbr.rel (%p2403) target = $region84
      $region83: #{conv_encoder_forward.2} parent=5 // pred_region
        %s2406 = ssub.s32 %s19, 2
        // Predicated region
        $region85: #{conv_encoder_forward.2} parent=83 // pred_check
          %p2407 = pneg %p200
        $region86: #{conv_encoder_forward.2} parent=83 // pred_check_branch
          %2409 = sbr.rel (%p2407) target = $region88
        $region87: #{conv_encoder_forward.2} parent=83 // pred_region
          %p2410 = scmp.lt.s32.totalorder %s25, 1
          %s2411 = scalar_select %p2410, %s25, 1
          %s2412 = smul.addr %s2411, 2
          %s2413 = smul.addr %s2412, 8
          %s2414 = scalar_lea.vmem %s7, %s2413
        $region88: #{conv_encoder_forward.2} parent=83 // pred_fallthru
          _
      $region84: #{conv_encoder_forward.2} parent=5 // pred_fallthru
        _
    $region6: #{conv_encoder_forward.2} parent=1 // loop_footer
      %s23 = sadd.s32 1, %s19
    $region7: #{conv_encoder_forward.2} parent=1 // loop_footer_branch
      %18 = sbr.rel target = $region3
    $region8: #{conv_encoder_forward.2} parent=1 // loop_exit
      _
    %2415 = vsyncpa [#allocation6], 1
    %s2416 = scalar_lea.sflag [#allocation6], 1
    %2417 = vsyncpa %s2416, 1
    %2418 = vsyncpa [#allocation8], 1
    %2419 = vsyncpa [#allocation11], 1
    %2420 = vsyncpa [#allocation14], 1

</llo_original>
